<compile_context>
chip_gen: v7x
topology: tpu7x:2x2x1
jax: 0.10.0
libtpu: 0.0.40
codegen_flags: <defaults>
</compile_context>

<pallas_src>
import jax
import jax.numpy as jnp
import numpy as np
from jax.experimental import pallas as pl
from jax.experimental.pallas import tpu as pltpu


def basic_block_kernel(x_ref, w1_ref, b1_ref, w2_ref, b2_ref, o_ref,
                       pad1_ref, pad2_ref):
    # x_ref   : (H, W, C)       f32  full-height input (one batch element)
    # w*_ref  : (9, C, C)       bf16 conv taps (ky*3+kx, cin, cout), BN scale folded
    # b*_ref  : (1, C)          f32  folded BN bias
    # o_ref   : (TH, W, C)      bf16 output row-tile
    # pad1_ref: (TH+4, W+2, C)  bf16 zero-padded conv1 input (x rows r0-2 .. r0+TH+1)
    # pad2_ref: (TH+2, W+2, C)  bf16 zero-padded conv2 input (out1 rows r0-1 .. r0+TH)
    H, W, C = x_ref.shape
    TH = o_ref.shape[0]
    h = pl.program_id(1)
    nh = pl.num_programs(1)
    r0 = pl.multiple_of(h * TH, TH)          # first output row of this tile

    def conv3x3(pad_ref, w_ref, b_ref, rows):
        # Unrolled 9-tap accumulate: 9 small K=C MXU matmuls with f32
        # accumulation (same MXU cycles as one K=9C matmul, but no im2col
        # materialization / lane repacking).
        m = rows * W
        acc = jnp.zeros((m, C), jnp.float32)
        for dy in range(3):
            for dx in range(3):
                xs = pad_ref[dy:dy + rows, dx:dx + W, :].reshape(m, C)
                acc = acc + jnp.dot(xs, w_ref[dy * 3 + dx],
                                    preferred_element_type=jnp.float32)
        return acc + b_ref[...]              # broadcast (1, C) folded-BN bias

    x_tile = x_ref[pl.ds(r0, TH), :, :]      # (TH, W, C) f32; reused for residual

    # ---- conv1 input: x rows [r0-2, r0+TH+2), zero padded in W (and in H at
    #      the image boundary).  The scratch persists across grid steps, so
    #      the halo is rewritten every step (correct under megacore sharding).
    pad1_ref[:, 0:1, :] = jnp.zeros((TH + 4, 1, C), pad1_ref.dtype)
    pad1_ref[:, W + 1:W + 2, :] = jnp.zeros((TH + 4, 1, C), pad1_ref.dtype)
    pad1_ref[2:TH + 2, 1:W + 1, :] = x_tile.astype(pad1_ref.dtype)

    @pl.when(h > 0)
    def _():                                 # real rows from the tile above
        pad1_ref[0:2, 1:W + 1, :] = \
            x_ref[pl.ds(r0 - 2, 2), :, :].astype(pad1_ref.dtype)

    @pl.when(h == 0)
    def _():                                 # conv zero-padding at the image top
        pad1_ref[0:2, :, :] = jnp.zeros((2, W + 2, C), pad1_ref.dtype)

    @pl.when(h < nh - 1)
    def _():                                 # real rows from the tile below
        pad1_ref[TH + 2:TH + 4, 1:W + 1, :] = \
            x_ref[pl.ds(r0 + TH, 2), :, :].astype(pad1_ref.dtype)

    @pl.when(h == nh - 1)
    def _():                                 # conv zero-padding at the image bottom
        pad1_ref[TH + 2:TH + 4, :, :] = jnp.zeros((2, W + 2, C), pad1_ref.dtype)

    # conv1 + bn1 + relu, computed for TH+2 rows (the tile plus the 1-row halo
    # that conv2 needs).
    out1 = jnp.maximum(conv3x3(pad1_ref, w1_ref, b1_ref, TH + 2), 0.0)

    # ---- conv2 input: out1 rows, zero padded in W.  The out-of-image out1
    #      halo rows must be replaced by conv2's own zero padding (they are
    #      NOT zero after the BN bias + ReLU).
    pad2_ref[:, 0:1, :] = jnp.zeros((TH + 2, 1, C), pad2_ref.dtype)
    pad2_ref[:, W + 1:W + 2, :] = jnp.zeros((TH + 2, 1, C), pad2_ref.dtype)
    pad2_ref[:, 1:W + 1, :] = out1.astype(pad2_ref.dtype).reshape(TH + 2, W, C)

    @pl.when(h == 0)
    def _():
        pad2_ref[0:1, :, :] = jnp.zeros((1, W + 2, C), pad2_ref.dtype)

    @pl.when(h == nh - 1)
    def _():
        pad2_ref[TH + 1:TH + 2, :, :] = jnp.zeros((1, W + 2, C), pad2_ref.dtype)

    out2 = conv3x3(pad2_ref, w2_ref, b2_ref, TH)            # (TH*W, C) f32

    # identity shortcut (full-precision x) + relu, then cast to bf16 for store.
    res = jnp.maximum(out2 + x_tile.reshape(TH * W, C).astype(jnp.float32), 0.0)
    o_ref[...] = res.astype(o_ref.dtype).reshape(TH, W, C)


def _pick_tile_h(H):
    """Largest 'nice' divisor of H that still gives >= 2 row-tiles per image."""
    for th in (64, 56, 32, 28, 16, 14, 8, 7, 4, 2):
        if th < H and H % th == 0:
            return th
    return H


def _vmem_cap_bytes():
    """~75% of physical per-core VMEM (96 MiB on 128 MiB parts, 48 MiB on v7x)."""
    phys = 64 * 1024 * 1024                     # conservative (v7x-sized) fallback
    try:
        info = pltpu.get_tpu_info()
        phys = int(getattr(info, "vmem_capacity_bytes", phys))
    except Exception:
        pass
    return max((3 * phys) // 4, 32 * 1024 * 1024)


def basic_block_nhwc(x_nhwc, w1, bn1, w2, bn2, eps=1e-5, tile_h=None,
                     out_dtype=jnp.bfloat16):
    """x_nhwc: (N, H, W, C); w*: (Cout, Cin, 3, 3); bn*: (gamma, beta, mean, var).

    Returns the BasicBlock output in NHWC with dtype `out_dtype` (bf16 by
    default — halves the output HBM writeback)."""
    N, H, W, C = x_nhwc.shape
    assert w1.shape == (C, C, 3, 3) and w2.shape == (C, C, 3, 3), \
        "identity residual requires planes == inplanes (stride=1, no downsample)"

    def fold(w, bn):
        gamma, beta, mean, var = bn
        scale = gamma / jnp.sqrt(var + eps)                   # (Cout,)
        bias = beta - mean * scale                            # (Cout,)
        # (Cout, Cin, kh, kw) -> (kh, kw, Cin, Cout); fold the BN scale into
        # the output-channel axis; (9, Cin, Cout) so the kernel slices whole
        # per-tap slabs on the leading dim.
        wr = jnp.transpose(w, (2, 3, 1, 0)) * scale[None, None, None, :]
        return (wr.reshape(9, C, C).astype(jnp.bfloat16),
                bias.reshape(1, C).astype(jnp.float32))

    w1r, b1 = fold(w1, bn1)
    w2r, b2 = fold(w2, bn2)

    TH = int(tile_h) if tile_h is not None else _pick_tile_h(H)
    assert H % TH == 0 and (TH == H or TH >= 2)
    nh = H // TH

    # --- tight VMEM budget (bytes), buffers counted explicitly ---
    x_item = jnp.dtype(x_nhwc.dtype).itemsize
    est = (2 * H * W * C * x_item                       # double-buffered full-H input block
           + 2 * TH * W * C * 2                         # double-buffered bf16 output tile
           + 2 * 2 * 9 * C * C * 2                      # double-buffered bf16 weights (2 convs)
           + 2 * 2 * C * 4                              # double-buffered f32 biases
           + ((TH + 4) + (TH + 2)) * (W + 2) * C * 2    # bf16 padded scratches
           + 6 * (TH + 2) * W * C * 4)                  # f32 accumulators / temporaries
    vmem_limit = int(min(max(2 * est, 32 * 1024 * 1024), _vmem_cap_bytes()))

    cost = pl.CostEstimate(
        flops=int(2 * 2 * N * H * W * 9 * C * C),       # two 3x3 convs, 2 flops/MAC
        transcendentals=0,
        bytes_accessed=int(N * H * W * C * x_item       # read x
                           + N * H * W * C * 2          # write bf16 output
                           + 2 * 9 * C * C * 2 + 2 * C * 4))

    return pl.pallas_call(
        basic_block_kernel,
        out_shape=jax.ShapeDtypeStruct((N, H, W, C), out_dtype),
        grid_spec=pltpu.PrefetchScalarGridSpec(
            num_scalar_prefetch=0,
            grid=(N, nh),
            in_specs=[
                # Full-height input block: its block index is constant across
                # the h axis, so it is DMA'd once per batch element; the
                # kernel slices the 2-row halo it needs with pl.ds.
                pl.BlockSpec((None, H, W, C), lambda n, h: (n, 0, 0, 0)),
                pl.BlockSpec((9, C, C), lambda n, h: (0, 0, 0)),
                pl.BlockSpec((1, C), lambda n, h: (0, 0)),
                pl.BlockSpec((9, C, C), lambda n, h: (0, 0, 0)),
                pl.BlockSpec((1, C), lambda n, h: (0, 0)),
            ],
            out_specs=pl.BlockSpec((None, TH, W, C), lambda n, h: (n, h, 0, 0)),
            scratch_shapes=[
                pltpu.VMEM((TH + 4, W + 2, C), jnp.bfloat16),
                pltpu.VMEM((TH + 2, W + 2, C), jnp.bfloat16),
            ],
        ),
        compiler_params=pltpu.CompilerParams(
            dimension_semantics=("parallel", "parallel"),
            vmem_limit_bytes=vmem_limit),
        cost_estimate=cost,
    )(x_nhwc, w1r, b1, w2r, b2)


def basic_block(x_nchw, w1, bn1, w2, bn2, eps=1e-5):
    """NCHW wrapper matching the PyTorch module convention (bf16 output)."""
    x = jnp.transpose(x_nchw, (0, 2, 3, 1))                  # NCHW -> NHWC
    out = basic_block_nhwc(x, w1, bn1, w2, bn2, eps=eps)
    return jnp.transpose(out, (0, 3, 1, 2))                  # back to NCHW


def ref_basic_block(x, w1, bn1, w2, bn2, eps=1e-5):
    """Pure-JAX f32 reference (NCHW), eval-mode BN."""
    def conv(x, w):
        return jax.lax.conv_general_dilated(
            x, w, window_strides=(1, 1), padding=((1, 1), (1, 1)),
            dimension_numbers=('NCHW', 'OIHW', 'NCHW'))

    def bn(x, p):
        g, b, m, v = (t[None, :, None, None] for t in p)
        return (x - m) / jnp.sqrt(v + eps) * g + b

    out = jax.nn.relu(bn(conv(x, w1), bn1))
    out = bn(conv(out, w2), bn2)
    return jax.nn.relu(out + x)


if __name__ == "__main__":
    key = jax.random.PRNGKey(0)
    (k_x, k_w1, k_w2, k_g1, k_b1, k_m1, k_v1,
     k_g2, k_b2, k_m2, k_v2) = jax.random.split(key, 11)

    N, C, H, W = 2, 4, 16, 16          # inplanes = planes = 4, stride = 1
    x = jax.random.normal(k_x, (N, C, H, W), dtype=jnp.float32)

    w1 = 0.1 * jax.random.normal(k_w1, (C, C, 3, 3), dtype=jnp.float32)
    w2 = 0.1 * jax.random.normal(k_w2, (C, C, 3, 3), dtype=jnp.float32)

    def bn_params(kg, kb, km, kv):
        gamma = 1.0 + 0.1 * jax.random.normal(kg, (C,), dtype=jnp.float32)
        beta = 0.1 * jax.random.normal(kb, (C,), dtype=jnp.float32)
        mean = 0.1 * jax.random.normal(km, (C,), dtype=jnp.float32)
        var = 1.0 + 0.1 * jax.random.uniform(kv, (C,), dtype=jnp.float32)
        return gamma, beta, mean, var

    bn1 = bn_params(k_g1, k_b1, k_m1, k_v1)
    bn2 = bn_params(k_g2, k_b2, k_m2, k_v2)

    out = basic_block(x, w1, bn1, w2, bn2)      # bf16, NCHW; H=16 -> 2 row-tiles
    out = jax.block_until_ready(out)

    ref = jax.block_until_ready(ref_basic_block(x, w1, bn1, w2, bn2))
    # bf16 matmul operands + bf16 output vs f32 reference -> loosened tolerance.
    np.testing.assert_allclose(np.asarray(out.astype(jnp.float32)),
                               np.asarray(ref), rtol=3e-2, atol=3e-2)
    print("KERNEL_OK")
</pallas_src>

<mosaic_0001>
module attributes {stable_mosaic.version = 11 : i64} {
  func.func @basic_block_kernel(%arg0: i32, %arg1: i32, %arg2: memref<1x16x16x4xf32, #tpu.memory_space<vmem>>, %arg3: memref<9x4x4xbf16, #tpu.memory_space<vmem>>, %arg4: memref<1x4xf32, #tpu.memory_space<vmem>>, %arg5: memref<9x4x4xbf16, #tpu.memory_space<vmem>>, %arg6: memref<1x4xf32, #tpu.memory_space<vmem>>, %arg7: memref<1x8x16x4xbf16, #tpu.memory_space<vmem>>, %arg8: memref<12x18x4xbf16, #tpu.memory_space<vmem>>, %arg9: memref<10x18x4xbf16, #tpu.memory_space<vmem>>) attributes {dimension_semantics = [#tpu.dimension_semantics<parallel>, #tpu.dimension_semantics<parallel>], iteration_bounds = array<i64: 2, 2>, scalar_prefetch = 0 : i64, scratch_operands = 2 : i64, tpu.core_type = #tpu.core_type<tc>, window_params = [{transform_indices = @transform_0, window_bounds = array<i64: 1, 16, 16, 4>}, {pipeline_mode = #tpu.pipeline_mode<synchronous>, transform_indices = @transform_1, window_bounds = array<i64: 9, 4, 4>}, {pipeline_mode = #tpu.pipeline_mode<synchronous>, transform_indices = @transform_2, window_bounds = array<i64: 1, 4>}, {pipeline_mode = #tpu.pipeline_mode<synchronous>, transform_indices = @transform_3, window_bounds = array<i64: 9, 4, 4>}, {pipeline_mode = #tpu.pipeline_mode<synchronous>, transform_indices = @transform_4, window_bounds = array<i64: 1, 4>}, {transform_indices = @transform_5, window_bounds = array<i64: 1, 8, 16, 4>}]} {
    %c8_i32 = arith.constant 8 : i32
    %0 = arith.muli %arg1, %c8_i32 : i32
    %1 = tpu.assume_multiple %0, 8 : i32
    %c0 = arith.constant 0 : index
    %2 = arith.index_cast %1 : i32 to index
    %c0_0 = arith.constant 0 : index
    %c0_1 = arith.constant 0 : index
    %3 = vector.load %arg2[%c0, %2, %c0_0, %c0_1] : memref<1x16x16x4xf32, #tpu.memory_space<vmem>>, vector<1x8x16x4xf32>
    %4 = vector.shape_cast %3 : vector<1x8x16x4xf32> to vector<8x16x4xf32>
    %cst = arith.constant 0.000000e+00 : bf16
    %5 = vector.broadcast %cst : bf16 to vector<12x1x4xbf16>
    %c0_2 = arith.constant 0 : index
    %c0_3 = arith.constant 0 : index
    %c0_4 = arith.constant 0 : index
    %6 = vector.load %arg8[%c0_2, %c0_3, %c0_4] : memref<12x18x4xbf16, #tpu.memory_space<vmem>>, vector<12x1x4xbf16>
    tpu.vector_store %arg8[%c0_2, %c0_3, %c0_4], %5 {strides = array<i32>} : memref<12x18x4xbf16, #tpu.memory_space<vmem>>, vector<12x1x4xbf16>,
    %cst_5 = arith.constant 0.000000e+00 : bf16
    %7 = vector.broadcast %cst_5 : bf16 to vector<12x1x4xbf16>
    %c0_6 = arith.constant 0 : index
    %c17 = arith.constant 17 : index
    %c0_7 = arith.constant 0 : index
    %8 = vector.load %arg8[%c0_6, %c17, %c0_7] : memref<12x18x4xbf16, #tpu.memory_space<vmem>>, vector<12x1x4xbf16>
    tpu.vector_store %arg8[%c0_6, %c17, %c0_7], %7 {strides = array<i32>} : memref<12x18x4xbf16, #tpu.memory_space<vmem>>, vector<12x1x4xbf16>,
    %9 = arith.truncf %4 : vector<8x16x4xf32> to vector<8x16x4xbf16>
    %c2 = arith.constant 2 : index
    %c1 = arith.constant 1 : index
    %c0_8 = arith.constant 0 : index
    %10 = vector.load %arg8[%c2, %c1, %c0_8] : memref<12x18x4xbf16, #tpu.memory_space<vmem>>, vector<8x16x4xbf16>
    tpu.vector_store %arg8[%c2, %c1, %c0_8], %9 {strides = array<i32>} : memref<12x18x4xbf16, #tpu.memory_space<vmem>>, vector<8x16x4xbf16>,
    %c0_i32 = arith.constant 0 : i32
    %11 = arith.cmpi sgt, %arg1, %c0_i32 : i32
    %12 = arith.extui %11 : i1 to i32
    %c0_i32_9 = arith.constant 0 : i32
    %13 = arith.cmpi ne, %12, %c0_i32_9 : i32
    scf.if %13 {
      %c2_i32 = arith.constant 2 : i32
      %163 = arith.subi %1, %c2_i32 : i32
      %c0_162 = arith.constant 0 : index
      %164 = arith.index_cast %163 : i32 to index
      %c0_163 = arith.constant 0 : index
      %c0_164 = arith.constant 0 : index
      %165 = vector.load %arg2[%c0_162, %164, %c0_163, %c0_164] : memref<1x16x16x4xf32, #tpu.memory_space<vmem>>, vector<1x2x16x4xf32>
      %166 = vector.shape_cast %165 : vector<1x2x16x4xf32> to vector<2x16x4xf32>
      %167 = arith.truncf %166 : vector<2x16x4xf32> to vector<2x16x4xbf16>
      %c0_165 = arith.constant 0 : index
      %c1_166 = arith.constant 1 : index
      %c0_167 = arith.constant 0 : index
      %168 = vector.load %arg8[%c0_165, %c1_166, %c0_167] : memref<12x18x4xbf16, #tpu.memory_space<vmem>>, vector<2x16x4xbf16>
      tpu.vector_store %arg8[%c0_165, %c1_166, %c0_167], %167 {strides = array<i32>} : memref<12x18x4xbf16, #tpu.memory_space<vmem>>, vector<2x16x4xbf16>,
    } else {
    }
    %c0_i32_10 = arith.constant 0 : i32
    %14 = arith.cmpi eq, %arg1, %c0_i32_10 : i32
    %15 = arith.extui %14 : i1 to i32
    %c0_i32_11 = arith.constant 0 : i32
    %16 = arith.cmpi ne, %15, %c0_i32_11 : i32
    scf.if %16 {
      %cst_162 = arith.constant 0.000000e+00 : bf16
      %163 = vector.broadcast %cst_162 : bf16 to vector<2x18x4xbf16>
      %c0_163 = arith.constant 0 : index
      %c0_164 = arith.constant 0 : index
      %c0_165 = arith.constant 0 : index
      %164 = vector.load %arg8[%c0_163, %c0_164, %c0_165] : memref<12x18x4xbf16, #tpu.memory_space<vmem>>, vector<2x18x4xbf16>
      tpu.vector_store %arg8[%c0_163, %c0_164, %c0_165], %163 {strides = array<i32>} : memref<12x18x4xbf16, #tpu.memory_space<vmem>>, vector<2x18x4xbf16>,
    } else {
    }
    %c1_i32 = arith.constant 1 : i32
    %17 = arith.cmpi slt, %arg1, %c1_i32 : i32
    %18 = arith.extui %17 : i1 to i32
    %c0_i32_12 = arith.constant 0 : i32
    %19 = arith.cmpi ne, %18, %c0_i32_12 : i32
    scf.if %19 {
      %c8_i32_162 = arith.constant 8 : i32
      %163 = arith.addi %1, %c8_i32_162 : i32
      %c0_163 = arith.constant 0 : index
      %164 = arith.index_cast %163 : i32 to index
      %c0_164 = arith.constant 0 : index
      %c0_165 = arith.constant 0 : index
      %165 = vector.load %arg2[%c0_163, %164, %c0_164, %c0_165] : memref<1x16x16x4xf32, #tpu.memory_space<vmem>>, vector<1x2x16x4xf32>
      %166 = vector.shape_cast %165 : vector<1x2x16x4xf32> to vector<2x16x4xf32>
      %167 = arith.truncf %166 : vector<2x16x4xf32> to vector<2x16x4xbf16>
      %c10 = arith.constant 10 : index
      %c1_166 = arith.constant 1 : index
      %c0_167 = arith.constant 0 : index
      %168 = vector.load %arg8[%c10, %c1_166, %c0_167] : memref<12x18x4xbf16, #tpu.memory_space<vmem>>, vector<2x16x4xbf16>
      tpu.vector_store %arg8[%c10, %c1_166, %c0_167], %167 {strides = array<i32>} : memref<12x18x4xbf16, #tpu.memory_space<vmem>>, vector<2x16x4xbf16>,
    } else {
    }
    %c1_i32_13 = arith.constant 1 : i32
    %20 = arith.cmpi eq, %arg1, %c1_i32_13 : i32
    %21 = arith.extui %20 : i1 to i32
    %c0_i32_14 = arith.constant 0 : i32
    %22 = arith.cmpi ne, %21, %c0_i32_14 : i32
    scf.if %22 {
      %cst_162 = arith.constant 0.000000e+00 : bf16
      %163 = vector.broadcast %cst_162 : bf16 to vector<2x18x4xbf16>
      %c10 = arith.constant 10 : index
      %c0_163 = arith.constant 0 : index
      %c0_164 = arith.constant 0 : index
      %164 = vector.load %arg8[%c10, %c0_163, %c0_164] : memref<12x18x4xbf16, #tpu.memory_space<vmem>>, vector<2x18x4xbf16>
      tpu.vector_store %arg8[%c10, %c0_163, %c0_164], %163 {strides = array<i32>} : memref<12x18x4xbf16, #tpu.memory_space<vmem>>, vector<2x18x4xbf16>,
    } else {
    }
    %cst_15 = arith.constant 0.000000e+00 : f32
    %23 = vector.broadcast %cst_15 : f32 to vector<160x4xf32>
    %c0_16 = arith.constant 0 : index
    %c0_17 = arith.constant 0 : index
    %c0_18 = arith.constant 0 : index
    %24 = vector.load %arg8[%c0_16, %c0_17, %c0_18] : memref<12x18x4xbf16, #tpu.memory_space<vmem>>, vector<10x16x4xbf16>
    %25 = vector.shape_cast %24 : vector<10x16x4xbf16> to vector<160x4xbf16>
    %c0_19 = arith.constant 0 : index
    %c0_20 = arith.constant 0 : index
    %c0_21 = arith.constant 0 : index
    %26 = vector.load %arg3[%c0_19, %c0_20, %c0_21] : memref<9x4x4xbf16, #tpu.memory_space<vmem>>, vector<1x4x4xbf16>
    %27 = vector.shape_cast %26 : vector<1x4x4xbf16> to vector<4x4xbf16>
    %cst_22 = arith.constant dense<0.000000e+00> : vector<160x4xf32>
    %28 = tpu.matmul %25, %27, %cst_22 {dimension_numbers = #tpu.dot_dimension_numbers<[1], [0], [0], [1], [0, 0, 1, 1], [], []>} : vector<160x4xbf16>, vector<4x4xbf16>, vector<160x4xf32> -> vector<160x4xf32>
    %29 = arith.addf %23, %28 : vector<160x4xf32>
    %c0_23 = arith.constant 0 : index
    %c1_24 = arith.constant 1 : index
    %c0_25 = arith.constant 0 : index
    %30 = vector.load %arg8[%c0_23, %c1_24, %c0_25] : memref<12x18x4xbf16, #tpu.memory_space<vmem>>, vector<10x16x4xbf16>
    %31 = vector.shape_cast %30 : vector<10x16x4xbf16> to vector<160x4xbf16>
    %c1_26 = arith.constant 1 : index
    %c0_27 = arith.constant 0 : index
    %c0_28 = arith.constant 0 : index
    %32 = vector.load %arg3[%c1_26, %c0_27, %c0_28] : memref<9x4x4xbf16, #tpu.memory_space<vmem>>, vector<1x4x4xbf16>
    %33 = vector.shape_cast %32 : vector<1x4x4xbf16> to vector<4x4xbf16>
    %cst_29 = arith.constant dense<0.000000e+00> : vector<160x4xf32>
    %34 = tpu.matmul %31, %33, %cst_29 {dimension_numbers = #tpu.dot_dimension_numbers<[1], [0], [0], [1], [0, 0, 1, 1], [], []>} : vector<160x4xbf16>, vector<4x4xbf16>, vector<160x4xf32> -> vector<160x4xf32>
    %35 = arith.addf %29, %34 : vector<160x4xf32>
    %c0_30 = arith.constant 0 : index
    %c2_31 = arith.constant 2 : index
    %c0_32 = arith.constant 0 : index
    %36 = vector.load %arg8[%c0_30, %c2_31, %c0_32] : memref<12x18x4xbf16, #tpu.memory_space<vmem>>, vector<10x16x4xbf16>
    %37 = vector.shape_cast %36 : vector<10x16x4xbf16> to vector<160x4xbf16>
    %c2_33 = arith.constant 2 : index
    %c0_34 = arith.constant 0 : index
    %c0_35 = arith.constant 0 : index
    %38 = vector.load %arg3[%c2_33, %c0_34, %c0_35] : memref<9x4x4xbf16, #tpu.memory_space<vmem>>, vector<1x4x4xbf16>
    %39 = vector.shape_cast %38 : vector<1x4x4xbf16> to vector<4x4xbf16>
    %cst_36 = arith.constant dense<0.000000e+00> : vector<160x4xf32>
    %40 = tpu.matmul %37, %39, %cst_36 {dimension_numbers = #tpu.dot_dimension_numbers<[1], [0], [0], [1], [0, 0, 1, 1], [], []>} : vector<160x4xbf16>, vector<4x4xbf16>, vector<160x4xf32> -> vector<160x4xf32>
    %41 = arith.addf %35, %40 : vector<160x4xf32>
    %c1_37 = arith.constant 1 : index
    %c0_38 = arith.constant 0 : index
    %c0_39 = arith.constant 0 : index
    %42 = vector.load %arg8[%c1_37, %c0_38, %c0_39] : memref<12x18x4xbf16, #tpu.memory_space<vmem>>, vector<10x16x4xbf16>
    %43 = vector.shape_cast %42 : vector<10x16x4xbf16> to vector<160x4xbf16>
    %c3 = arith.constant 3 : index
    %c0_40 = arith.constant 0 : index
    %c0_41 = arith.constant 0 : index
    %44 = vector.load %arg3[%c3, %c0_40, %c0_41] : memref<9x4x4xbf16, #tpu.memory_space<vmem>>, vector<1x4x4xbf16>
    %45 = vector.shape_cast %44 : vector<1x4x4xbf16> to vector<4x4xbf16>
    %cst_42 = arith.constant dense<0.000000e+00> : vector<160x4xf32>
    %46 = tpu.matmul %43, %45, %cst_42 {dimension_numbers = #tpu.dot_dimension_numbers<[1], [0], [0], [1], [0, 0, 1, 1], [], []>} : vector<160x4xbf16>, vector<4x4xbf16>, vector<160x4xf32> -> vector<160x4xf32>
    %47 = arith.addf %41, %46 : vector<160x4xf32>
    %c1_43 = arith.constant 1 : index
    %c1_44 = arith.constant 1 : index
    %c0_45 = arith.constant 0 : index
    %48 = vector.load %arg8[%c1_43, %c1_44, %c0_45] : memref<12x18x4xbf16, #tpu.memory_space<vmem>>, vector<10x16x4xbf16>
    %49 = vector.shape_cast %48 : vector<10x16x4xbf16> to vector<160x4xbf16>
    %c4 = arith.constant 4 : index
    %c0_46 = arith.constant 0 : index
    %c0_47 = arith.constant 0 : index
    %50 = vector.load %arg3[%c4, %c0_46, %c0_47] : memref<9x4x4xbf16, #tpu.memory_space<vmem>>, vector<1x4x4xbf16>
    %51 = vector.shape_cast %50 : vector<1x4x4xbf16> to vector<4x4xbf16>
    %cst_48 = arith.constant dense<0.000000e+00> : vector<160x4xf32>
    %52 = tpu.matmul %49, %51, %cst_48 {dimension_numbers = #tpu.dot_dimension_numbers<[1], [0], [0], [1], [0, 0, 1, 1], [], []>} : vector<160x4xbf16>, vector<4x4xbf16>, vector<160x4xf32> -> vector<160x4xf32>
    %53 = arith.addf %47, %52 : vector<160x4xf32>
    %c1_49 = arith.constant 1 : index
    %c2_50 = arith.constant 2 : index
    %c0_51 = arith.constant 0 : index
    %54 = vector.load %arg8[%c1_49, %c2_50, %c0_51] : memref<12x18x4xbf16, #tpu.memory_space<vmem>>, vector<10x16x4xbf16>
    %55 = vector.shape_cast %54 : vector<10x16x4xbf16> to vector<160x4xbf16>
    %c5 = arith.constant 5 : index
    %c0_52 = arith.constant 0 : index
    %c0_53 = arith.constant 0 : index
    %56 = vector.load %arg3[%c5, %c0_52, %c0_53] : memref<9x4x4xbf16, #tpu.memory_space<vmem>>, vector<1x4x4xbf16>
    %57 = vector.shape_cast %56 : vector<1x4x4xbf16> to vector<4x4xbf16>
    %cst_54 = arith.constant dense<0.000000e+00> : vector<160x4xf32>
    %58 = tpu.matmul %55, %57, %cst_54 {dimension_numbers = #tpu.dot_dimension_numbers<[1], [0], [0], [1], [0, 0, 1, 1], [], []>} : vector<160x4xbf16>, vector<4x4xbf16>, vector<160x4xf32> -> vector<160x4xf32>
    %59 = arith.addf %53, %58 : vector<160x4xf32>
    %c2_55 = arith.constant 2 : index
    %c0_56 = arith.constant 0 : index
    %c0_57 = arith.constant 0 : index
    %60 = vector.load %arg8[%c2_55, %c0_56, %c0_57] : memref<12x18x4xbf16, #tpu.memory_space<vmem>>, vector<10x16x4xbf16>
    %61 = vector.shape_cast %60 : vector<10x16x4xbf16> to vector<160x4xbf16>
    %c6 = arith.constant 6 : index
    %c0_58 = arith.constant 0 : index
    %c0_59 = arith.constant 0 : index
    %62 = vector.load %arg3[%c6, %c0_58, %c0_59] : memref<9x4x4xbf16, #tpu.memory_space<vmem>>, vector<1x4x4xbf16>
    %63 = vector.shape_cast %62 : vector<1x4x4xbf16> to vector<4x4xbf16>
    %cst_60 = arith.constant dense<0.000000e+00> : vector<160x4xf32>
    %64 = tpu.matmul %61, %63, %cst_60 {dimension_numbers = #tpu.dot_dimension_numbers<[1], [0], [0], [1], [0, 0, 1, 1], [], []>} : vector<160x4xbf16>, vector<4x4xbf16>, vector<160x4xf32> -> vector<160x4xf32>
    %65 = arith.addf %59, %64 : vector<160x4xf32>
    %c2_61 = arith.constant 2 : index
    %c1_62 = arith.constant 1 : index
    %c0_63 = arith.constant 0 : index
    %66 = vector.load %arg8[%c2_61, %c1_62, %c0_63] : memref<12x18x4xbf16, #tpu.memory_space<vmem>>, vector<10x16x4xbf16>
    %67 = vector.shape_cast %66 : vector<10x16x4xbf16> to vector<160x4xbf16>
    %c7 = arith.constant 7 : index
    %c0_64 = arith.constant 0 : index
    %c0_65 = arith.constant 0 : index
    %68 = vector.load %arg3[%c7, %c0_64, %c0_65] : memref<9x4x4xbf16, #tpu.memory_space<vmem>>, vector<1x4x4xbf16>
    %69 = vector.shape_cast %68 : vector<1x4x4xbf16> to vector<4x4xbf16>
    %cst_66 = arith.constant dense<0.000000e+00> : vector<160x4xf32>
    %70 = tpu.matmul %67, %69, %cst_66 {dimension_numbers = #tpu.dot_dimension_numbers<[1], [0], [0], [1], [0, 0, 1, 1], [], []>} : vector<160x4xbf16>, vector<4x4xbf16>, vector<160x4xf32> -> vector<160x4xf32>
    %71 = arith.addf %65, %70 : vector<160x4xf32>
    %c2_67 = arith.constant 2 : index
    %c2_68 = arith.constant 2 : index
    %c0_69 = arith.constant 0 : index
    %72 = vector.load %arg8[%c2_67, %c2_68, %c0_69] : memref<12x18x4xbf16, #tpu.memory_space<vmem>>, vector<10x16x4xbf16>
    %73 = vector.shape_cast %72 : vector<10x16x4xbf16> to vector<160x4xbf16>
    %c8 = arith.constant 8 : index
    %c0_70 = arith.constant 0 : index
    %c0_71 = arith.constant 0 : index
    %74 = vector.load %arg3[%c8, %c0_70, %c0_71] : memref<9x4x4xbf16, #tpu.memory_space<vmem>>, vector<1x4x4xbf16>
    %75 = vector.shape_cast %74 : vector<1x4x4xbf16> to vector<4x4xbf16>
    %cst_72 = arith.constant dense<0.000000e+00> : vector<160x4xf32>
    %76 = tpu.matmul %73, %75, %cst_72 {dimension_numbers = #tpu.dot_dimension_numbers<[1], [0], [0], [1], [0, 0, 1, 1], [], []>} : vector<160x4xbf16>, vector<4x4xbf16>, vector<160x4xf32> -> vector<160x4xf32>
    %77 = arith.addf %71, %76 : vector<160x4xf32>
    %c0_73 = arith.constant 0 : index
    %c0_74 = arith.constant 0 : index
    %78 = vector.load %arg4[%c0_73, %c0_74] : memref<1x4xf32, #tpu.memory_space<vmem>>, vector<1x4xf32>
    %79 = vector.broadcast %78 : vector<1x4xf32> to vector<160x4xf32>
    %80 = arith.addf %77, %79 : vector<160x4xf32>
    %cst_75 = arith.constant 0.000000e+00 : f32
    %81 = vector.broadcast %cst_75 : f32 to vector<160x4xf32>
    %82 = arith.maximumf %80, %81 : vector<160x4xf32>
    %cst_76 = arith.constant 0.000000e+00 : bf16
    %83 = vector.broadcast %cst_76 : bf16 to vector<10x1x4xbf16>
    %c0_77 = arith.constant 0 : index
    %c0_78 = arith.constant 0 : index
    %c0_79 = arith.constant 0 : index
    %84 = vector.load %arg9[%c0_77, %c0_78, %c0_79] : memref<10x18x4xbf16, #tpu.memory_space<vmem>>, vector<10x1x4xbf16>
    tpu.vector_store %arg9[%c0_77, %c0_78, %c0_79], %83 {strides = array<i32>} : memref<10x18x4xbf16, #tpu.memory_space<vmem>>, vector<10x1x4xbf16>,
    %cst_80 = arith.constant 0.000000e+00 : bf16
    %85 = vector.broadcast %cst_80 : bf16 to vector<10x1x4xbf16>
    %c0_81 = arith.constant 0 : index
    %c17_82 = arith.constant 17 : index
    %c0_83 = arith.constant 0 : index
    %86 = vector.load %arg9[%c0_81, %c17_82, %c0_83] : memref<10x18x4xbf16, #tpu.memory_space<vmem>>, vector<10x1x4xbf16>
    tpu.vector_store %arg9[%c0_81, %c17_82, %c0_83], %85 {strides = array<i32>} : memref<10x18x4xbf16, #tpu.memory_space<vmem>>, vector<10x1x4xbf16>,
    %87 = arith.truncf %82 : vector<160x4xf32> to vector<160x4xbf16>
    %88 = vector.shape_cast %87 : vector<160x4xbf16> to vector<10x16x4xbf16>
    %c0_84 = arith.constant 0 : index
    %c1_85 = arith.constant 1 : index
    %c0_86 = arith.constant 0 : index
    %89 = vector.load %arg9[%c0_84, %c1_85, %c0_86] : memref<10x18x4xbf16, #tpu.memory_space<vmem>>, vector<10x16x4xbf16>
    tpu.vector_store %arg9[%c0_84, %c1_85, %c0_86], %88 {strides = array<i32>} : memref<10x18x4xbf16, #tpu.memory_space<vmem>>, vector<10x16x4xbf16>,
    %c0_i32_87 = arith.constant 0 : i32
    %90 = arith.cmpi eq, %arg1, %c0_i32_87 : i32
    %91 = arith.extui %90 : i1 to i32
    %c0_i32_88 = arith.constant 0 : i32
    %92 = arith.cmpi ne, %91, %c0_i32_88 : i32
    scf.if %92 {
      %cst_162 = arith.constant 0.000000e+00 : bf16
      %163 = vector.broadcast %cst_162 : bf16 to vector<1x18x4xbf16>
      %c0_163 = arith.constant 0 : index
      %c0_164 = arith.constant 0 : index
      %c0_165 = arith.constant 0 : index
      %164 = vector.load %arg9[%c0_163, %c0_164, %c0_165] : memref<10x18x4xbf16, #tpu.memory_space<vmem>>, vector<1x18x4xbf16>
      tpu.vector_store %arg9[%c0_163, %c0_164, %c0_165], %163 {strides = array<i32>} : memref<10x18x4xbf16, #tpu.memory_space<vmem>>, vector<1x18x4xbf16>,
    } else {
    }
    %c1_i32_89 = arith.constant 1 : i32
    %93 = arith.cmpi eq, %arg1, %c1_i32_89 : i32
    %94 = arith.extui %93 : i1 to i32
    %c0_i32_90 = arith.constant 0 : i32
    %95 = arith.cmpi ne, %94, %c0_i32_90 : i32
    scf.if %95 {
      %cst_162 = arith.constant 0.000000e+00 : bf16
      %163 = vector.broadcast %cst_162 : bf16 to vector<1x18x4xbf16>
      %c9 = arith.constant 9 : index
      %c0_163 = arith.constant 0 : index
      %c0_164 = arith.constant 0 : index
      %164 = vector.load %arg9[%c9, %c0_163, %c0_164] : memref<10x18x4xbf16, #tpu.memory_space<vmem>>, vector<1x18x4xbf16>
      tpu.vector_store %arg9[%c9, %c0_163, %c0_164], %163 {strides = array<i32>} : memref<10x18x4xbf16, #tpu.memory_space<vmem>>, vector<1x18x4xbf16>,
    } else {
    }
    %cst_91 = arith.constant 0.000000e+00 : f32
    %96 = vector.broadcast %cst_91 : f32 to vector<128x4xf32>
    %c0_92 = arith.constant 0 : index
    %c0_93 = arith.constant 0 : index
    %c0_94 = arith.constant 0 : index
    %97 = vector.load %arg9[%c0_92, %c0_93, %c0_94] : memref<10x18x4xbf16, #tpu.memory_space<vmem>>, vector<8x16x4xbf16>
    %98 = vector.shape_cast %97 : vector<8x16x4xbf16> to vector<128x4xbf16>
    %c0_95 = arith.constant 0 : index
    %c0_96 = arith.constant 0 : index
    %c0_97 = arith.constant 0 : index
    %99 = vector.load %arg5[%c0_95, %c0_96, %c0_97] : memref<9x4x4xbf16, #tpu.memory_space<vmem>>, vector<1x4x4xbf16>
    %100 = vector.shape_cast %99 : vector<1x4x4xbf16> to vector<4x4xbf16>
    %cst_98 = arith.constant dense<0.000000e+00> : vector<128x4xf32>
    %101 = tpu.matmul %98, %100, %cst_98 {dimension_numbers = #tpu.dot_dimension_numbers<[1], [0], [0], [1], [0, 0, 1, 1], [], []>} : vector<128x4xbf16>, vector<4x4xbf16>, vector<128x4xf32> -> vector<128x4xf32>
    %102 = arith.addf %96, %101 : vector<128x4xf32>
    %c0_99 = arith.constant 0 : index
    %c1_100 = arith.constant 1 : index
    %c0_101 = arith.constant 0 : index
    %103 = vector.load %arg9[%c0_99, %c1_100, %c0_101] : memref<10x18x4xbf16, #tpu.memory_space<vmem>>, vector<8x16x4xbf16>
    %104 = vector.shape_cast %103 : vector<8x16x4xbf16> to vector<128x4xbf16>
    %c1_102 = arith.constant 1 : index
    %c0_103 = arith.constant 0 : index
    %c0_104 = arith.constant 0 : index
    %105 = vector.load %arg5[%c1_102, %c0_103, %c0_104] : memref<9x4x4xbf16, #tpu.memory_space<vmem>>, vector<1x4x4xbf16>
    %106 = vector.shape_cast %105 : vector<1x4x4xbf16> to vector<4x4xbf16>
    %cst_105 = arith.constant dense<0.000000e+00> : vector<128x4xf32>
    %107 = tpu.matmul %104, %106, %cst_105 {dimension_numbers = #tpu.dot_dimension_numbers<[1], [0], [0], [1], [0, 0, 1, 1], [], []>} : vector<128x4xbf16>, vector<4x4xbf16>, vector<128x4xf32> -> vector<128x4xf32>
    %108 = arith.addf %102, %107 : vector<128x4xf32>
    %c0_106 = arith.constant 0 : index
    %c2_107 = arith.constant 2 : index
    %c0_108 = arith.constant 0 : index
    %109 = vector.load %arg9[%c0_106, %c2_107, %c0_108] : memref<10x18x4xbf16, #tpu.memory_space<vmem>>, vector<8x16x4xbf16>
    %110 = vector.shape_cast %109 : vector<8x16x4xbf16> to vector<128x4xbf16>
    %c2_109 = arith.constant 2 : index
    %c0_110 = arith.constant 0 : index
    %c0_111 = arith.constant 0 : index
    %111 = vector.load %arg5[%c2_109, %c0_110, %c0_111] : memref<9x4x4xbf16, #tpu.memory_space<vmem>>, vector<1x4x4xbf16>
    %112 = vector.shape_cast %111 : vector<1x4x4xbf16> to vector<4x4xbf16>
    %cst_112 = arith.constant dense<0.000000e+00> : vector<128x4xf32>
    %113 = tpu.matmul %110, %112, %cst_112 {dimension_numbers = #tpu.dot_dimension_numbers<[1], [0], [0], [1], [0, 0, 1, 1], [], []>} : vector<128x4xbf16>, vector<4x4xbf16>, vector<128x4xf32> -> vector<128x4xf32>
    %114 = arith.addf %108, %113 : vector<128x4xf32>
    %c1_113 = arith.constant 1 : index
    %c0_114 = arith.constant 0 : index
    %c0_115 = arith.constant 0 : index
    %115 = vector.load %arg9[%c1_113, %c0_114, %c0_115] : memref<10x18x4xbf16, #tpu.memory_space<vmem>>, vector<8x16x4xbf16>
    %116 = vector.shape_cast %115 : vector<8x16x4xbf16> to vector<128x4xbf16>
    %c3_116 = arith.constant 3 : index
    %c0_117 = arith.constant 0 : index
    %c0_118 = arith.constant 0 : index
    %117 = vector.load %arg5[%c3_116, %c0_117, %c0_118] : memref<9x4x4xbf16, #tpu.memory_space<vmem>>, vector<1x4x4xbf16>
    %118 = vector.shape_cast %117 : vector<1x4x4xbf16> to vector<4x4xbf16>
    %cst_119 = arith.constant dense<0.000000e+00> : vector<128x4xf32>
    %119 = tpu.matmul %116, %118, %cst_119 {dimension_numbers = #tpu.dot_dimension_numbers<[1], [0], [0], [1], [0, 0, 1, 1], [], []>} : vector<128x4xbf16>, vector<4x4xbf16>, vector<128x4xf32> -> vector<128x4xf32>
    %120 = arith.addf %114, %119 : vector<128x4xf32>
    %c1_120 = arith.constant 1 : index
    %c1_121 = arith.constant 1 : index
    %c0_122 = arith.constant 0 : index
    %121 = vector.load %arg9[%c1_120, %c1_121, %c0_122] : memref<10x18x4xbf16, #tpu.memory_space<vmem>>, vector<8x16x4xbf16>
    %122 = vector.shape_cast %121 : vector<8x16x4xbf16> to vector<128x4xbf16>
    %c4_123 = arith.constant 4 : index
    %c0_124 = arith.constant 0 : index
    %c0_125 = arith.constant 0 : index
    %123 = vector.load %arg5[%c4_123, %c0_124, %c0_125] : memref<9x4x4xbf16, #tpu.memory_space<vmem>>, vector<1x4x4xbf16>
    %124 = vector.shape_cast %123 : vector<1x4x4xbf16> to vector<4x4xbf16>
    %cst_126 = arith.constant dense<0.000000e+00> : vector<128x4xf32>
    %125 = tpu.matmul %122, %124, %cst_126 {dimension_numbers = #tpu.dot_dimension_numbers<[1], [0], [0], [1], [0, 0, 1, 1], [], []>} : vector<128x4xbf16>, vector<4x4xbf16>, vector<128x4xf32> -> vector<128x4xf32>
    %126 = arith.addf %120, %125 : vector<128x4xf32>
    %c1_127 = arith.constant 1 : index
    %c2_128 = arith.constant 2 : index
    %c0_129 = arith.constant 0 : index
    %127 = vector.load %arg9[%c1_127, %c2_128, %c0_129] : memref<10x18x4xbf16, #tpu.memory_space<vmem>>, vector<8x16x4xbf16>
    %128 = vector.shape_cast %127 : vector<8x16x4xbf16> to vector<128x4xbf16>
    %c5_130 = arith.constant 5 : index
    %c0_131 = arith.constant 0 : index
    %c0_132 = arith.constant 0 : index
    %129 = vector.load %arg5[%c5_130, %c0_131, %c0_132] : memref<9x4x4xbf16, #tpu.memory_space<vmem>>, vector<1x4x4xbf16>
    %130 = vector.shape_cast %129 : vector<1x4x4xbf16> to vector<4x4xbf16>
    %cst_133 = arith.constant dense<0.000000e+00> : vector<128x4xf32>
    %131 = tpu.matmul %128, %130, %cst_133 {dimension_numbers = #tpu.dot_dimension_numbers<[1], [0], [0], [1], [0, 0, 1, 1], [], []>} : vector<128x4xbf16>, vector<4x4xbf16>, vector<128x4xf32> -> vector<128x4xf32>
    %132 = arith.addf %126, %131 : vector<128x4xf32>
    %c2_134 = arith.constant 2 : index
    %c0_135 = arith.constant 0 : index
    %c0_136 = arith.constant 0 : index
    %133 = vector.load %arg9[%c2_134, %c0_135, %c0_136] : memref<10x18x4xbf16, #tpu.memory_space<vmem>>, vector<8x16x4xbf16>
    %134 = vector.shape_cast %133 : vector<8x16x4xbf16> to vector<128x4xbf16>
    %c6_137 = arith.constant 6 : index
    %c0_138 = arith.constant 0 : index
    %c0_139 = arith.constant 0 : index
    %135 = vector.load %arg5[%c6_137, %c0_138, %c0_139] : memref<9x4x4xbf16, #tpu.memory_space<vmem>>, vector<1x4x4xbf16>
    %136 = vector.shape_cast %135 : vector<1x4x4xbf16> to vector<4x4xbf16>
    %cst_140 = arith.constant dense<0.000000e+00> : vector<128x4xf32>
    %137 = tpu.matmul %134, %136, %cst_140 {dimension_numbers = #tpu.dot_dimension_numbers<[1], [0], [0], [1], [0, 0, 1, 1], [], []>} : vector<128x4xbf16>, vector<4x4xbf16>, vector<128x4xf32> -> vector<128x4xf32>
    %138 = arith.addf %132, %137 : vector<128x4xf32>
    %c2_141 = arith.constant 2 : index
    %c1_142 = arith.constant 1 : index
    %c0_143 = arith.constant 0 : index
    %139 = vector.load %arg9[%c2_141, %c1_142, %c0_143] : memref<10x18x4xbf16, #tpu.memory_space<vmem>>, vector<8x16x4xbf16>
    %140 = vector.shape_cast %139 : vector<8x16x4xbf16> to vector<128x4xbf16>
    %c7_144 = arith.constant 7 : index
    %c0_145 = arith.constant 0 : index
    %c0_146 = arith.constant 0 : index
    %141 = vector.load %arg5[%c7_144, %c0_145, %c0_146] : memref<9x4x4xbf16, #tpu.memory_space<vmem>>, vector<1x4x4xbf16>
    %142 = vector.shape_cast %141 : vector<1x4x4xbf16> to vector<4x4xbf16>
    %cst_147 = arith.constant dense<0.000000e+00> : vector<128x4xf32>
    %143 = tpu.matmul %140, %142, %cst_147 {dimension_numbers = #tpu.dot_dimension_numbers<[1], [0], [0], [1], [0, 0, 1, 1], [], []>} : vector<128x4xbf16>, vector<4x4xbf16>, vector<128x4xf32> -> vector<128x4xf32>
    %144 = arith.addf %138, %143 : vector<128x4xf32>
    %c2_148 = arith.constant 2 : index
    %c2_149 = arith.constant 2 : index
    %c0_150 = arith.constant 0 : index
    %145 = vector.load %arg9[%c2_148, %c2_149, %c0_150] : memref<10x18x4xbf16, #tpu.memory_space<vmem>>, vector<8x16x4xbf16>
    %146 = vector.shape_cast %145 : vector<8x16x4xbf16> to vector<128x4xbf16>
    %c8_151 = arith.constant 8 : index
    %c0_152 = arith.constant 0 : index
    %c0_153 = arith.constant 0 : index
    %147 = vector.load %arg5[%c8_151, %c0_152, %c0_153] : memref<9x4x4xbf16, #tpu.memory_space<vmem>>, vector<1x4x4xbf16>
    %148 = vector.shape_cast %147 : vector<1x4x4xbf16> to vector<4x4xbf16>
    %cst_154 = arith.constant dense<0.000000e+00> : vector<128x4xf32>
    %149 = tpu.matmul %146, %148, %cst_154 {dimension_numbers = #tpu.dot_dimension_numbers<[1], [0], [0], [1], [0, 0, 1, 1], [], []>} : vector<128x4xbf16>, vector<4x4xbf16>, vector<128x4xf32> -> vector<128x4xf32>
    %150 = arith.addf %144, %149 : vector<128x4xf32>
    %c0_155 = arith.constant 0 : index
    %c0_156 = arith.constant 0 : index
    %151 = vector.load %arg6[%c0_155, %c0_156] : memref<1x4xf32, #tpu.memory_space<vmem>>, vector<1x4xf32>
    %152 = vector.broadcast %151 : vector<1x4xf32> to vector<128x4xf32>
    %153 = arith.addf %150, %152 : vector<128x4xf32>
    %154 = vector.shape_cast %4 : vector<8x16x4xf32> to vector<128x4xf32>
    %155 = arith.addf %153, %154 : vector<128x4xf32>
    %cst_157 = arith.constant 0.000000e+00 : f32
    %156 = vector.broadcast %cst_157 : f32 to vector<128x4xf32>
    %157 = arith.maximumf %155, %156 : vector<128x4xf32>
    %158 = arith.truncf %157 : vector<128x4xf32> to vector<128x4xbf16>
    %159 = vector.shape_cast %158 : vector<128x4xbf16> to vector<8x16x4xbf16>
    %c0_158 = arith.constant 0 : index
    %c0_159 = arith.constant 0 : index
    %c0_160 = arith.constant 0 : index
    %c0_161 = arith.constant 0 : index
    %160 = vector.load %arg7[%c0_158, %c0_159, %c0_160, %c0_161] : memref<1x8x16x4xbf16, #tpu.memory_space<vmem>>, vector<1x8x16x4xbf16>
    %161 = vector.shape_cast %160 : vector<1x8x16x4xbf16> to vector<8x16x4xbf16>
    %162 = vector.shape_cast %159 : vector<8x16x4xbf16> to vector<1x8x16x4xbf16>
    tpu.vector_store %arg7[%c0_158, %c0_159, %c0_160, %c0_161], %162 {strides = array<i32>} : memref<1x8x16x4xbf16, #tpu.memory_space<vmem>>, vector<1x8x16x4xbf16>,
    return
  }
  func.func @transform_0(%arg0: i32, %arg1: i32) -> (i32, i32, i32, i32) {
    %c0_i32 = arith.constant 0 : i32
    %c0_i32_0 = arith.constant 0 : i32
    %c0_i32_1 = arith.constant 0 : i32
    %c0_i32_2 = arith.constant 0 : i32
    return %arg0, %c0_i32, %c0_i32_0, %c0_i32_1 : i32, i32, i32, i32
  }
  func.func @transform_1(%arg0: i32, %arg1: i32) -> (i32, i32, i32) {
    %c0_i32 = arith.constant 0 : i32
    %c0_i32_0 = arith.constant 0 : i32
    %c0_i32_1 = arith.constant 0 : i32
    %c0_i32_2 = arith.constant 0 : i32
    return %c0_i32, %c0_i32_0, %c0_i32_1 : i32, i32, i32
  }
  func.func @transform_2(%arg0: i32, %arg1: i32) -> (i32, i32) {
    %c0_i32 = arith.constant 0 : i32
    %c0_i32_0 = arith.constant 0 : i32
    %c0_i32_1 = arith.constant 0 : i32
    return %c0_i32, %c0_i32_0 : i32, i32
  }
  func.func @transform_3(%arg0: i32, %arg1: i32) -> (i32, i32, i32) {
    %c0_i32 = arith.constant 0 : i32
    %c0_i32_0 = arith.constant 0 : i32
    %c0_i32_1 = arith.constant 0 : i32
    %c0_i32_2 = arith.constant 0 : i32
    return %c0_i32, %c0_i32_0, %c0_i32_1 : i32, i32, i32
  }
  func.func @transform_4(%arg0: i32, %arg1: i32) -> (i32, i32) {
    %c0_i32 = arith.constant 0 : i32
    %c0_i32_0 = arith.constant 0 : i32
    %c0_i32_1 = arith.constant 0 : i32
    return %c0_i32, %c0_i32_0 : i32, i32
  }
  func.func @transform_5(%arg0: i32, %arg1: i32) -> (i32, i32, i32, i32) {
    %c0_i32 = arith.constant 0 : i32
    %c0_i32_0 = arith.constant 0 : i32
    %c0_i32_1 = arith.constant 0 : i32
    return %arg0, %arg1, %c0_i32, %c0_i32_0 : i32, i32, i32, i32
  }
}

</mosaic_0001>

<llo_original>
// kernel: tpu_custom_call.1
$region0: #{tpu_custom_call.1}
  #allocation0 [shape = 'u32[]', space=smem, size = 0x4, offset = 0x4, fixed_abs, tag = 'smem constant byte address 0x4 - core index']
  #allocation1 [shape = 'u32[144,128]{1,0:T(1,128)}', space=vmem, size = 0x12000, scoped, tag = 'internal scratch']
  #allocation2 [shape = 'bf16[12,18,4]{2,1,0:T(8,128)(2,1)}', space=vmem, size = 0x12000, scoped, tag = 'scratch operand']
  #allocation3 [shape = 'bf16[10,18,4]{2,1,0:T(8,128)(2,1)}', space=vmem, size = 0xf000, scoped, tag = 'scratch operand']
  %s0 = inlined_call_operand.vmem [shape: f32[2,16,16,4], index: 0, kind: input, shape index: {}]
  %s1 = inlined_call_operand.vmem [shape: bf16[9,4,4], index: 1, kind: input, shape index: {}]
  %s2 = inlined_call_operand.vmem [shape: f32[1,4], index: 2, kind: input, shape index: {}]
  %s3 = inlined_call_operand.vmem [shape: bf16[9,4,4], index: 3, kind: input, shape index: {}]
  %s4 = inlined_call_operand.vmem [shape: f32[1,4], index: 4, kind: input, shape index: {}]
  %s5 = inlined_call_operand.vmem [shape: bf16[2,16,16,4], index: 5, kind: output, shape index: {}]
  %s6 = sld [smem:[#allocation0]]
  $region77: #{tpu_custom_call.1} parent=0
    _
  %s8 = ssub.s32 1, %s6
  %s9 = scalar_select 0, %s8, %s6
  loop: start=0, step=1, limit=6
  $region2: #{tpu_custom_call.1} parent=0 // loop_pre_header
    _
  $region3: #{tpu_custom_call.1} parent=0 // loop_header
    %s11 = sphi 0, %s15
    %p12 = scmp.ge.s32.totalorder %s11, 6
    %s18 = sphi 0, %s30
    %s19 = sphi 0, %s26
    %s20 = sphi 0, %s18
    %s21 = sphi 0, %s19
    %s22 = sphi 0, %s20
    %s23 = sphi 0, %s21
    %s33 = sphi 0, %s35
    %s36 = sphi 0, %s33
    %s37 = sphi 0, %s36
    %s53 = sphi 0, %s37
    %s57 = sphi 0, %s57
    %s59 = sphi 0, %s57
    %s60 = sphi 0, %s59
    %s74 = sphi 0, %s60
    %s78 = sphi 0, %s78
    %s80 = sphi 0, %s78
    %s81 = sphi 0, %s80
    %s95 = sphi 0, %s81
    %s99 = sphi 0, %s99
    %s101 = sphi 0, %s99
    %s102 = sphi 0, %s101
    %s116 = sphi 0, %s102
    %s120 = sphi 0, %s120
    %s122 = sphi 0, %s120
    %s123 = sphi 0, %s122
    %s137 = sphi 0, %s123
    %s145 = sphi 0, %s147
    %s148 = sphi 0, %s145
    %s149 = sphi 0, %s148
    %s165 = sphi 0, %s149
  $region4: #{tpu_custom_call.1} parent=0 // loop_header_branch
    %14 = sbr.rel (%p12) target = $region8
  $region5: #{tpu_custom_call.1} parent=0 // loop_body
    %s16 = ssub.s32 %s11, 1
    %s17 = ssub.s32 %s11, 2
    %s24 = sadd.s32 1, %s19
    %p25 = scmp.ge.s32.totalorder %s24, 2
    %s26 = scalar_select %p25, 0, %s24
    %s27 = sadd.s32 1, %s18
    %s28 = scalar_select %p25, %s27, %s18
    %p29 = scmp.ge.s32.totalorder %s28, 2
    %s30 = scalar_select %p29, 0, %s28
    %s31 = ssub.s32 %s18, %s30
    %p32 = scmp.eq.s32.totalorder %s31, 0
    %s34 = sadd.s32 %s33, 1
    %s35 = scalar_select %p32, %s33, %s34
    %p38 = pneg %p32
    %p39 = scmp.eq.s32.totalorder %s11, 3
    %p40 = por %p38, %p39
    %p41 = scmp.ne.s32.totalorder %s33, %s36
    %p42 = scmp.eq.s32.totalorder %s11, 0
    %p43 = por %p41, %p42
    %p44 = scmp.ne.s32.totalorder %s33, %s36
    %p45 = scmp.eq.s32.totalorder %s16, 3
    %p46 = por %p44, %p45
    %p47 = scmp.ne.s32.totalorder %s36, %s37
    %p48 = scmp.eq.s32.totalorder %s16, 0
    %p49 = por %p47, %p48
    %p50 = scmp.ne.s32.totalorder %s36, %s37
    %p51 = scmp.eq.s32.totalorder %s17, 3
    %p52 = por %p50, %p51
    %p54 = scmp.ne.s32.totalorder %s37, %s53
    %p55 = scmp.eq.s32.totalorder %s17, 0
    %p56 = por %p54, %p55
    %s58 = sadd.s32 %s57, 1
    %p61 = scmp.eq.s32.totalorder %s11, 3
    %p62 = scmp.ne.s32.totalorder %s57, %s59
    %p63 = scmp.eq.s32.totalorder %s11, 0
    %p64 = por %p62, %p63
    %p65 = scmp.ne.s32.totalorder %s57, %s59
    %p66 = scmp.eq.s32.totalorder %s16, 3
    %p67 = por %p65, %p66
    %p68 = scmp.ne.s32.totalorder %s59, %s60
    %p69 = scmp.eq.s32.totalorder %s16, 0
    %p70 = por %p68, %p69
    %p71 = scmp.ne.s32.totalorder %s59, %s60
    %p72 = scmp.eq.s32.totalorder %s17, 3
    %p73 = por %p71, %p72
    %p75 = scmp.ne.s32.totalorder %s60, %s74
    %p76 = scmp.eq.s32.totalorder %s17, 0
    %p77 = por %p75, %p76
    %s79 = sadd.s32 %s78, 1
    %p82 = scmp.eq.s32.totalorder %s11, 3
    %p83 = scmp.ne.s32.totalorder %s78, %s80
    %p84 = scmp.eq.s32.totalorder %s11, 0
    %p85 = por %p83, %p84
    %p86 = scmp.ne.s32.totalorder %s78, %s80
    %p87 = scmp.eq.s32.totalorder %s16, 3
    %p88 = por %p86, %p87
    %p89 = scmp.ne.s32.totalorder %s80, %s81
    %p90 = scmp.eq.s32.totalorder %s16, 0
    %p91 = por %p89, %p90
    %p92 = scmp.ne.s32.totalorder %s80, %s81
    %p93 = scmp.eq.s32.totalorder %s17, 3
    %p94 = por %p92, %p93
    %p96 = scmp.ne.s32.totalorder %s81, %s95
    %p97 = scmp.eq.s32.totalorder %s17, 0
    %p98 = por %p96, %p97
    %s100 = sadd.s32 %s99, 1
    %p103 = scmp.eq.s32.totalorder %s11, 3
    %p104 = scmp.ne.s32.totalorder %s99, %s101
    %p105 = scmp.eq.s32.totalorder %s11, 0
    %p106 = por %p104, %p105
    %p107 = scmp.ne.s32.totalorder %s99, %s101
    %p108 = scmp.eq.s32.totalorder %s16, 3
    %p109 = por %p107, %p108
    %p110 = scmp.ne.s32.totalorder %s101, %s102
    %p111 = scmp.eq.s32.totalorder %s16, 0
    %p112 = por %p110, %p111
    %p113 = scmp.ne.s32.totalorder %s101, %s102
    %p114 = scmp.eq.s32.totalorder %s17, 3
    %p115 = por %p113, %p114
    %p117 = scmp.ne.s32.totalorder %s102, %s116
    %p118 = scmp.eq.s32.totalorder %s17, 0
    %p119 = por %p117, %p118
    %s121 = sadd.s32 %s120, 1
    %p124 = scmp.eq.s32.totalorder %s11, 3
    %p125 = scmp.ne.s32.totalorder %s120, %s122
    %p126 = scmp.eq.s32.totalorder %s11, 0
    %p127 = por %p125, %p126
    %p128 = scmp.ne.s32.totalorder %s120, %s122
    %p129 = scmp.eq.s32.totalorder %s16, 3
    %p130 = por %p128, %p129
    %p131 = scmp.ne.s32.totalorder %s122, %s123
    %p132 = scmp.eq.s32.totalorder %s16, 0
    %p133 = por %p131, %p132
    %p134 = scmp.ne.s32.totalorder %s122, %s123
    %p135 = scmp.eq.s32.totalorder %s17, 3
    %p136 = por %p134, %p135
    %p138 = scmp.ne.s32.totalorder %s123, %s137
    %p139 = scmp.eq.s32.totalorder %s17, 0
    %p140 = por %p138, %p139
    %s141 = ssub.s32 %s18, %s30
    %s142 = ssub.s32 %s19, %s26
    %s143 = sor.u32 %s141, %s142
    %p144 = scmp.eq.s32.totalorder %s143, 0
    %s146 = sadd.s32 %s145, 1
    %s147 = scalar_select %p144, %s145, %s146
    %p150 = pneg %p144
    %p151 = scmp.eq.s32.totalorder %s11, 3
    %p152 = por %p150, %p151
    %p153 = scmp.ne.s32.totalorder %s145, %s148
    %p154 = scmp.eq.s32.totalorder %s11, 0
    %p155 = por %p153, %p154
    %p156 = scmp.ne.s32.totalorder %s145, %s148
    %p157 = scmp.eq.s32.totalorder %s16, 3
    %p158 = por %p156, %p157
    %p159 = scmp.ne.s32.totalorder %s148, %s149
    %p160 = scmp.eq.s32.totalorder %s16, 0
    %p161 = por %p159, %p160
    %p162 = scmp.ne.s32.totalorder %s148, %s149
    %p163 = scmp.eq.s32.totalorder %s17, 3
    %p164 = por %p162, %p163
    %p166 = scmp.ne.s32.totalorder %s149, %s165
    %p167 = scmp.eq.s32.totalorder %s17, 0
    %p168 = por %p166, %p167
    %p169 = scmp.le.s32.totalorder 1, %s11
    %p170 = scmp.lt.s32.totalorder %s11, 5
    %p171 = pnand %p169, %p170
    %p172 = pneg %p171
    // Predicated region
    $region9: #{tpu_custom_call.1} parent=5 // pred_check
      _
    $region10: #{tpu_custom_call.1} parent=5 // pred_check_branch
      %174 = sbr.rel (%p171) target = $region12
    $region11: #{tpu_custom_call.1} parent=5 // pred_region
      %s175 = ssub.s32 %s11, 1
      // Predicated region
      $region13: #{tpu_custom_call.1} parent=11 // pred_check
        %p176 = pneg %p70
      $region14: #{tpu_custom_call.1} parent=11 // pred_check_branch
        %178 = sbr.rel (%p176) target = $region16
      $region15: #{tpu_custom_call.1} parent=11 // pred_region
        _
      $region16: #{tpu_custom_call.1} parent=11 // pred_fallthru
        _
      // Predicated region
      $region17: #{tpu_custom_call.1} parent=11 // pred_check
        %p179 = pneg %p91
      $region18: #{tpu_custom_call.1} parent=11 // pred_check_branch
        %181 = sbr.rel (%p179) target = $region20
      $region19: #{tpu_custom_call.1} parent=11 // pred_region
        _
      $region20: #{tpu_custom_call.1} parent=11 // pred_fallthru
        _
      // Predicated region
      $region21: #{tpu_custom_call.1} parent=11 // pred_check
        %p182 = pneg %p112
      $region22: #{tpu_custom_call.1} parent=11 // pred_check_branch
        %184 = sbr.rel (%p182) target = $region24
      $region23: #{tpu_custom_call.1} parent=11 // pred_region
        _
      $region24: #{tpu_custom_call.1} parent=11 // pred_fallthru
        _
      // Predicated region
      $region25: #{tpu_custom_call.1} parent=11 // pred_check
        %p185 = pneg %p133
      $region26: #{tpu_custom_call.1} parent=11 // pred_check_branch
        %187 = sbr.rel (%p185) target = $region28
      $region27: #{tpu_custom_call.1} parent=11 // pred_region
        _
      $region28: #{tpu_custom_call.1} parent=11 // pred_fallthru
        _
    $region12: #{tpu_custom_call.1} parent=5 // pred_fallthru
      _
    %p188 = scmp.lt.s32.totalorder %s11, 4
    // Predicated region
    $region29: #{tpu_custom_call.1} parent=5 // pred_check
      %p189 = pneg %p188
    $region30: #{tpu_custom_call.1} parent=5 // pred_check_branch
      %191 = sbr.rel (%p189) target = $region32
    $region31: #{tpu_custom_call.1} parent=5 // pred_region
      // Predicated region
      $region33: #{tpu_custom_call.1} parent=31 // pred_check
        %p192 = pneg %p43
      $region34: #{tpu_custom_call.1} parent=31 // pred_check_branch
        %194 = sbr.rel (%p192) target = $region36
      $region35: #{tpu_custom_call.1} parent=31 // pred_region
        %p195 = scmp.lt.s32.totalorder %s18, 1
        %s196 = scalar_select %p195, %s18, 1
        %s197 = smul.addr %s196, 32
        %s198 = smul.addr %s197, 8
        %s199 = scalar_lea.vmem %s0, %s198
      $region36: #{tpu_custom_call.1} parent=31 // pred_fallthru
        _
    $region32: #{tpu_custom_call.1} parent=5 // pred_fallthru
      _
    %p200 = scmp.le.s32.totalorder 1, %s11
    %p201 = scmp.lt.s32.totalorder %s11, 5
    %p202 = pnand %p200, %p201
    %p203 = pneg %p202
    // Predicated region
    $region37: #{tpu_custom_call.1} parent=5 // pred_check
      _
    $region38: #{tpu_custom_call.1} parent=5 // pred_check_branch
      %205 = sbr.rel (%p202) target = $region40
    $region39: #{tpu_custom_call.1} parent=5 // pred_region
      %s206 = ssub.s32 %s11, 1
      %p207 = scmp.lt.s32.totalorder %s20, 1
      %s208 = scalar_select %p207, %s20, 1
      %s209 = smul.addr %s208, 32
      %s210 = smul.addr %s209, 8
      %s211 = scalar_lea.vmem %s0, %s210
      %p212 = pneg %p49
      %p213 = pneg %p46
      %p214 = pneg %p70
      %p215 = pneg %p67
      %p216 = pneg %p91
      %p217 = pneg %p88
      %p218 = pneg %p112
      %p219 = pneg %p109
      %p220 = pneg %p133
      %p221 = pneg %p130
      %p222 = pneg %p161
      %p223 = pneg %p158
      %s224 = smul.u32 8, %s21
      %p225 = scmp.lt.s32.totalorder %s20, 1
      %s226 = scalar_select %p225, %s20, 1
      %p227 = scmp.lt.s32.totalorder %s224, 15
      %s228 = scalar_select %p227, %s224, 15
      %s229 = smul.addr %s228, 2
      %s230 = smul.addr %s226, 32
      %s231 = sadd.s32 %s229, %s230
      %s232 = smul.addr %s231, 4
      %s233 = scalar_lea.vmem %s5, %s232
      %p234 = scmp.lt.s32.totalorder %s20, 1
      %s235 = scalar_select %p234, %s20, 1
      %s236 = smul.addr %s235, 32
      %s237 = smul.addr %s236, 8
      %s238 = scalar_lea.vmem %s0, %s237
      %s239 = smul.u32 8, %s21
      %p240 = scmp.lt.s32.totalorder %s20, 1
      %s241 = scalar_select %p240, %s20, 1
      %p242 = scmp.lt.s32.totalorder %s239, 15
      %s243 = scalar_select %p242, %s239, 15
      %s244 = smul.addr %s243, 2
      %s245 = smul.addr %s241, 32
      %s246 = sadd.s32 %s244, %s245
      %s247 = smul.addr %s246, 4
      %s248 = scalar_lea.vmem %s5, %s247
      %s249 = smul.u32 8, %s21
      %s251 = smul.u32 %s21, 8
      %s252 = smul.u32 %s251, 16
      %s253 = scalar_lea.vmem %s238, %s252
      %v254 = vld [vmem:[%s253] sm:$0xff]
      %v255 = vld [vmem:[%s253 + $0x8] sm:$0xff]
      %v256 = vld [vmem:[%s253 + $0x10] sm:$0xff]
      %v257 = vld [vmem:[%s253 + $0x18] sm:$0xff]
      %v258 = vld [vmem:[%s253 + $0x20] sm:$0xff]
      %v259 = vld [vmem:[%s253 + $0x28] sm:$0xff]
      %v260 = vld [vmem:[%s253 + $0x30] sm:$0xff]
      %v261 = vld [vmem:[%s253 + $0x38] sm:$0xff]
      %v262 = vld [vmem:[%s253 + $0x40] sm:$0xff]
      %v263 = vld [vmem:[%s253 + $0x48] sm:$0xff]
      %v264 = vld [vmem:[%s253 + $0x50] sm:$0xff]
      %v265 = vld [vmem:[%s253 + $0x58] sm:$0xff]
      %v266 = vld [vmem:[%s253 + $0x60] sm:$0xff]
      %v267 = vld [vmem:[%s253 + $0x68] sm:$0xff]
      %v268 = vld [vmem:[%s253 + $0x70] sm:$0xff]
      %v269 = vld [vmem:[%s253 + $0x78] sm:$0xff]
      %vm270 = vcmask 24576
      %vm271 = vsmask.f32 256
      %vm272 = vmand %vm270, %vm271
      %v273 = vld [vmem:[#allocation2] sm:$0x1]
      %v274 = vsel %vm272, 0, %v273
      %275 = vst [vmem:[#allocation2] sm:$0x1] %v274
      %v276 = vld [vmem:[#allocation2 + $0xc] sm:$0x1]
      %v277 = vsel %vm272, 0, %v276
      %278 = vst [vmem:[#allocation2 + $0xc] sm:$0x1] %v277
      %v279 = vld [vmem:[#allocation2 + $0x18] sm:$0x1]
      %v280 = vsel %vm272, 0, %v279
      %281 = vst [vmem:[#allocation2 + $0x18] sm:$0x1] %v280
      %v282 = vld [vmem:[#allocation2 + $0x24] sm:$0x1]
      %v283 = vsel %vm272, 0, %v282
      %284 = vst [vmem:[#allocation2 + $0x24] sm:$0x1] %v283
      %v285 = vld [vmem:[#allocation2 + $0x30] sm:$0x1]
      %v286 = vsel %vm272, 0, %v285
      %287 = vst [vmem:[#allocation2 + $0x30] sm:$0x1] %v286
      %v288 = vld [vmem:[#allocation2 + $0x3c] sm:$0x1]
      %v289 = vsel %vm272, 0, %v288
      %290 = vst [vmem:[#allocation2 + $0x3c] sm:$0x1] %v289
      %v291 = vld [vmem:[#allocation2 + $0x48] sm:$0x1]
      %v292 = vsel %vm272, 0, %v291
      %293 = vst [vmem:[#allocation2 + $0x48] sm:$0x1] %v292
      %v294 = vld [vmem:[#allocation2 + $0x54] sm:$0x1]
      %v295 = vsel %vm272, 0, %v294
      %296 = vst [vmem:[#allocation2 + $0x54] sm:$0x1] %v295
      %v297 = vld [vmem:[#allocation2 + $0x60] sm:$0x1]
      %v298 = vsel %vm272, 0, %v297
      %299 = vst [vmem:[#allocation2 + $0x60] sm:$0x1] %v298
      %v300 = vld [vmem:[#allocation2 + $0x6c] sm:$0x1]
      %v301 = vsel %vm272, 0, %v300
      %302 = vst [vmem:[#allocation2 + $0x6c] sm:$0x1] %v301
      %v303 = vld [vmem:[#allocation2 + $0x78] sm:$0x1]
      %v304 = vsel %vm272, 0, %v303
      %305 = vst [vmem:[#allocation2 + $0x78] sm:$0x1] %v304
      %v306 = vld [vmem:[#allocation2 + $0x84] sm:$0x1]
      %v307 = vsel %vm272, 0, %v306
      %308 = vst [vmem:[#allocation2 + $0x84] sm:$0x1] %v307
      %vm309 = vsmask.f32 7938
      %vm310 = vmand %vm270, %vm309
      %v311 = vld [vmem:[#allocation2 + $0x8] sm:$0x1]
      %v312 = vsel %vm310, 0, %v311
      %313 = vst [vmem:[#allocation2 + $0x8] sm:$0x1] %v312
      %v314 = vld [vmem:[#allocation2 + $0x14] sm:$0x1]
      %v315 = vsel %vm310, 0, %v314
      %316 = vst [vmem:[#allocation2 + $0x14] sm:$0x1] %v315
      %v317 = vld [vmem:[#allocation2 + $0x20] sm:$0x1]
      %v318 = vsel %vm310, 0, %v317
      %319 = vst [vmem:[#allocation2 + $0x20] sm:$0x1] %v318
      %v320 = vld [vmem:[#allocation2 + $0x2c] sm:$0x1]
      %v321 = vsel %vm310, 0, %v320
      %322 = vst [vmem:[#allocation2 + $0x2c] sm:$0x1] %v321
      %v323 = vld [vmem:[#allocation2 + $0x38] sm:$0x1]
      %v324 = vsel %vm310, 0, %v323
      %325 = vst [vmem:[#allocation2 + $0x38] sm:$0x1] %v324
      %v326 = vld [vmem:[#allocation2 + $0x44] sm:$0x1]
      %v327 = vsel %vm310, 0, %v326
      %328 = vst [vmem:[#allocation2 + $0x44] sm:$0x1] %v327
      %v329 = vld [vmem:[#allocation2 + $0x50] sm:$0x1]
      %v330 = vsel %vm310, 0, %v329
      %331 = vst [vmem:[#allocation2 + $0x50] sm:$0x1] %v330
      %v332 = vld [vmem:[#allocation2 + $0x5c] sm:$0x1]
      %v333 = vsel %vm310, 0, %v332
      %334 = vst [vmem:[#allocation2 + $0x5c] sm:$0x1] %v333
      %v335 = vld [vmem:[#allocation2 + $0x68] sm:$0x1]
      %v336 = vsel %vm310, 0, %v335
      %337 = vst [vmem:[#allocation2 + $0x68] sm:$0x1] %v336
      %v338 = vld [vmem:[#allocation2 + $0x74] sm:$0x1]
      %v339 = vsel %vm310, 0, %v338
      %340 = vst [vmem:[#allocation2 + $0x74] sm:$0x1] %v339
      %v341 = vld [vmem:[#allocation2 + $0x80] sm:$0x1]
      %v342 = vsel %vm310, 0, %v341
      %343 = vst [vmem:[#allocation2 + $0x80] sm:$0x1] %v342
      %v344 = vld [vmem:[#allocation2 + $0x8c] sm:$0x1]
      %v345 = vsel %vm310, 0, %v344
      %346 = vst [vmem:[#allocation2 + $0x8c] sm:$0x1] %v345
      %v347 = vpack.c.bf16 %v255, %v254
      %v348 = vpack.c.bf16 %v257, %v256
      %v349 = vpack.c.bf16 %v259, %v258
      %v350 = vpack.c.bf16 %v261, %v260
      %v351 = vpack.c.bf16 %v263, %v262
      %v352 = vpack.c.bf16 %v265, %v264
      %v353 = vpack.c.bf16 %v267, %v266
      %v354 = vpack.c.bf16 %v269, %v268
      %v363 = vunpack.c.l.b16 %v347
      %v364 = vunpack.c.h.b16 %v347
      %v365 = vunpack.c.l.b16 %v348
      %v366 = vunpack.c.h.b16 %v348
      %v367 = vunpack.c.l.b16 %v349
      %v368 = vunpack.c.h.b16 %v349
      %v369 = vunpack.c.l.b16 %v350
      %v370 = vunpack.c.h.b16 %v350
      %v371 = vunpack.c.l.b16 %v351
      %v372 = vunpack.c.h.b16 %v351
      %v373 = vunpack.c.l.b16 %v352
      %v374 = vunpack.c.h.b16 %v352
      %v375 = vunpack.c.l.b16 %v353
      %v376 = vunpack.c.h.b16 %v353
      %v377 = vunpack.c.l.b16 %v354
      %v378 = vunpack.c.h.b16 %v354
      %v379 = vpack.c.b16 %v363, %v363
      %v380 = vpack.c.b16 %v364, %v364
      %v381 = vpack.c.b16 %v365, %v365
      %v382 = vpack.c.b16 %v366, %v366
      %v383 = vpack.c.b16 %v367, %v367
      %v384 = vpack.c.b16 %v368, %v368
      %v385 = vpack.c.b16 %v369, %v369
      %v386 = vpack.c.b16 %v370, %v370
      %v387 = vpack.c.b16 %v371, %v371
      %v388 = vpack.c.b16 %v372, %v372
      %v389 = vpack.c.b16 %v373, %v373
      %v390 = vpack.c.b16 %v374, %v374
      %v391 = vpack.c.b16 %v375, %v375
      %v392 = vpack.c.b16 %v376, %v376
      %v393 = vpack.c.b16 %v377, %v377
      %v394 = vpack.c.b16 %v378, %v378
      %vm395 = vsmask.f32 4368
      %vm396 = vmor %vm271, %vm395
      %v398 = vshrl.u32 %v379, 16
      %v400 = vrot.slane %v398, 7
      %v401 = vshll.u32 %v379, 16
      %v403 = vor.u32 %v400, %v401
      %v404 = vrot.slane %v400, 4
      %v406 = vshrl.u32 %v380, 16
      %v408 = vrot.slane %v406, 7
      %v409 = vshll.u32 %v380, 16
      %v411 = vor.u32 %v408, %v409
      %v412 = vsel %vm396, %v404, %v411
      %v413 = vrot.slane %v408, 4
      %v415 = vshrl.u32 %v381, 16
      %v417 = vrot.slane %v415, 7
      %v418 = vshll.u32 %v381, 16
      %v420 = vor.u32 %v417, %v418
      %v421 = vrot.slane %v417, 4
      %v423 = vshrl.u32 %v382, 16
      %v425 = vrot.slane %v423, 7
      %v426 = vshll.u32 %v382, 16
      %v428 = vor.u32 %v425, %v426
      %v429 = vsel %vm396, %v421, %v428
      %v430 = vrot.slane %v425, 4
      %v432 = vshrl.u32 %v383, 16
      %v434 = vrot.slane %v432, 7
      %v435 = vshll.u32 %v383, 16
      %v437 = vor.u32 %v434, %v435
      %v438 = vrot.slane %v434, 4
      %v440 = vshrl.u32 %v384, 16
      %v442 = vrot.slane %v440, 7
      %v443 = vshll.u32 %v384, 16
      %v445 = vor.u32 %v442, %v443
      %v446 = vsel %vm396, %v438, %v445
      %v447 = vrot.slane %v442, 4
      %v449 = vshrl.u32 %v385, 16
      %v451 = vrot.slane %v449, 7
      %v452 = vshll.u32 %v385, 16
      %v454 = vor.u32 %v451, %v452
      %v455 = vrot.slane %v451, 4
      %v457 = vshrl.u32 %v386, 16
      %v459 = vrot.slane %v457, 7
      %v460 = vshll.u32 %v386, 16
      %v462 = vor.u32 %v459, %v460
      %v463 = vsel %vm396, %v455, %v462
      %v464 = vrot.slane %v459, 4
      %v466 = vshrl.u32 %v387, 16
      %v468 = vrot.slane %v466, 7
      %v469 = vshll.u32 %v387, 16
      %v471 = vor.u32 %v468, %v469
      %v472 = vrot.slane %v468, 4
      %v474 = vshrl.u32 %v388, 16
      %v476 = vrot.slane %v474, 7
      %v477 = vshll.u32 %v388, 16
      %v479 = vor.u32 %v476, %v477
      %v480 = vsel %vm396, %v472, %v479
      %v481 = vrot.slane %v476, 4
      %v483 = vshrl.u32 %v389, 16
      %v485 = vrot.slane %v483, 7
      %v486 = vshll.u32 %v389, 16
      %v488 = vor.u32 %v485, %v486
      %v489 = vrot.slane %v485, 4
      %v491 = vshrl.u32 %v390, 16
      %v493 = vrot.slane %v491, 7
      %v494 = vshll.u32 %v390, 16
      %v496 = vor.u32 %v493, %v494
      %v497 = vsel %vm396, %v489, %v496
      %v498 = vrot.slane %v493, 4
      %v500 = vshrl.u32 %v391, 16
      %v502 = vrot.slane %v500, 7
      %v503 = vshll.u32 %v391, 16
      %v505 = vor.u32 %v502, %v503
      %v506 = vrot.slane %v502, 4
      %v508 = vshrl.u32 %v392, 16
      %v510 = vrot.slane %v508, 7
      %v511 = vshll.u32 %v392, 16
      %v513 = vor.u32 %v510, %v511
      %v514 = vsel %vm396, %v506, %v513
      %v515 = vrot.slane %v510, 4
      %v517 = vshrl.u32 %v393, 16
      %v519 = vrot.slane %v517, 7
      %v520 = vshll.u32 %v393, 16
      %v522 = vor.u32 %v519, %v520
      %v523 = vrot.slane %v519, 4
      %v525 = vshrl.u32 %v394, 16
      %v527 = vrot.slane %v525, 7
      %v528 = vshll.u32 %v394, 16
      %v530 = vor.u32 %v527, %v528
      %v531 = vsel %vm396, %v523, %v530
      %v532 = vrot.slane %v527, 4
      %s557 = scalar_lea.vmem [#allocation2], 24
      %vm558 = vcmask 27648
      %vm559 = vmand %vm558, %vm309
      %v560 = vld [vmem:[%s557] sm:$0xf]
      %v561 = vsel %vm559, %v403, %v560
      %562 = vst [vmem:[%s557] sm:$0xf] %v561
      %vm563 = vcmask 27648
      %564 = vst.msk [vmem:[%s557 + $0x4] sm:$0xf] %vm563, %v412
      %v565 = vld [vmem:[%s557 + $0x8] sm:$0x1]
      %v566 = vsel %vm272, %v413, %v565
      %567 = vst [vmem:[%s557 + $0x8] sm:$0x1] %v566
      %v568 = vld [vmem:[%s557 + $0xc] sm:$0xf]
      %v569 = vsel %vm559, %v420, %v568
      %570 = vst [vmem:[%s557 + $0xc] sm:$0xf] %v569
      %571 = vst.msk [vmem:[%s557 + $0x10] sm:$0xf] %vm563, %v429
      %v572 = vld [vmem:[%s557 + $0x14] sm:$0x1]
      %v573 = vsel %vm272, %v430, %v572
      %574 = vst [vmem:[%s557 + $0x14] sm:$0x1] %v573
      %v575 = vld [vmem:[%s557 + $0x18] sm:$0xf]
      %v576 = vsel %vm559, %v437, %v575
      %577 = vst [vmem:[%s557 + $0x18] sm:$0xf] %v576
      %578 = vst.msk [vmem:[%s557 + $0x1c] sm:$0xf] %vm563, %v446
      %v579 = vld [vmem:[%s557 + $0x20] sm:$0x1]
      %v580 = vsel %vm272, %v447, %v579
      %581 = vst [vmem:[%s557 + $0x20] sm:$0x1] %v580
      %v582 = vld [vmem:[%s557 + $0x24] sm:$0xf]
      %v583 = vsel %vm559, %v454, %v582
      %584 = vst [vmem:[%s557 + $0x24] sm:$0xf] %v583
      %585 = vst.msk [vmem:[%s557 + $0x28] sm:$0xf] %vm563, %v463
      %v586 = vld [vmem:[%s557 + $0x2c] sm:$0x1]
      %v587 = vsel %vm272, %v464, %v586
      %588 = vst [vmem:[%s557 + $0x2c] sm:$0x1] %v587
      %v589 = vld [vmem:[%s557 + $0x30] sm:$0xf]
      %v590 = vsel %vm559, %v471, %v589
      %591 = vst [vmem:[%s557 + $0x30] sm:$0xf] %v590
      %592 = vst.msk [vmem:[%s557 + $0x34] sm:$0xf] %vm563, %v480
      %v593 = vld [vmem:[%s557 + $0x38] sm:$0x1]
      %v594 = vsel %vm272, %v481, %v593
      %595 = vst [vmem:[%s557 + $0x38] sm:$0x1] %v594
      %v596 = vld [vmem:[%s557 + $0x3c] sm:$0xf]
      %v597 = vsel %vm559, %v488, %v596
      %598 = vst [vmem:[%s557 + $0x3c] sm:$0xf] %v597
      %599 = vst.msk [vmem:[%s557 + $0x40] sm:$0xf] %vm563, %v497
      %v600 = vld [vmem:[%s557 + $0x44] sm:$0x1]
      %v601 = vsel %vm272, %v498, %v600
      %602 = vst [vmem:[%s557 + $0x44] sm:$0x1] %v601
      %v603 = vld [vmem:[%s557 + $0x48] sm:$0xf]
      %v604 = vsel %vm559, %v505, %v603
      %605 = vst [vmem:[%s557 + $0x48] sm:$0xf] %v604
      %606 = vst.msk [vmem:[%s557 + $0x4c] sm:$0xf] %vm563, %v514
      %v607 = vld [vmem:[%s557 + $0x50] sm:$0x1]
      %v608 = vsel %vm272, %v515, %v607
      %609 = vst [vmem:[%s557 + $0x50] sm:$0x1] %v608
      %v610 = vld [vmem:[%s557 + $0x54] sm:$0xf]
      %v611 = vsel %vm559, %v522, %v610
      %612 = vst [vmem:[%s557 + $0x54] sm:$0xf] %v611
      %613 = vst.msk [vmem:[%s557 + $0x58] sm:$0xf] %vm563, %v531
      %v614 = vld [vmem:[%s557 + $0x5c] sm:$0x1]
      %v615 = vsel %vm272, %v532, %v614
      %616 = vst [vmem:[%s557 + $0x5c] sm:$0x1] %v615
      %p617 = scmp.gt.s32.totalorder %s21, 0
      // Predicated region
      $region41: #{tpu_custom_call.1} parent=39 // pred_check
        %p618 = pneg %p617
      $region42: #{tpu_custom_call.1} parent=39 // pred_check_branch
        %620 = sbr.rel (%p618) target = $region44
      $region43: #{tpu_custom_call.1} parent=39 // pred_region
        %s621 = ssub.s32 %s251, 2
        %s622 = smul.u32 %s621, 16
        %s623 = scalar_lea.vmem %s238, %s622
        %v624 = vld [vmem:[%s623] sm:$0xff]
        %v625 = vld [vmem:[%s623 + $0x8] sm:$0xff]
        %v626 = vld [vmem:[%s623 + $0x10] sm:$0xff]
        %v627 = vld [vmem:[%s623 + $0x18] sm:$0xff]
        %v628 = vpack.c.bf16 %v625, %v624
        %v629 = vpack.c.bf16 %v627, %v626
        %v632 = vunpack.c.l.b16 %v628
        %v633 = vunpack.c.h.b16 %v628
        %v634 = vunpack.c.l.b16 %v629
        %v635 = vunpack.c.h.b16 %v629
        %v636 = vpack.c.b16 %v632, %v632
        %v637 = vpack.c.b16 %v633, %v633
        %v638 = vpack.c.b16 %v634, %v634
        %v639 = vpack.c.b16 %v635, %v635
        %v641 = vshrl.u32 %v636, 16
        %v643 = vrot.slane %v641, 7
        %v644 = vshll.u32 %v636, 16
        %v646 = vor.u32 %v643, %v644
        %v647 = vrot.slane %v643, 4
        %v649 = vshrl.u32 %v637, 16
        %v651 = vrot.slane %v649, 7
        %v652 = vshll.u32 %v637, 16
        %v654 = vor.u32 %v651, %v652
        %v655 = vsel %vm396, %v647, %v654
        %v656 = vrot.slane %v651, 4
        %v658 = vshrl.u32 %v638, 16
        %v660 = vrot.slane %v658, 7
        %v661 = vshll.u32 %v638, 16
        %v663 = vor.u32 %v660, %v661
        %v664 = vrot.slane %v660, 4
        %v666 = vshrl.u32 %v639, 16
        %v668 = vrot.slane %v666, 7
        %v669 = vshll.u32 %v639, 16
        %v671 = vor.u32 %v668, %v669
        %v672 = vsel %vm396, %v664, %v671
        %v673 = vrot.slane %v668, 4
        %v680 = vld [vmem:[#allocation2] sm:$0xf]
        %v681 = vsel %vm559, %v646, %v680
        %682 = vst [vmem:[#allocation2] sm:$0xf] %v681
        %683 = vst.msk [vmem:[#allocation2 + $0x4] sm:$0xf] %vm563, %v655
        %v684 = vld [vmem:[#allocation2 + $0x8] sm:$0x1]
        %v685 = vsel %vm272, %v656, %v684
        %686 = vst [vmem:[#allocation2 + $0x8] sm:$0x1] %v685
        %v687 = vld [vmem:[#allocation2 + $0xc] sm:$0xf]
        %v688 = vsel %vm559, %v663, %v687
        %689 = vst [vmem:[#allocation2 + $0xc] sm:$0xf] %v688
        %690 = vst.msk [vmem:[#allocation2 + $0x10] sm:$0xf] %vm563, %v672
        %v691 = vld [vmem:[#allocation2 + $0x14] sm:$0x1]
        %v692 = vsel %vm272, %v673, %v691
        %693 = vst [vmem:[#allocation2 + $0x14] sm:$0x1] %v692
      $region44: #{tpu_custom_call.1} parent=39 // pred_fallthru
        _
      %p694 = scmp.eq.s32.totalorder %s21, 0
      // Predicated region
      $region45: #{tpu_custom_call.1} parent=39 // pred_check
        %p695 = pneg %p694
      $region46: #{tpu_custom_call.1} parent=39 // pred_check_branch
        %697 = sbr.rel (%p695) target = $region48
      $region47: #{tpu_custom_call.1} parent=39 // pred_region
        %698 = vst.msk [vmem:[#allocation2] sm:$0xf] %vm563, 0
        %699 = vst.msk [vmem:[#allocation2 + $0x4] sm:$0xf] %vm563, 0
        %vm700 = vcmask 24576
        %701 = vst.msk [vmem:[#allocation2 + $0x8] sm:$0x1] %vm700, 0
        %702 = vst.msk [vmem:[#allocation2 + $0xc] sm:$0xf] %vm563, 0
        %703 = vst.msk [vmem:[#allocation2 + $0x10] sm:$0xf] %vm563, 0
        %704 = vst.msk [vmem:[#allocation2 + $0x14] sm:$0x1] %vm700, 0
      $region48: #{tpu_custom_call.1} parent=39 // pred_fallthru
        _
      %p705 = scmp.lt.s32.totalorder %s21, 1
      // Predicated region
      $region49: #{tpu_custom_call.1} parent=39 // pred_check
        %p706 = pneg %p705
      $region50: #{tpu_custom_call.1} parent=39 // pred_check_branch
        %708 = sbr.rel (%p706) target = $region52
      $region51: #{tpu_custom_call.1} parent=39 // pred_region
        %s709 = sadd.s32 %s251, 8
        %s710 = smul.u32 %s709, 16
        %s711 = scalar_lea.vmem %s238, %s710
        %v712 = vld [vmem:[%s711] sm:$0xff]
        %v713 = vld [vmem:[%s711 + $0x8] sm:$0xff]
        %v714 = vld [vmem:[%s711 + $0x10] sm:$0xff]
        %v715 = vld [vmem:[%s711 + $0x18] sm:$0xff]
        %v716 = vpack.c.bf16 %v713, %v712
        %v717 = vpack.c.bf16 %v715, %v714
        %v720 = vunpack.c.l.b16 %v716
        %v721 = vunpack.c.h.b16 %v716
        %v722 = vunpack.c.l.b16 %v717
        %v723 = vunpack.c.h.b16 %v717
        %v724 = vpack.c.b16 %v720, %v720
        %v725 = vpack.c.b16 %v721, %v721
        %v726 = vpack.c.b16 %v722, %v722
        %v727 = vpack.c.b16 %v723, %v723
        %v729 = vshrl.u32 %v724, 16
        %v731 = vrot.slane %v729, 7
        %v732 = vshll.u32 %v724, 16
        %v734 = vor.u32 %v731, %v732
        %v735 = vrot.slane %v731, 4
        %v737 = vshrl.u32 %v725, 16
        %v739 = vrot.slane %v737, 7
        %v740 = vshll.u32 %v725, 16
        %v742 = vor.u32 %v739, %v740
        %v743 = vsel %vm396, %v735, %v742
        %v744 = vrot.slane %v739, 4
        %v746 = vshrl.u32 %v726, 16
        %v748 = vrot.slane %v746, 7
        %v749 = vshll.u32 %v726, 16
        %v751 = vor.u32 %v748, %v749
        %v752 = vrot.slane %v748, 4
        %v754 = vshrl.u32 %v727, 16
        %v756 = vrot.slane %v754, 7
        %v757 = vshll.u32 %v727, 16
        %v759 = vor.u32 %v756, %v757
        %v760 = vsel %vm396, %v752, %v759
        %v761 = vrot.slane %v756, 4
        %s768 = scalar_lea.vmem [#allocation2], 120
        %v769 = vld [vmem:[%s768] sm:$0xf]
        %v770 = vsel %vm559, %v734, %v769
        %771 = vst [vmem:[%s768] sm:$0xf] %v770
        %772 = vst.msk [vmem:[%s768 + $0x4] sm:$0xf] %vm563, %v743
        %v773 = vld [vmem:[%s768 + $0x8] sm:$0x1]
        %v774 = vsel %vm272, %v744, %v773
        %775 = vst [vmem:[%s768 + $0x8] sm:$0x1] %v774
        %v776 = vld [vmem:[%s768 + $0xc] sm:$0xf]
        %v777 = vsel %vm559, %v751, %v776
        %778 = vst [vmem:[%s768 + $0xc] sm:$0xf] %v777
        %779 = vst.msk [vmem:[%s768 + $0x10] sm:$0xf] %vm563, %v760
        %v780 = vld [vmem:[%s768 + $0x14] sm:$0x1]
        %v781 = vsel %vm272, %v761, %v780
        %782 = vst [vmem:[%s768 + $0x14] sm:$0x1] %v781
      $region52: #{tpu_custom_call.1} parent=39 // pred_fallthru
        _
      %p783 = scmp.eq.s32.totalorder %s21, 1
      // Predicated region
      $region53: #{tpu_custom_call.1} parent=39 // pred_check
        %p784 = pneg %p783
      $region54: #{tpu_custom_call.1} parent=39 // pred_check_branch
        %786 = sbr.rel (%p784) target = $region56
      $region55: #{tpu_custom_call.1} parent=39 // pred_region
        %s787 = scalar_lea.vmem [#allocation2], 120
        %788 = vst.msk [vmem:[%s787] sm:$0xf] %vm563, 0
        %789 = vst.msk [vmem:[%s787 + $0x4] sm:$0xf] %vm563, 0
        %vm790 = vcmask 24576
        %791 = vst.msk [vmem:[%s787 + $0x8] sm:$0x1] %vm790, 0
        %792 = vst.msk [vmem:[%s787 + $0xc] sm:$0xf] %vm563, 0
        %793 = vst.msk [vmem:[%s787 + $0x10] sm:$0xf] %vm563, 0
        %794 = vst.msk [vmem:[%s787 + $0x14] sm:$0x1] %vm790, 0
      $region56: #{tpu_custom_call.1} parent=39 // pred_fallthru
        _
      %v795 = vld [vmem:[#allocation2] sm:$0xf]
      %v796 = vld [vmem:[#allocation2 + $0x4] sm:$0xf]
      %v797 = vld [vmem:[#allocation2 + $0xc] sm:$0xf]
      %v798 = vld [vmem:[#allocation2 + $0x10] sm:$0xf]
      %v799 = vld [vmem:[#allocation2 + $0x18] sm:$0xf]
      %v800 = vld [vmem:[#allocation2 + $0x1c] sm:$0xf]
      %v801 = vld [vmem:[#allocation2 + $0x24] sm:$0xf]
      %v802 = vld [vmem:[#allocation2 + $0x28] sm:$0xf]
      %v803 = vld [vmem:[#allocation2 + $0x30] sm:$0xf]
      %v804 = vld [vmem:[#allocation2 + $0x34] sm:$0xf]
      %v805 = vld [vmem:[#allocation2 + $0x3c] sm:$0xf]
      %v806 = vld [vmem:[#allocation2 + $0x40] sm:$0xf]
      %v807 = vld [vmem:[#allocation2 + $0x48] sm:$0xf]
      %v808 = vld [vmem:[#allocation2 + $0x4c] sm:$0xf]
      %v809 = vld [vmem:[#allocation2 + $0x54] sm:$0xf]
      %v810 = vld [vmem:[#allocation2 + $0x58] sm:$0xf]
      %v811 = vld [vmem:[#allocation2 + $0x60] sm:$0xf]
      %v812 = vld [vmem:[#allocation2 + $0x64] sm:$0xf]
      %v813 = vld [vmem:[#allocation2 + $0x6c] sm:$0xf]
      %v814 = vld [vmem:[#allocation2 + $0x70] sm:$0xf]
      %v815 = vld [vmem:[%s1] sm:$0x3]
      %v816 = vld [vmem:[#allocation2 + $0x8] sm:$0x1]
      %v817 = vld [vmem:[#allocation2 + $0x14] sm:$0x1]
      %v818 = vld [vmem:[#allocation2 + $0x20] sm:$0x1]
      %v819 = vld [vmem:[#allocation2 + $0x2c] sm:$0x1]
      %v820 = vld [vmem:[#allocation2 + $0x38] sm:$0x1]
      %v821 = vld [vmem:[#allocation2 + $0x44] sm:$0x1]
      %v822 = vld [vmem:[#allocation2 + $0x50] sm:$0x1]
      %v823 = vld [vmem:[#allocation2 + $0x5c] sm:$0x1]
      %v824 = vld [vmem:[#allocation2 + $0x68] sm:$0x1]
      %v825 = vld [vmem:[#allocation2 + $0x74] sm:$0x1]
      %vm826 = vsmask.f32 3328
      %vm827 = vsmask.f32 7440
      %vm828 = vmor %vm826, %vm827
      %v830 = vshrl.u32 %v795, 16
      %v832 = vrot.slane %v830, 4
      %v833 = vshll.u32 %v795, 16
      %v835 = vrot.slane %v833, 5
      %v836 = vor.u32 %v832, %v835
      %v837 = vrot.slane %v836, 4
      %v839 = vshll.u32 %v796, 16
      %v841 = vrot.slane %v839, 5
      %v842 = vsel %vm828, %v837, %v841
      %v843 = vshrl.u32 %v796, 16
      %v845 = vrot.slane %v843, 4
      %v846 = vor.u32 %v845, %v841
      %v847 = vrot.slane %v846, 4
      %v849 = vshll.u32 %v816, 16
      %v851 = vrot.slane %v849, 5
      %v852 = vsel %vm828, %v847, %v851
      %v854 = vshrl.u32 %v797, 16
      %v856 = vrot.slane %v854, 4
      %v857 = vshll.u32 %v797, 16
      %v859 = vrot.slane %v857, 5
      %v860 = vor.u32 %v856, %v859
      %v861 = vrot.slane %v860, 4
      %v863 = vshll.u32 %v798, 16
      %v865 = vrot.slane %v863, 5
      %v866 = vsel %vm828, %v861, %v865
      %v867 = vshrl.u32 %v798, 16
      %v869 = vrot.slane %v867, 4
      %v870 = vor.u32 %v869, %v865
      %v871 = vrot.slane %v870, 4
      %v873 = vshll.u32 %v817, 16
      %v875 = vrot.slane %v873, 5
      %v876 = vsel %vm828, %v871, %v875
      %v878 = vshrl.u32 %v799, 16
      %v880 = vrot.slane %v878, 4
      %v881 = vshll.u32 %v799, 16
      %v883 = vrot.slane %v881, 5
      %v884 = vor.u32 %v880, %v883
      %v885 = vrot.slane %v884, 4
      %v887 = vshll.u32 %v800, 16
      %v889 = vrot.slane %v887, 5
      %v890 = vsel %vm828, %v885, %v889
      %v891 = vshrl.u32 %v800, 16
      %v893 = vrot.slane %v891, 4
      %v894 = vor.u32 %v893, %v889
      %v895 = vrot.slane %v894, 4
      %v897 = vshll.u32 %v818, 16
      %v899 = vrot.slane %v897, 5
      %v900 = vsel %vm828, %v895, %v899
      %v902 = vshrl.u32 %v801, 16
      %v904 = vrot.slane %v902, 4
      %v905 = vshll.u32 %v801, 16
      %v907 = vrot.slane %v905, 5
      %v908 = vor.u32 %v904, %v907
      %v909 = vrot.slane %v908, 4
      %v911 = vshll.u32 %v802, 16
      %v913 = vrot.slane %v911, 5
      %v914 = vsel %vm828, %v909, %v913
      %v915 = vshrl.u32 %v802, 16
      %v917 = vrot.slane %v915, 4
      %v918 = vor.u32 %v917, %v913
      %v919 = vrot.slane %v918, 4
      %v921 = vshll.u32 %v819, 16
      %v923 = vrot.slane %v921, 5
      %v924 = vsel %vm828, %v919, %v923
      %v926 = vshrl.u32 %v803, 16
      %v928 = vrot.slane %v926, 4
      %v929 = vshll.u32 %v803, 16
      %v931 = vrot.slane %v929, 5
      %v932 = vor.u32 %v928, %v931
      %v933 = vrot.slane %v932, 4
      %v935 = vshll.u32 %v804, 16
      %v937 = vrot.slane %v935, 5
      %v938 = vsel %vm828, %v933, %v937
      %v939 = vshrl.u32 %v804, 16
      %v941 = vrot.slane %v939, 4
      %v942 = vor.u32 %v941, %v937
      %v943 = vrot.slane %v942, 4
      %v945 = vshll.u32 %v820, 16
      %v947 = vrot.slane %v945, 5
      %v948 = vsel %vm828, %v943, %v947
      %v950 = vshrl.u32 %v805, 16
      %v952 = vrot.slane %v950, 4
      %v953 = vshll.u32 %v805, 16
      %v955 = vrot.slane %v953, 5
      %v956 = vor.u32 %v952, %v955
      %v957 = vrot.slane %v956, 4
      %v959 = vshll.u32 %v806, 16
      %v961 = vrot.slane %v959, 5
      %v962 = vsel %vm828, %v957, %v961
      %v963 = vshrl.u32 %v806, 16
      %v965 = vrot.slane %v963, 4
      %v966 = vor.u32 %v965, %v961
      %v967 = vrot.slane %v966, 4
      %v969 = vshll.u32 %v821, 16
      %v971 = vrot.slane %v969, 5
      %v972 = vsel %vm828, %v967, %v971
      %v974 = vshrl.u32 %v807, 16
      %v976 = vrot.slane %v974, 4
      %v977 = vshll.u32 %v807, 16
      %v979 = vrot.slane %v977, 5
      %v980 = vor.u32 %v976, %v979
      %v981 = vrot.slane %v980, 4
      %v983 = vshll.u32 %v808, 16
      %v985 = vrot.slane %v983, 5
      %v986 = vsel %vm828, %v981, %v985
      %v987 = vshrl.u32 %v808, 16
      %v989 = vrot.slane %v987, 4
      %v990 = vor.u32 %v989, %v985
      %v991 = vrot.slane %v990, 4
      %v993 = vshll.u32 %v822, 16
      %v995 = vrot.slane %v993, 5
      %v996 = vsel %vm828, %v991, %v995
      %v998 = vshrl.u32 %v809, 16
      %v1000 = vrot.slane %v998, 4
      %v1001 = vshll.u32 %v809, 16
      %v1003 = vrot.slane %v1001, 5
      %v1004 = vor.u32 %v1000, %v1003
      %v1005 = vrot.slane %v1004, 4
      %v1007 = vshll.u32 %v810, 16
      %v1009 = vrot.slane %v1007, 5
      %v1010 = vsel %vm828, %v1005, %v1009
      %v1011 = vshrl.u32 %v810, 16
      %v1013 = vrot.slane %v1011, 4
      %v1014 = vor.u32 %v1013, %v1009
      %v1015 = vrot.slane %v1014, 4
      %v1017 = vshll.u32 %v823, 16
      %v1019 = vrot.slane %v1017, 5
      %v1020 = vsel %vm828, %v1015, %v1019
      %v1022 = vshrl.u32 %v811, 16
      %v1024 = vrot.slane %v1022, 4
      %v1025 = vshll.u32 %v811, 16
      %v1027 = vrot.slane %v1025, 5
      %v1028 = vor.u32 %v1024, %v1027
      %v1029 = vrot.slane %v1028, 4
      %v1031 = vshll.u32 %v812, 16
      %v1033 = vrot.slane %v1031, 5
      %v1034 = vsel %vm828, %v1029, %v1033
      %v1035 = vshrl.u32 %v812, 16
      %v1037 = vrot.slane %v1035, 4
      %v1038 = vor.u32 %v1037, %v1033
      %v1039 = vrot.slane %v1038, 4
      %v1041 = vshll.u32 %v824, 16
      %v1043 = vrot.slane %v1041, 5
      %v1044 = vsel %vm828, %v1039, %v1043
      %v1046 = vshrl.u32 %v813, 16
      %v1048 = vrot.slane %v1046, 4
      %v1049 = vshll.u32 %v813, 16
      %v1051 = vrot.slane %v1049, 5
      %v1052 = vor.u32 %v1048, %v1051
      %v1053 = vrot.slane %v1052, 4
      %v1055 = vshll.u32 %v814, 16
      %v1057 = vrot.slane %v1055, 5
      %v1058 = vsel %vm828, %v1053, %v1057
      %v1059 = vshrl.u32 %v814, 16
      %v1061 = vrot.slane %v1059, 4
      %v1062 = vor.u32 %v1061, %v1057
      %v1063 = vrot.slane %v1062, 4
      %v1065 = vshll.u32 %v825, 16
      %v1067 = vrot.slane %v1065, 5
      %v1068 = vsel %vm828, %v1063, %v1067
      %s1069 = scalar_lea.vmem %s1, 2
      %v1070 = vld [vmem:[%s1069] sm:$0x3]
      %v1071 = vunpack.c.l.b16 %v842
      %v1072 = vunpack.c.l.b16 %v852
      %v1073 = vunpack.c.l.b16 %v866
      %v1074 = vunpack.c.l.b16 %v876
      %v1075 = vunpack.c.l.b16 %v890
      %v1076 = vunpack.c.l.b16 %v900
      %v1077 = vunpack.c.l.b16 %v914
      %v1078 = vunpack.c.l.b16 %v924
      %v1079 = vunpack.c.l.b16 %v938
      %v1080 = vunpack.c.l.b16 %v948
      %v1081 = vunpack.c.l.b16 %v962
      %v1082 = vunpack.c.l.b16 %v972
      %v1083 = vunpack.c.l.b16 %v986
      %v1084 = vunpack.c.l.b16 %v996
      %v1085 = vunpack.c.l.b16 %v1010
      %v1086 = vunpack.c.l.b16 %v1020
      %v1087 = vunpack.c.l.b16 %v1034
      %v1088 = vunpack.c.l.b16 %v1044
      %v1089 = vunpack.c.l.b16 %v1058
      %v1090 = vunpack.c.l.b16 %v1068
      %v1091 = vpack.c.b16 %v1072, %v1071
      %v1092 = vpack.c.b16 %v1074, %v1073
      %v1093 = vpack.c.b16 %v1076, %v1075
      %v1094 = vpack.c.b16 %v1078, %v1077
      %v1095 = vpack.c.b16 %v1080, %v1079
      %v1096 = vpack.c.b16 %v1082, %v1081
      %v1097 = vpack.c.b16 %v1084, %v1083
      %v1098 = vpack.c.b16 %v1086, %v1085
      %v1099 = vpack.c.b16 %v1088, %v1087
      %v1100 = vpack.c.b16 %v1090, %v1089
      %vm1101 = vcmask 31744
      %v1103 = vsel %vm1101, %v1091, 0
      %v1106 = vsel %vm1101, %v1092, 0
      %v1109 = vsel %vm1101, %v1093, 0
      %v1112 = vsel %vm1101, %v1094, 0
      %v1115 = vsel %vm1101, %v1095, 0
      %v1118 = vsel %vm1101, %v1096, 0
      %v1121 = vsel %vm1101, %v1097, 0
      %v1124 = vsel %vm1101, %v1098, 0
      %v1127 = vsel %vm1101, %v1099, 0
      %v1130 = vsel %vm1101, %v1100, 0
      %vm1132 = vcmask 1041408
      %v1134 = vsel %vm1132, %v1070, 0
      %1136 = vmatprep.subr.bf16.mxu0 0
      %1137 = vmatpush1.bf16.msra.mxu0 %v1134
      %1138 = vmatprep.subr.bf16.mxu0 0
      %1139 = vmatpush1.bf16.msra.mxu0 0
      %1140 = vmatprep.subr.bf16.mxu0 0
      %1141 = vmatpush1.bf16.msra.mxu0 0
      %1142 = vmatprep.subr.bf16.mxu0 0
      %1143 = vmatpush1.bf16.msra.mxu0 0
      %1144 = vmatprep.subr.bf16.mxu0 0
      %1145 = vmatpush1.bf16.msra.mxu0 0
      %1146 = vmatprep.subr.bf16.mxu0 0
      %1147 = vmatpush1.bf16.msra.mxu0 0
      %1148 = vmatprep.subr.bf16.mxu0 0
      %1149 = vmatpush1.bf16.msra.mxu0 0
      %1150 = vmatprep.subr.bf16.mxu0 0
      %1151 = vmatpush1.bf16.msra.mxu0 0
      %1152 = vmatprep.subr.bf16.mxu0 0
      %1153 = vmatpush1.bf16.msra.mxu0 0
      %1154 = vmatprep.subr.bf16.mxu0 0
      %1155 = vmatpush1.bf16.msra.mxu0 0
      %1156 = vmatprep.subr.bf16.mxu0 0
      %1157 = vmatpush1.bf16.msra.mxu0 0
      %1158 = vmatprep.subr.bf16.mxu0 0
      %1159 = vmatpush1.bf16.msra.mxu0 0
      %1160 = vmatprep.subr.bf16.mxu0 0
      %1161 = vmatpush1.bf16.msra.mxu0 0
      %1162 = vmatprep.subr.bf16.mxu0 0
      %1163 = vmatpush1.bf16.msra.mxu0 0
      %1164 = vmatprep.subr.bf16.mxu0 0
      %1165 = vmatpush1.bf16.msra.mxu0 0
      %1166 = vmatprep.subr.bf16.mxu0 0
      %1167 = vmatpush1.bf16.msra.mxu0 0
      %1168 = vmatprep.mubr.bf16.mxu0 0
      %1169 = vmatmul.mubr.bf16.gmra.mrb[0].mxu0 %v1103
      %v1170 = vpop.f32.mrb[0].mxu0
      %v1171 = vadd.f32 0.0, %v1170
      %v1172 = vpop.f32.mrb[0].mxu0
      %v1173 = vpop.f32.mrb[0].mxu0
      %v1174 = vadd.f32 0.0, %v1173
      %v1175 = vpop.f32.mrb[0].mxu0
      %1176 = vmatprep.mubr.bf16.mxu0 0
      %1177 = vmatmul.mubr.bf16.gmra.mrb[0].mxu0 %v1106
      %v1178 = vpop.f32.mrb[0].mxu0
      %v1179 = vadd.f32 0.0, %v1178
      %v1180 = vpop.f32.mrb[0].mxu0
      %v1181 = vpop.f32.mrb[0].mxu0
      %v1182 = vadd.f32 0.0, %v1181
      %v1183 = vpop.f32.mrb[0].mxu0
      %1184 = vmatprep.mubr.bf16.mxu0 0
      %1185 = vmatmul.mubr.bf16.gmra.mrb[0].mxu0 %v1109
      %v1186 = vpop.f32.mrb[0].mxu0
      %v1187 = vadd.f32 0.0, %v1186
      %v1188 = vpop.f32.mrb[0].mxu0
      %v1189 = vpop.f32.mrb[0].mxu0
      %v1190 = vadd.f32 0.0, %v1189
      %v1191 = vpop.f32.mrb[0].mxu0
      %1192 = vmatprep.mubr.bf16.mxu0 0
      %1193 = vmatmul.mubr.bf16.gmra.mrb[0].mxu0 %v1112
      %v1194 = vpop.f32.mrb[0].mxu0
      %v1195 = vadd.f32 0.0, %v1194
      %v1196 = vpop.f32.mrb[0].mxu0
      %v1197 = vpop.f32.mrb[0].mxu0
      %v1198 = vadd.f32 0.0, %v1197
      %v1199 = vpop.f32.mrb[0].mxu0
      %1200 = vmatprep.mubr.bf16.mxu0 0
      %1201 = vmatmul.mubr.bf16.gmra.mrb[0].mxu0 %v1115
      %v1202 = vpop.f32.mrb[0].mxu0
      %v1203 = vadd.f32 0.0, %v1202
      %v1204 = vpop.f32.mrb[0].mxu0
      %v1205 = vpop.f32.mrb[0].mxu0
      %v1206 = vadd.f32 0.0, %v1205
      %v1207 = vpop.f32.mrb[0].mxu0
      %1208 = vmatprep.mubr.bf16.mxu0 0
      %1209 = vmatmul.mubr.bf16.gmra.mrb[0].mxu0 %v1118
      %v1210 = vpop.f32.mrb[0].mxu0
      %v1211 = vadd.f32 0.0, %v1210
      %v1212 = vpop.f32.mrb[0].mxu0
      %v1213 = vpop.f32.mrb[0].mxu0
      %v1214 = vadd.f32 0.0, %v1213
      %v1215 = vpop.f32.mrb[0].mxu0
      %1216 = vmatprep.mubr.bf16.mxu0 0
      %1217 = vmatmul.mubr.bf16.gmra.mrb[0].mxu0 %v1121
      %v1218 = vpop.f32.mrb[0].mxu0
      %v1219 = vadd.f32 0.0, %v1218
      %v1220 = vpop.f32.mrb[0].mxu0
      %v1221 = vpop.f32.mrb[0].mxu0
      %v1222 = vadd.f32 0.0, %v1221
      %v1223 = vpop.f32.mrb[0].mxu0
      %1224 = vmatprep.mubr.bf16.mxu0 0
      %1225 = vmatmul.mubr.bf16.gmra.mrb[0].mxu0 %v1124
      %v1226 = vpop.f32.mrb[0].mxu0
      %v1227 = vadd.f32 0.0, %v1226
      %v1228 = vpop.f32.mrb[0].mxu0
      %v1229 = vpop.f32.mrb[0].mxu0
      %v1230 = vadd.f32 0.0, %v1229
      %v1231 = vpop.f32.mrb[0].mxu0
      %1232 = vmatprep.mubr.bf16.mxu0 0
      %1233 = vmatmul.mubr.bf16.gmra.mrb[0].mxu0 %v1127
      %v1234 = vpop.f32.mrb[0].mxu0
      %v1235 = vadd.f32 0.0, %v1234
      %v1236 = vpop.f32.mrb[0].mxu0
      %v1237 = vpop.f32.mrb[0].mxu0
      %v1238 = vadd.f32 0.0, %v1237
      %v1239 = vpop.f32.mrb[0].mxu0
      %1240 = vmatprep.mubr.bf16.mxu0 0
      %1241 = vmatmul.mubr.bf16.gmra.mrb[0].mxu0 %v1130
      %v1242 = vpop.f32.mrb[0].mxu0
      %v1243 = vadd.f32 0.0, %v1242
      %v1244 = vpop.f32.mrb[0].mxu0
      %v1245 = vpop.f32.mrb[0].mxu0
      %v1246 = vadd.f32 0.0, %v1245
      %v1247 = vpop.f32.mrb[0].mxu0
      %1248 = vdwg.mxu0
      %v1269 = vunpack.c.l.b16 %v795
      %v1270 = vunpack.c.l.b16 %v796
      %v1271 = vunpack.c.l.b16 %v797
      %v1272 = vunpack.c.l.b16 %v798
      %v1273 = vunpack.c.l.b16 %v799
      %v1274 = vunpack.c.l.b16 %v800
      %v1275 = vunpack.c.l.b16 %v801
      %v1276 = vunpack.c.l.b16 %v802
      %v1277 = vunpack.c.l.b16 %v803
      %v1278 = vunpack.c.l.b16 %v804
      %v1279 = vunpack.c.l.b16 %v805
      %v1280 = vunpack.c.l.b16 %v806
      %v1281 = vunpack.c.l.b16 %v807
      %v1282 = vunpack.c.l.b16 %v808
      %v1283 = vunpack.c.l.b16 %v809
      %v1284 = vunpack.c.l.b16 %v810
      %v1285 = vunpack.c.l.b16 %v811
      %v1286 = vunpack.c.l.b16 %v812
      %v1287 = vunpack.c.l.b16 %v813
      %v1288 = vunpack.c.l.b16 %v814
      %v1289 = vpack.c.b16 %v1270, %v1269
      %v1290 = vpack.c.b16 %v1272, %v1271
      %v1291 = vpack.c.b16 %v1274, %v1273
      %v1292 = vpack.c.b16 %v1276, %v1275
      %v1293 = vpack.c.b16 %v1278, %v1277
      %v1294 = vpack.c.b16 %v1280, %v1279
      %v1295 = vpack.c.b16 %v1282, %v1281
      %v1296 = vpack.c.b16 %v1284, %v1283
      %v1297 = vpack.c.b16 %v1286, %v1285
      %v1298 = vpack.c.b16 %v1288, %v1287
      %v1300 = vsel %vm1101, %v1289, 0
      %v1303 = vsel %vm1101, %v1290, 0
      %v1306 = vsel %vm1101, %v1291, 0
      %v1309 = vsel %vm1101, %v1292, 0
      %v1312 = vsel %vm1101, %v1293, 0
      %v1315 = vsel %vm1101, %v1294, 0
      %v1318 = vsel %vm1101, %v1295, 0
      %v1321 = vsel %vm1101, %v1296, 0
      %v1324 = vsel %vm1101, %v1297, 0
      %v1327 = vsel %vm1101, %v1298, 0
      %v1330 = vsel %vm1132, %v815, 0
      %1332 = vmatprep.subr.bf16.mxu0 0
      %1333 = vmatpush1.bf16.msra.mxu0 %v1330
      %1334 = vmatprep.subr.bf16.mxu0 0
      %1335 = vmatpush1.bf16.msra.mxu0 0
      %1336 = vmatprep.subr.bf16.mxu0 0
      %1337 = vmatpush1.bf16.msra.mxu0 0
      %1338 = vmatprep.subr.bf16.mxu0 0
      %1339 = vmatpush1.bf16.msra.mxu0 0
      %1340 = vmatprep.subr.bf16.mxu0 0
      %1341 = vmatpush1.bf16.msra.mxu0 0
      %1342 = vmatprep.subr.bf16.mxu0 0
      %1343 = vmatpush1.bf16.msra.mxu0 0
      %1344 = vmatprep.subr.bf16.mxu0 0
      %1345 = vmatpush1.bf16.msra.mxu0 0
      %1346 = vmatprep.subr.bf16.mxu0 0
      %1347 = vmatpush1.bf16.msra.mxu0 0
      %1348 = vmatprep.subr.bf16.mxu0 0
      %1349 = vmatpush1.bf16.msra.mxu0 0
      %1350 = vmatprep.subr.bf16.mxu0 0
      %1351 = vmatpush1.bf16.msra.mxu0 0
      %1352 = vmatprep.subr.bf16.mxu0 0
      %1353 = vmatpush1.bf16.msra.mxu0 0
      %1354 = vmatprep.subr.bf16.mxu0 0
      %1355 = vmatpush1.bf16.msra.mxu0 0
      %1356 = vmatprep.subr.bf16.mxu0 0
      %1357 = vmatpush1.bf16.msra.mxu0 0
      %1358 = vmatprep.subr.bf16.mxu0 0
      %1359 = vmatpush1.bf16.msra.mxu0 0
      %1360 = vmatprep.subr.bf16.mxu0 0
      %1361 = vmatpush1.bf16.msra.mxu0 0
      %1362 = vmatprep.subr.bf16.mxu0 0
      %1363 = vmatpush1.bf16.msra.mxu0 0
      %1364 = vmatprep.mubr.bf16.mxu0 0
      %1365 = vmatmul.mubr.bf16.gmra.mrb[0].mxu0 %v1300
      %v1366 = vpop.f32.mrb[0].mxu0
      %v1367 = vadd.f32 %v1171, %v1366
      %v1368 = vpop.f32.mrb[0].mxu0
      %v1369 = vpop.f32.mrb[0].mxu0
      %v1370 = vadd.f32 %v1174, %v1369
      %v1371 = vpop.f32.mrb[0].mxu0
      %1372 = vmatprep.mubr.bf16.mxu0 0
      %1373 = vmatmul.mubr.bf16.gmra.mrb[0].mxu0 %v1303
      %v1374 = vpop.f32.mrb[0].mxu0
      %v1375 = vadd.f32 %v1179, %v1374
      %v1376 = vpop.f32.mrb[0].mxu0
      %v1377 = vpop.f32.mrb[0].mxu0
      %v1378 = vadd.f32 %v1182, %v1377
      %v1379 = vpop.f32.mrb[0].mxu0
      %1380 = vmatprep.mubr.bf16.mxu0 0
      %1381 = vmatmul.mubr.bf16.gmra.mrb[0].mxu0 %v1306
      %v1382 = vpop.f32.mrb[0].mxu0
      %v1383 = vadd.f32 %v1187, %v1382
      %v1384 = vpop.f32.mrb[0].mxu0
      %v1385 = vpop.f32.mrb[0].mxu0
      %v1386 = vadd.f32 %v1190, %v1385
      %v1387 = vpop.f32.mrb[0].mxu0
      %1388 = vmatprep.mubr.bf16.mxu0 0
      %1389 = vmatmul.mubr.bf16.gmra.mrb[0].mxu0 %v1309
      %v1390 = vpop.f32.mrb[0].mxu0
      %v1391 = vadd.f32 %v1195, %v1390
      %v1392 = vpop.f32.mrb[0].mxu0
      %v1393 = vpop.f32.mrb[0].mxu0
      %v1394 = vadd.f32 %v1198, %v1393
      %v1395 = vpop.f32.mrb[0].mxu0
      %1396 = vmatprep.mubr.bf16.mxu0 0
      %1397 = vmatmul.mubr.bf16.gmra.mrb[0].mxu0 %v1312
      %v1398 = vpop.f32.mrb[0].mxu0
      %v1399 = vadd.f32 %v1203, %v1398
      %v1400 = vpop.f32.mrb[0].mxu0
      %v1401 = vpop.f32.mrb[0].mxu0
      %v1402 = vadd.f32 %v1206, %v1401
      %v1403 = vpop.f32.mrb[0].mxu0
      %1404 = vmatprep.mubr.bf16.mxu0 0
      %1405 = vmatmul.mubr.bf16.gmra.mrb[0].mxu0 %v1315
      %v1406 = vpop.f32.mrb[0].mxu0
      %v1407 = vadd.f32 %v1211, %v1406
      %v1408 = vpop.f32.mrb[0].mxu0
      %v1409 = vpop.f32.mrb[0].mxu0
      %v1410 = vadd.f32 %v1214, %v1409
      %v1411 = vpop.f32.mrb[0].mxu0
      %1412 = vmatprep.mubr.bf16.mxu0 0
      %1413 = vmatmul.mubr.bf16.gmra.mrb[0].mxu0 %v1318
      %v1414 = vpop.f32.mrb[0].mxu0
      %v1415 = vadd.f32 %v1219, %v1414
      %v1416 = vpop.f32.mrb[0].mxu0
      %v1417 = vpop.f32.mrb[0].mxu0
      %v1418 = vadd.f32 %v1222, %v1417
      %v1419 = vpop.f32.mrb[0].mxu0
      %1420 = vmatprep.mubr.bf16.mxu0 0
      %1421 = vmatmul.mubr.bf16.gmra.mrb[0].mxu0 %v1321
      %v1422 = vpop.f32.mrb[0].mxu0
      %v1423 = vadd.f32 %v1227, %v1422
      %v1424 = vpop.f32.mrb[0].mxu0
      %v1425 = vpop.f32.mrb[0].mxu0
      %v1426 = vadd.f32 %v1230, %v1425
      %v1427 = vpop.f32.mrb[0].mxu0
      %1428 = vmatprep.mubr.bf16.mxu0 0
      %1429 = vmatmul.mubr.bf16.gmra.mrb[0].mxu0 %v1324
      %v1430 = vpop.f32.mrb[0].mxu0
      %v1431 = vadd.f32 %v1235, %v1430
      %v1432 = vpop.f32.mrb[0].mxu0
      %v1433 = vpop.f32.mrb[0].mxu0
      %v1434 = vadd.f32 %v1238, %v1433
      %v1435 = vpop.f32.mrb[0].mxu0
      %1436 = vmatprep.mubr.bf16.mxu0 0
      %1437 = vmatmul.mubr.bf16.gmra.mrb[0].mxu0 %v1327
      %v1438 = vpop.f32.mrb[0].mxu0
      %v1439 = vadd.f32 %v1243, %v1438
      %v1440 = vpop.f32.mrb[0].mxu0
      %v1441 = vpop.f32.mrb[0].mxu0
      %v1442 = vadd.f32 %v1246, %v1441
      %v1443 = vpop.f32.mrb[0].mxu0
      %1444 = vdwg.mxu0
      %v1445 = vld [vmem:[#allocation2] sm:$0xe]
      %v1446 = vld [vmem:[#allocation2 + $0xc] sm:$0xe]
      %v1447 = vld [vmem:[#allocation2 + $0x18] sm:$0xe]
      %v1448 = vld [vmem:[#allocation2 + $0x24] sm:$0xe]
      %v1449 = vld [vmem:[#allocation2 + $0x30] sm:$0xe]
      %v1450 = vld [vmem:[#allocation2 + $0x3c] sm:$0xe]
      %v1451 = vld [vmem:[#allocation2 + $0x48] sm:$0xe]
      %v1452 = vld [vmem:[#allocation2 + $0x54] sm:$0xe]
      %v1453 = vld [vmem:[#allocation2 + $0x60] sm:$0xe]
      %v1454 = vld [vmem:[#allocation2 + $0x6c] sm:$0xe]
      %vm1475 = vcmask 1042432
      %vm1476 = vcmask 1046532
      %vm1477 = vmor %vm1475, %vm1476
      %v1478 = vrot.slane %v1445, 5
      %v1479 = vrot.slane %v1478, 4
      %v1480 = vrot.slane %v796, 5
      %v1481 = vsel %vm1477, %v1479, %v1480
      %v1482 = vrot.slane %v1480, 4
      %v1483 = vrot.slane %v816, 5
      %v1484 = vsel %vm1477, %v1482, %v1483
      %v1485 = vrot.slane %v1446, 5
      %v1486 = vrot.slane %v1485, 4
      %v1487 = vrot.slane %v798, 5
      %v1488 = vsel %vm1477, %v1486, %v1487
      %v1489 = vrot.slane %v1487, 4
      %v1490 = vrot.slane %v817, 5
      %v1491 = vsel %vm1477, %v1489, %v1490
      %v1492 = vrot.slane %v1447, 5
      %v1493 = vrot.slane %v1492, 4
      %v1494 = vrot.slane %v800, 5
      %v1495 = vsel %vm1477, %v1493, %v1494
      %v1496 = vrot.slane %v1494, 4
      %v1497 = vrot.slane %v818, 5
      %v1498 = vsel %vm1477, %v1496, %v1497
      %v1499 = vrot.slane %v1448, 5
      %v1500 = vrot.slane %v1499, 4
      %v1501 = vrot.slane %v802, 5
      %v1502 = vsel %vm1477, %v1500, %v1501
      %v1503 = vrot.slane %v1501, 4
      %v1504 = vrot.slane %v819, 5
      %v1505 = vsel %vm1477, %v1503, %v1504
      %v1506 = vrot.slane %v1449, 5
      %v1507 = vrot.slane %v1506, 4
      %v1508 = vrot.slane %v804, 5
      %v1509 = vsel %vm1477, %v1507, %v1508
      %v1510 = vrot.slane %v1508, 4
      %v1511 = vrot.slane %v820, 5
      %v1512 = vsel %vm1477, %v1510, %v1511
      %v1513 = vrot.slane %v1450, 5
      %v1514 = vrot.slane %v1513, 4
      %v1515 = vrot.slane %v806, 5
      %v1516 = vsel %vm1477, %v1514, %v1515
      %v1517 = vrot.slane %v1515, 4
      %v1518 = vrot.slane %v821, 5
      %v1519 = vsel %vm1477, %v1517, %v1518
      %v1520 = vrot.slane %v1451, 5
      %v1521 = vrot.slane %v1520, 4
      %v1522 = vrot.slane %v808, 5
      %v1523 = vsel %vm1477, %v1521, %v1522
      %v1524 = vrot.slane %v1522, 4
      %v1525 = vrot.slane %v822, 5
      %v1526 = vsel %vm1477, %v1524, %v1525
      %v1527 = vrot.slane %v1452, 5
      %v1528 = vrot.slane %v1527, 4
      %v1529 = vrot.slane %v810, 5
      %v1530 = vsel %vm1477, %v1528, %v1529
      %v1531 = vrot.slane %v1529, 4
      %v1532 = vrot.slane %v823, 5
      %v1533 = vsel %vm1477, %v1531, %v1532
      %v1534 = vrot.slane %v1453, 5
      %v1535 = vrot.slane %v1534, 4
      %v1536 = vrot.slane %v812, 5
      %v1537 = vsel %vm1477, %v1535, %v1536
      %v1538 = vrot.slane %v1536, 4
      %v1539 = vrot.slane %v824, 5
      %v1540 = vsel %vm1477, %v1538, %v1539
      %v1541 = vrot.slane %v1454, 5
      %v1542 = vrot.slane %v1541, 4
      %v1543 = vrot.slane %v814, 5
      %v1544 = vsel %vm1477, %v1542, %v1543
      %v1545 = vrot.slane %v1543, 4
      %v1546 = vrot.slane %v825, 5
      %v1547 = vsel %vm1477, %v1545, %v1546
      %s1548 = scalar_lea.vmem %s1, 4
      %v1549 = vld [vmem:[%s1548] sm:$0x3]
      %v1550 = vunpack.c.l.b16 %v1481
      %v1551 = vunpack.c.l.b16 %v1484
      %v1552 = vunpack.c.l.b16 %v1488
      %v1553 = vunpack.c.l.b16 %v1491
      %v1554 = vunpack.c.l.b16 %v1495
      %v1555 = vunpack.c.l.b16 %v1498
      %v1556 = vunpack.c.l.b16 %v1502
      %v1557 = vunpack.c.l.b16 %v1505
      %v1558 = vunpack.c.l.b16 %v1509
      %v1559 = vunpack.c.l.b16 %v1512
      %v1560 = vunpack.c.l.b16 %v1516
      %v1561 = vunpack.c.l.b16 %v1519
      %v1562 = vunpack.c.l.b16 %v1523
      %v1563 = vunpack.c.l.b16 %v1526
      %v1564 = vunpack.c.l.b16 %v1530
      %v1565 = vunpack.c.l.b16 %v1533
      %v1566 = vunpack.c.l.b16 %v1537
      %v1567 = vunpack.c.l.b16 %v1540
      %v1568 = vunpack.c.l.b16 %v1544
      %v1569 = vunpack.c.l.b16 %v1547
      %v1570 = vpack.c.b16 %v1551, %v1550
      %v1571 = vpack.c.b16 %v1553, %v1552
      %v1572 = vpack.c.b16 %v1555, %v1554
      %v1573 = vpack.c.b16 %v1557, %v1556
      %v1574 = vpack.c.b16 %v1559, %v1558
      %v1575 = vpack.c.b16 %v1561, %v1560
      %v1576 = vpack.c.b16 %v1563, %v1562
      %v1577 = vpack.c.b16 %v1565, %v1564
      %v1578 = vpack.c.b16 %v1567, %v1566
      %v1579 = vpack.c.b16 %v1569, %v1568
      %v1581 = vsel %vm1101, %v1570, 0
      %v1584 = vsel %vm1101, %v1571, 0
      %v1587 = vsel %vm1101, %v1572, 0
      %v1590 = vsel %vm1101, %v1573, 0
      %v1593 = vsel %vm1101, %v1574, 0
      %v1596 = vsel %vm1101, %v1575, 0
      %v1599 = vsel %vm1101, %v1576, 0
      %v1602 = vsel %vm1101, %v1577, 0
      %v1605 = vsel %vm1101, %v1578, 0
      %v1608 = vsel %vm1101, %v1579, 0
      %v1611 = vsel %vm1132, %v1549, 0
      %1613 = vmatprep.subr.bf16.mxu0 0
      %1614 = vmatpush1.bf16.msra.mxu0 %v1611
      %1615 = vmatprep.subr.bf16.mxu0 0
      %1616 = vmatpush1.bf16.msra.mxu0 0
      %1617 = vmatprep.subr.bf16.mxu0 0
      %1618 = vmatpush1.bf16.msra.mxu0 0
      %1619 = vmatprep.subr.bf16.mxu0 0
      %1620 = vmatpush1.bf16.msra.mxu0 0
      %1621 = vmatprep.subr.bf16.mxu0 0
      %1622 = vmatpush1.bf16.msra.mxu0 0
      %1623 = vmatprep.subr.bf16.mxu0 0
      %1624 = vmatpush1.bf16.msra.mxu0 0
      %1625 = vmatprep.subr.bf16.mxu0 0
      %1626 = vmatpush1.bf16.msra.mxu0 0
      %1627 = vmatprep.subr.bf16.mxu0 0
      %1628 = vmatpush1.bf16.msra.mxu0 0
      %1629 = vmatprep.subr.bf16.mxu0 0
      %1630 = vmatpush1.bf16.msra.mxu0 0
      %1631 = vmatprep.subr.bf16.mxu0 0
      %1632 = vmatpush1.bf16.msra.mxu0 0
      %1633 = vmatprep.subr.bf16.mxu0 0
      %1634 = vmatpush1.bf16.msra.mxu0 0
      %1635 = vmatprep.subr.bf16.mxu0 0
      %1636 = vmatpush1.bf16.msra.mxu0 0
      %1637 = vmatprep.subr.bf16.mxu0 0
      %1638 = vmatpush1.bf16.msra.mxu0 0
      %1639 = vmatprep.subr.bf16.mxu0 0
      %1640 = vmatpush1.bf16.msra.mxu0 0
      %1641 = vmatprep.subr.bf16.mxu0 0
      %1642 = vmatpush1.bf16.msra.mxu0 0
      %1643 = vmatprep.subr.bf16.mxu0 0
      %1644 = vmatpush1.bf16.msra.mxu0 0
      %1645 = vmatprep.mubr.bf16.mxu0 0
      %1646 = vmatmul.mubr.bf16.gmra.mrb[0].mxu0 %v1581
      %v1647 = vpop.f32.mrb[0].mxu0
      %v1648 = vadd.f32 0.0, %v1647
      %v1649 = vpop.f32.mrb[0].mxu0
      %v1650 = vpop.f32.mrb[0].mxu0
      %v1651 = vadd.f32 0.0, %v1650
      %v1652 = vpop.f32.mrb[0].mxu0
      %1653 = vmatprep.mubr.bf16.mxu0 0
      %1654 = vmatmul.mubr.bf16.gmra.mrb[0].mxu0 %v1584
      %v1655 = vpop.f32.mrb[0].mxu0
      %v1656 = vadd.f32 0.0, %v1655
      %v1657 = vpop.f32.mrb[0].mxu0
      %v1658 = vpop.f32.mrb[0].mxu0
      %v1659 = vadd.f32 0.0, %v1658
      %v1660 = vpop.f32.mrb[0].mxu0
      %1661 = vmatprep.mubr.bf16.mxu0 0
      %1662 = vmatmul.mubr.bf16.gmra.mrb[0].mxu0 %v1587
      %v1663 = vpop.f32.mrb[0].mxu0
      %v1664 = vadd.f32 0.0, %v1663
      %v1665 = vpop.f32.mrb[0].mxu0
      %v1666 = vpop.f32.mrb[0].mxu0
      %v1667 = vadd.f32 0.0, %v1666
      %v1668 = vpop.f32.mrb[0].mxu0
      %1669 = vmatprep.mubr.bf16.mxu0 0
      %1670 = vmatmul.mubr.bf16.gmra.mrb[0].mxu0 %v1590
      %v1671 = vpop.f32.mrb[0].mxu0
      %v1672 = vadd.f32 0.0, %v1671
      %v1673 = vpop.f32.mrb[0].mxu0
      %v1674 = vpop.f32.mrb[0].mxu0
      %v1675 = vadd.f32 0.0, %v1674
      %v1676 = vpop.f32.mrb[0].mxu0
      %1677 = vmatprep.mubr.bf16.mxu0 0
      %1678 = vmatmul.mubr.bf16.gmra.mrb[0].mxu0 %v1593
      %v1679 = vpop.f32.mrb[0].mxu0
      %v1680 = vadd.f32 0.0, %v1679
      %v1681 = vpop.f32.mrb[0].mxu0
      %v1682 = vpop.f32.mrb[0].mxu0
      %v1683 = vadd.f32 0.0, %v1682
      %v1684 = vpop.f32.mrb[0].mxu0
      %1685 = vmatprep.mubr.bf16.mxu0 0
      %1686 = vmatmul.mubr.bf16.gmra.mrb[0].mxu0 %v1596
      %v1687 = vpop.f32.mrb[0].mxu0
      %v1688 = vadd.f32 0.0, %v1687
      %v1689 = vpop.f32.mrb[0].mxu0
      %v1690 = vpop.f32.mrb[0].mxu0
      %v1691 = vadd.f32 0.0, %v1690
      %v1692 = vpop.f32.mrb[0].mxu0
      %1693 = vmatprep.mubr.bf16.mxu0 0
      %1694 = vmatmul.mubr.bf16.gmra.mrb[0].mxu0 %v1599
      %v1695 = vpop.f32.mrb[0].mxu0
      %v1696 = vadd.f32 0.0, %v1695
      %v1697 = vpop.f32.mrb[0].mxu0
      %v1698 = vpop.f32.mrb[0].mxu0
      %v1699 = vadd.f32 0.0, %v1698
      %v1700 = vpop.f32.mrb[0].mxu0
      %1701 = vmatprep.mubr.bf16.mxu0 0
      %1702 = vmatmul.mubr.bf16.gmra.mrb[0].mxu0 %v1602
      %v1703 = vpop.f32.mrb[0].mxu0
      %v1704 = vadd.f32 0.0, %v1703
      %v1705 = vpop.f32.mrb[0].mxu0
      %v1706 = vpop.f32.mrb[0].mxu0
      %v1707 = vadd.f32 0.0, %v1706
      %v1708 = vpop.f32.mrb[0].mxu0
      %1709 = vmatprep.mubr.bf16.mxu0 0
      %1710 = vmatmul.mubr.bf16.gmra.mrb[0].mxu0 %v1605
      %v1711 = vpop.f32.mrb[0].mxu0
      %v1712 = vadd.f32 0.0, %v1711
      %v1713 = vpop.f32.mrb[0].mxu0
      %v1714 = vpop.f32.mrb[0].mxu0
      %v1715 = vadd.f32 0.0, %v1714
      %v1716 = vpop.f32.mrb[0].mxu0
      %1717 = vmatprep.mubr.bf16.mxu0 0
      %1718 = vmatmul.mubr.bf16.gmra.mrb[0].mxu0 %v1608
      %v1719 = vpop.f32.mrb[0].mxu0
      %v1720 = vadd.f32 0.0, %v1719
      %v1721 = vpop.f32.mrb[0].mxu0
      %v1722 = vpop.f32.mrb[0].mxu0
      %v1723 = vadd.f32 0.0, %v1722
      %v1724 = vpop.f32.mrb[0].mxu0
      %1725 = vdwg.mxu0
      %v1726 = vadd.f32 %v1367, %v1648
      %v1727 = vadd.f32 %v1370, %v1651
      %v1728 = vadd.f32 %v1375, %v1656
      %v1729 = vadd.f32 %v1378, %v1659
      %v1730 = vadd.f32 %v1383, %v1664
      %v1731 = vadd.f32 %v1386, %v1667
      %v1732 = vadd.f32 %v1391, %v1672
      %v1733 = vadd.f32 %v1394, %v1675
      %v1734 = vadd.f32 %v1399, %v1680
      %v1735 = vadd.f32 %v1402, %v1683
      %v1736 = vadd.f32 %v1407, %v1688
      %v1737 = vadd.f32 %v1410, %v1691
      %v1738 = vadd.f32 %v1415, %v1696
      %v1739 = vadd.f32 %v1418, %v1699
      %v1740 = vadd.f32 %v1423, %v1704
      %v1741 = vadd.f32 %v1426, %v1707
      %v1742 = vadd.f32 %v1431, %v1712
      %v1743 = vadd.f32 %v1434, %v1715
      %v1744 = vadd.f32 %v1439, %v1720
      %v1745 = vadd.f32 %v1442, %v1723
      %s1746 = scalar_lea.vmem [#allocation2], 12
      %v1747 = vld [vmem:[%s1746] sm:$0xf]
      %v1748 = vld [vmem:[%s1746 + $0x4] sm:$0xf]
      %v1749 = vld [vmem:[%s1746 + $0xc] sm:$0xf]
      %v1750 = vld [vmem:[%s1746 + $0x10] sm:$0xf]
      %v1751 = vld [vmem:[%s1746 + $0x18] sm:$0xf]
      %v1752 = vld [vmem:[%s1746 + $0x1c] sm:$0xf]
      %v1753 = vld [vmem:[%s1746 + $0x24] sm:$0xf]
      %v1754 = vld [vmem:[%s1746 + $0x28] sm:$0xf]
      %v1755 = vld [vmem:[%s1746 + $0x30] sm:$0xf]
      %v1756 = vld [vmem:[%s1746 + $0x34] sm:$0xf]
      %v1757 = vld [vmem:[%s1746 + $0x3c] sm:$0xf]
      %v1758 = vld [vmem:[%s1746 + $0x40] sm:$0xf]
      %v1759 = vld [vmem:[%s1746 + $0x48] sm:$0xf]
      %v1760 = vld [vmem:[%s1746 + $0x4c] sm:$0xf]
      %v1761 = vld [vmem:[%s1746 + $0x54] sm:$0xf]
      %v1762 = vld [vmem:[%s1746 + $0x58] sm:$0xf]
      %v1763 = vld [vmem:[%s1746 + $0x60] sm:$0xf]
      %v1764 = vld [vmem:[%s1746 + $0x64] sm:$0xf]
      %v1765 = vld [vmem:[%s1746 + $0x6c] sm:$0xf]
      %v1766 = vld [vmem:[%s1746 + $0x70] sm:$0xf]
      %s1767 = scalar_lea.vmem %s1, 6
      %v1768 = vld [vmem:[%s1767] sm:$0x3]
      %v1789 = vunpack.c.l.b16 %v1747
      %v1790 = vunpack.c.l.b16 %v1748
      %v1791 = vunpack.c.l.b16 %v1749
      %v1792 = vunpack.c.l.b16 %v1750
      %v1793 = vunpack.c.l.b16 %v1751
      %v1794 = vunpack.c.l.b16 %v1752
      %v1795 = vunpack.c.l.b16 %v1753
      %v1796 = vunpack.c.l.b16 %v1754
      %v1797 = vunpack.c.l.b16 %v1755
      %v1798 = vunpack.c.l.b16 %v1756
      %v1799 = vunpack.c.l.b16 %v1757
      %v1800 = vunpack.c.l.b16 %v1758
      %v1801 = vunpack.c.l.b16 %v1759
      %v1802 = vunpack.c.l.b16 %v1760
      %v1803 = vunpack.c.l.b16 %v1761
      %v1804 = vunpack.c.l.b16 %v1762
      %v1805 = vunpack.c.l.b16 %v1763
      %v1806 = vunpack.c.l.b16 %v1764
      %v1807 = vunpack.c.l.b16 %v1765
      %v1808 = vunpack.c.l.b16 %v1766
      %v1809 = vpack.c.b16 %v1790, %v1789
      %v1810 = vpack.c.b16 %v1792, %v1791
      %v1811 = vpack.c.b16 %v1794, %v1793
      %v1812 = vpack.c.b16 %v1796, %v1795
      %v1813 = vpack.c.b16 %v1798, %v1797
      %v1814 = vpack.c.b16 %v1800, %v1799
      %v1815 = vpack.c.b16 %v1802, %v1801
      %v1816 = vpack.c.b16 %v1804, %v1803
      %v1817 = vpack.c.b16 %v1806, %v1805
      %v1818 = vpack.c.b16 %v1808, %v1807
      %v1820 = vsel %vm1101, %v1809, 0
      %v1823 = vsel %vm1101, %v1810, 0
      %v1826 = vsel %vm1101, %v1811, 0
      %v1829 = vsel %vm1101, %v1812, 0
      %v1832 = vsel %vm1101, %v1813, 0
      %v1835 = vsel %vm1101, %v1814, 0
      %v1838 = vsel %vm1101, %v1815, 0
      %v1841 = vsel %vm1101, %v1816, 0
      %v1844 = vsel %vm1101, %v1817, 0
      %v1847 = vsel %vm1101, %v1818, 0
      %v1850 = vsel %vm1132, %v1768, 0
      %1852 = vmatprep.subr.bf16.mxu0 0
      %1853 = vmatpush1.bf16.msra.mxu0 %v1850
      %1854 = vmatprep.subr.bf16.mxu0 0
      %1855 = vmatpush1.bf16.msra.mxu0 0
      %1856 = vmatprep.subr.bf16.mxu0 0
      %1857 = vmatpush1.bf16.msra.mxu0 0
      %1858 = vmatprep.subr.bf16.mxu0 0
      %1859 = vmatpush1.bf16.msra.mxu0 0
      %1860 = vmatprep.subr.bf16.mxu0 0
      %1861 = vmatpush1.bf16.msra.mxu0 0
      %1862 = vmatprep.subr.bf16.mxu0 0
      %1863 = vmatpush1.bf16.msra.mxu0 0
      %1864 = vmatprep.subr.bf16.mxu0 0
      %1865 = vmatpush1.bf16.msra.mxu0 0
      %1866 = vmatprep.subr.bf16.mxu0 0
      %1867 = vmatpush1.bf16.msra.mxu0 0
      %1868 = vmatprep.subr.bf16.mxu0 0
      %1869 = vmatpush1.bf16.msra.mxu0 0
      %1870 = vmatprep.subr.bf16.mxu0 0
      %1871 = vmatpush1.bf16.msra.mxu0 0
      %1872 = vmatprep.subr.bf16.mxu0 0
      %1873 = vmatpush1.bf16.msra.mxu0 0
      %1874 = vmatprep.subr.bf16.mxu0 0
      %1875 = vmatpush1.bf16.msra.mxu0 0
      %1876 = vmatprep.subr.bf16.mxu0 0
      %1877 = vmatpush1.bf16.msra.mxu0 0
      %1878 = vmatprep.subr.bf16.mxu0 0
      %1879 = vmatpush1.bf16.msra.mxu0 0
      %1880 = vmatprep.subr.bf16.mxu0 0
      %1881 = vmatpush1.bf16.msra.mxu0 0
      %1882 = vmatprep.subr.bf16.mxu0 0
      %1883 = vmatpush1.bf16.msra.mxu0 0
      %1884 = vmatprep.mubr.bf16.mxu0 0
      %1885 = vmatmul.mubr.bf16.gmra.mrb[0].mxu0 %v1820
      %v1886 = vpop.f32.mrb[0].mxu0
      %v1887 = vadd.f32 0.0, %v1886
      %v1888 = vpop.f32.mrb[0].mxu0
      %v1889 = vpop.f32.mrb[0].mxu0
      %v1890 = vadd.f32 0.0, %v1889
      %v1891 = vpop.f32.mrb[0].mxu0
      %1892 = vmatprep.mubr.bf16.mxu0 0
      %1893 = vmatmul.mubr.bf16.gmra.mrb[0].mxu0 %v1823
      %v1894 = vpop.f32.mrb[0].mxu0
      %v1895 = vadd.f32 0.0, %v1894
      %v1896 = vpop.f32.mrb[0].mxu0
      %v1897 = vpop.f32.mrb[0].mxu0
      %v1898 = vadd.f32 0.0, %v1897
      %v1899 = vpop.f32.mrb[0].mxu0
      %1900 = vmatprep.mubr.bf16.mxu0 0
      %1901 = vmatmul.mubr.bf16.gmra.mrb[0].mxu0 %v1826
      %v1902 = vpop.f32.mrb[0].mxu0
      %v1903 = vadd.f32 0.0, %v1902
      %v1904 = vpop.f32.mrb[0].mxu0
      %v1905 = vpop.f32.mrb[0].mxu0
      %v1906 = vadd.f32 0.0, %v1905
      %v1907 = vpop.f32.mrb[0].mxu0
      %1908 = vmatprep.mubr.bf16.mxu0 0
      %1909 = vmatmul.mubr.bf16.gmra.mrb[0].mxu0 %v1829
      %v1910 = vpop.f32.mrb[0].mxu0
      %v1911 = vadd.f32 0.0, %v1910
      %v1912 = vpop.f32.mrb[0].mxu0
      %v1913 = vpop.f32.mrb[0].mxu0
      %v1914 = vadd.f32 0.0, %v1913
      %v1915 = vpop.f32.mrb[0].mxu0
      %1916 = vmatprep.mubr.bf16.mxu0 0
      %1917 = vmatmul.mubr.bf16.gmra.mrb[0].mxu0 %v1832
      %v1918 = vpop.f32.mrb[0].mxu0
      %v1919 = vadd.f32 0.0, %v1918
      %v1920 = vpop.f32.mrb[0].mxu0
      %v1921 = vpop.f32.mrb[0].mxu0
      %v1922 = vadd.f32 0.0, %v1921
      %v1923 = vpop.f32.mrb[0].mxu0
      %1924 = vmatprep.mubr.bf16.mxu0 0
      %1925 = vmatmul.mubr.bf16.gmra.mrb[0].mxu0 %v1835
      %v1926 = vpop.f32.mrb[0].mxu0
      %v1927 = vadd.f32 0.0, %v1926
      %v1928 = vpop.f32.mrb[0].mxu0
      %v1929 = vpop.f32.mrb[0].mxu0
      %v1930 = vadd.f32 0.0, %v1929
      %v1931 = vpop.f32.mrb[0].mxu0
      %1932 = vmatprep.mubr.bf16.mxu0 0
      %1933 = vmatmul.mubr.bf16.gmra.mrb[0].mxu0 %v1838
      %v1934 = vpop.f32.mrb[0].mxu0
      %v1935 = vadd.f32 0.0, %v1934
      %v1936 = vpop.f32.mrb[0].mxu0
      %v1937 = vpop.f32.mrb[0].mxu0
      %v1938 = vadd.f32 0.0, %v1937
      %v1939 = vpop.f32.mrb[0].mxu0
      %1940 = vmatprep.mubr.bf16.mxu0 0
      %1941 = vmatmul.mubr.bf16.gmra.mrb[0].mxu0 %v1841
      %v1942 = vpop.f32.mrb[0].mxu0
      %v1943 = vadd.f32 0.0, %v1942
      %v1944 = vpop.f32.mrb[0].mxu0
      %v1945 = vpop.f32.mrb[0].mxu0
      %v1946 = vadd.f32 0.0, %v1945
      %v1947 = vpop.f32.mrb[0].mxu0
      %1948 = vmatprep.mubr.bf16.mxu0 0
      %1949 = vmatmul.mubr.bf16.gmra.mrb[0].mxu0 %v1844
      %v1950 = vpop.f32.mrb[0].mxu0
      %v1951 = vadd.f32 0.0, %v1950
      %v1952 = vpop.f32.mrb[0].mxu0
      %v1953 = vpop.f32.mrb[0].mxu0
      %v1954 = vadd.f32 0.0, %v1953
      %v1955 = vpop.f32.mrb[0].mxu0
      %1956 = vmatprep.mubr.bf16.mxu0 0
      %1957 = vmatmul.mubr.bf16.gmra.mrb[0].mxu0 %v1847
      %v1958 = vpop.f32.mrb[0].mxu0
      %v1959 = vadd.f32 0.0, %v1958
      %v1960 = vpop.f32.mrb[0].mxu0
      %v1961 = vpop.f32.mrb[0].mxu0
      %v1962 = vadd.f32 0.0, %v1961
      %v1963 = vpop.f32.mrb[0].mxu0
      %1964 = vdwg.mxu0
      %v1965 = vadd.f32 %v1726, %v1887
      %v1966 = vadd.f32 %v1727, %v1890
      %v1967 = vadd.f32 %v1728, %v1895
      %v1968 = vadd.f32 %v1729, %v1898
      %v1969 = vadd.f32 %v1730, %v1903
      %v1970 = vadd.f32 %v1731, %v1906
      %v1971 = vadd.f32 %v1732, %v1911
      %v1972 = vadd.f32 %v1733, %v1914
      %v1973 = vadd.f32 %v1734, %v1919
      %v1974 = vadd.f32 %v1735, %v1922
      %v1975 = vadd.f32 %v1736, %v1927
      %v1976 = vadd.f32 %v1737, %v1930
      %v1977 = vadd.f32 %v1738, %v1935
      %v1978 = vadd.f32 %v1739, %v1938
      %v1979 = vadd.f32 %v1740, %v1943
      %v1980 = vadd.f32 %v1741, %v1946
      %v1981 = vadd.f32 %v1742, %v1951
      %v1982 = vadd.f32 %v1743, %v1954
      %v1983 = vadd.f32 %v1744, %v1959
      %v1984 = vadd.f32 %v1745, %v1962
      %v1985 = vld [vmem:[%s1746] sm:$0xf]
      %v1986 = vld [vmem:[%s1746 + $0x4] sm:$0xf]
      %v1987 = vld [vmem:[%s1746 + $0x8] sm:$0x1]
      %v1988 = vld [vmem:[%s1746 + $0xc] sm:$0xf]
      %v1989 = vld [vmem:[%s1746 + $0x10] sm:$0xf]
      %v1990 = vld [vmem:[%s1746 + $0x14] sm:$0x1]
      %v1991 = vld [vmem:[%s1746 + $0x18] sm:$0xf]
      %v1992 = vld [vmem:[%s1746 + $0x1c] sm:$0xf]
      %v1993 = vld [vmem:[%s1746 + $0x20] sm:$0x1]
      %v1994 = vld [vmem:[%s1746 + $0x24] sm:$0xf]
      %v1995 = vld [vmem:[%s1746 + $0x28] sm:$0xf]
      %v1996 = vld [vmem:[%s1746 + $0x2c] sm:$0x1]
      %v1997 = vld [vmem:[%s1746 + $0x30] sm:$0xf]
      %v1998 = vld [vmem:[%s1746 + $0x34] sm:$0xf]
      %v1999 = vld [vmem:[%s1746 + $0x38] sm:$0x1]
      %v2000 = vld [vmem:[%s1746 + $0x3c] sm:$0xf]
      %v2001 = vld [vmem:[%s1746 + $0x40] sm:$0xf]
      %v2002 = vld [vmem:[%s1746 + $0x44] sm:$0x1]
      %v2003 = vld [vmem:[%s1746 + $0x48] sm:$0xf]
      %v2004 = vld [vmem:[%s1746 + $0x4c] sm:$0xf]
      %v2005 = vld [vmem:[%s1746 + $0x50] sm:$0x1]
      %v2006 = vld [vmem:[%s1746 + $0x54] sm:$0xf]
      %v2007 = vld [vmem:[%s1746 + $0x58] sm:$0xf]
      %v2008 = vld [vmem:[%s1746 + $0x5c] sm:$0x1]
      %v2009 = vld [vmem:[%s1746 + $0x60] sm:$0xf]
      %v2010 = vld [vmem:[%s1746 + $0x64] sm:$0xf]
      %v2011 = vld [vmem:[%s1746 + $0x68] sm:$0x1]
      %v2012 = vld [vmem:[%s1746 + $0x6c] sm:$0xf]
      %v2013 = vld [vmem:[%s1746 + $0x70] sm:$0xf]
      %v2014 = vld [vmem:[%s1746 + $0x74] sm:$0x1]
      %v2016 = vshrl.u32 %v1985, 16
      %v2018 = vrot.slane %v2016, 4
      %v2019 = vshll.u32 %v1985, 16
      %v2021 = vrot.slane %v2019, 5
      %v2022 = vor.u32 %v2018, %v2021
      %v2023 = vrot.slane %v2022, 4
      %v2025 = vshll.u32 %v1986, 16
      %v2027 = vrot.slane %v2025, 5
      %v2028 = vsel %vm828, %v2023, %v2027
      %v2029 = vshrl.u32 %v1986, 16
      %v2031 = vrot.slane %v2029, 4
      %v2032 = vor.u32 %v2031, %v2027
      %v2033 = vrot.slane %v2032, 4
      %v2035 = vshll.u32 %v1987, 16
      %v2037 = vrot.slane %v2035, 5
      %v2038 = vsel %vm828, %v2033, %v2037
      %v2040 = vshrl.u32 %v1988, 16
      %v2042 = vrot.slane %v2040, 4
      %v2043 = vshll.u32 %v1988, 16
      %v2045 = vrot.slane %v2043, 5
      %v2046 = vor.u32 %v2042, %v2045
      %v2047 = vrot.slane %v2046, 4
      %v2049 = vshll.u32 %v1989, 16
      %v2051 = vrot.slane %v2049, 5
      %v2052 = vsel %vm828, %v2047, %v2051
      %v2053 = vshrl.u32 %v1989, 16
      %v2055 = vrot.slane %v2053, 4
      %v2056 = vor.u32 %v2055, %v2051
      %v2057 = vrot.slane %v2056, 4
      %v2059 = vshll.u32 %v1990, 16
      %v2061 = vrot.slane %v2059, 5
      %v2062 = vsel %vm828, %v2057, %v2061
      %v2064 = vshrl.u32 %v1991, 16
      %v2066 = vrot.slane %v2064, 4
      %v2067 = vshll.u32 %v1991, 16
      %v2069 = vrot.slane %v2067, 5
      %v2070 = vor.u32 %v2066, %v2069
      %v2071 = vrot.slane %v2070, 4
      %v2073 = vshll.u32 %v1992, 16
      %v2075 = vrot.slane %v2073, 5
      %v2076 = vsel %vm828, %v2071, %v2075
      %v2077 = vshrl.u32 %v1992, 16
      %v2079 = vrot.slane %v2077, 4
      %v2080 = vor.u32 %v2079, %v2075
      %v2081 = vrot.slane %v2080, 4
      %v2083 = vshll.u32 %v1993, 16
      %v2085 = vrot.slane %v2083, 5
      %v2086 = vsel %vm828, %v2081, %v2085
      %v2088 = vshrl.u32 %v1994, 16
      %v2090 = vrot.slane %v2088, 4
      %v2091 = vshll.u32 %v1994, 16
      %v2093 = vrot.slane %v2091, 5
      %v2094 = vor.u32 %v2090, %v2093
      %v2095 = vrot.slane %v2094, 4
      %v2097 = vshll.u32 %v1995, 16
      %v2099 = vrot.slane %v2097, 5
      %v2100 = vsel %vm828, %v2095, %v2099
      %v2101 = vshrl.u32 %v1995, 16
      %v2103 = vrot.slane %v2101, 4
      %v2104 = vor.u32 %v2103, %v2099
      %v2105 = vrot.slane %v2104, 4
      %v2107 = vshll.u32 %v1996, 16
      %v2109 = vrot.slane %v2107, 5
      %v2110 = vsel %vm828, %v2105, %v2109
      %v2112 = vshrl.u32 %v1997, 16
      %v2114 = vrot.slane %v2112, 4
      %v2115 = vshll.u32 %v1997, 16
      %v2117 = vrot.slane %v2115, 5
      %v2118 = vor.u32 %v2114, %v2117
      %v2119 = vrot.slane %v2118, 4
      %v2121 = vshll.u32 %v1998, 16
      %v2123 = vrot.slane %v2121, 5
      %v2124 = vsel %vm828, %v2119, %v2123
      %v2125 = vshrl.u32 %v1998, 16
      %v2127 = vrot.slane %v2125, 4
      %v2128 = vor.u32 %v2127, %v2123
      %v2129 = vrot.slane %v2128, 4
      %v2131 = vshll.u32 %v1999, 16
      %v2133 = vrot.slane %v2131, 5
      %v2134 = vsel %vm828, %v2129, %v2133
      %v2136 = vshrl.u32 %v2000, 16
      %v2138 = vrot.slane %v2136, 4
      %v2139 = vshll.u32 %v2000, 16
      %v2141 = vrot.slane %v2139, 5
      %v2142 = vor.u32 %v2138, %v2141
      %v2143 = vrot.slane %v2142, 4
      %v2145 = vshll.u32 %v2001, 16
      %v2147 = vrot.slane %v2145, 5
      %v2148 = vsel %vm828, %v2143, %v2147
      %v2149 = vshrl.u32 %v2001, 16
      %v2151 = vrot.slane %v2149, 4
      %v2152 = vor.u32 %v2151, %v2147
      %v2153 = vrot.slane %v2152, 4
      %v2155 = vshll.u32 %v2002, 16
      %v2157 = vrot.slane %v2155, 5
      %v2158 = vsel %vm828, %v2153, %v2157
      %v2160 = vshrl.u32 %v2003, 16
      %v2162 = vrot.slane %v2160, 4
      %v2163 = vshll.u32 %v2003, 16
      %v2165 = vrot.slane %v2163, 5
      %v2166 = vor.u32 %v2162, %v2165
      %v2167 = vrot.slane %v2166, 4
      %v2169 = vshll.u32 %v2004, 16
      %v2171 = vrot.slane %v2169, 5
      %v2172 = vsel %vm828, %v2167, %v2171
      %v2173 = vshrl.u32 %v2004, 16
      %v2175 = vrot.slane %v2173, 4
      %v2176 = vor.u32 %v2175, %v2171
      %v2177 = vrot.slane %v2176, 4
      %v2179 = vshll.u32 %v2005, 16
      %v2181 = vrot.slane %v2179, 5
      %v2182 = vsel %vm828, %v2177, %v2181
      %v2184 = vshrl.u32 %v2006, 16
      %v2186 = vrot.slane %v2184, 4
      %v2187 = vshll.u32 %v2006, 16
      %v2189 = vrot.slane %v2187, 5
      %v2190 = vor.u32 %v2186, %v2189
      %v2191 = vrot.slane %v2190, 4
      %v2193 = vshll.u32 %v2007, 16
      %v2195 = vrot.slane %v2193, 5
      %v2196 = vsel %vm828, %v2191, %v2195
      %v2197 = vshrl.u32 %v2007, 16
      %v2199 = vrot.slane %v2197, 4
      %v2200 = vor.u32 %v2199, %v2195
      %v2201 = vrot.slane %v2200, 4
      %v2203 = vshll.u32 %v2008, 16
      %v2205 = vrot.slane %v2203, 5
      %v2206 = vsel %vm828, %v2201, %v2205
      %v2208 = vshrl.u32 %v2009, 16
      %v2210 = vrot.slane %v2208, 4
      %v2211 = vshll.u32 %v2009, 16
      %v2213 = vrot.slane %v2211, 5
      %v2214 = vor.u32 %v2210, %v2213
      %v2215 = vrot.slane %v2214, 4
      %v2217 = vshll.u32 %v2010, 16
      %v2219 = vrot.slane %v2217, 5
      %v2220 = vsel %vm828, %v2215, %v2219
      %v2221 = vshrl.u32 %v2010, 16
      %v2223 = vrot.slane %v2221, 4
      %v2224 = vor.u32 %v2223, %v2219
      %v2225 = vrot.slane %v2224, 4
      %v2227 = vshll.u32 %v2011, 16
      %v2229 = vrot.slane %v2227, 5
      %v2230 = vsel %vm828, %v2225, %v2229
      %v2232 = vshrl.u32 %v2012, 16
      %v2234 = vrot.slane %v2232, 4
      %v2235 = vshll.u32 %v2012, 16
      %v2237 = vrot.slane %v2235, 5
      %v2238 = vor.u32 %v2234, %v2237
      %v2239 = vrot.slane %v2238, 4
      %v2241 = vshll.u32 %v2013, 16
      %v2243 = vrot.slane %v2241, 5
      %v2244 = vsel %vm828, %v2239, %v2243
      %v2245 = vshrl.u32 %v2013, 16
      %v2247 = vrot.slane %v2245, 4
      %v2248 = vor.u32 %v2247, %v2243
      %v2249 = vrot.slane %v2248, 4
      %v2251 = vshll.u32 %v2014, 16
      %v2253 = vrot.slane %v2251, 5
      %v2254 = vsel %vm828, %v2249, %v2253
      %s2255 = scalar_lea.vmem %s1, 8
      %v2256 = vld [vmem:[%s2255] sm:$0x3]
      %v2257 = vunpack.c.l.b16 %v2028
      %v2258 = vunpack.c.l.b16 %v2038
      %v2259 = vunpack.c.l.b16 %v2052
      %v2260 = vunpack.c.l.b16 %v2062
      %v2261 = vunpack.c.l.b16 %v2076
      %v2262 = vunpack.c.l.b16 %v2086
      %v2263 = vunpack.c.l.b16 %v2100
      %v2264 = vunpack.c.l.b16 %v2110
      %v2265 = vunpack.c.l.b16 %v2124
      %v2266 = vunpack.c.l.b16 %v2134
      %v2267 = vunpack.c.l.b16 %v2148
      %v2268 = vunpack.c.l.b16 %v2158
      %v2269 = vunpack.c.l.b16 %v2172
      %v2270 = vunpack.c.l.b16 %v2182
      %v2271 = vunpack.c.l.b16 %v2196
      %v2272 = vunpack.c.l.b16 %v2206
      %v2273 = vunpack.c.l.b16 %v2220
      %v2274 = vunpack.c.l.b16 %v2230
      %v2275 = vunpack.c.l.b16 %v2244
      %v2276 = vunpack.c.l.b16 %v2254
      %v2277 = vpack.c.b16 %v2258, %v2257
      %v2278 = vpack.c.b16 %v2260, %v2259
      %v2279 = vpack.c.b16 %v2262, %v2261
      %v2280 = vpack.c.b16 %v2264, %v2263
      %v2281 = vpack.c.b16 %v2266, %v2265
      %v2282 = vpack.c.b16 %v2268, %v2267
      %v2283 = vpack.c.b16 %v2270, %v2269
      %v2284 = vpack.c.b16 %v2272, %v2271
      %v2285 = vpack.c.b16 %v2274, %v2273
      %v2286 = vpack.c.b16 %v2276, %v2275
      %v2288 = vsel %vm1101, %v2277, 0
      %v2291 = vsel %vm1101, %v2278, 0
      %v2294 = vsel %vm1101, %v2279, 0
      %v2297 = vsel %vm1101, %v2280, 0
      %v2300 = vsel %vm1101, %v2281, 0
      %v2303 = vsel %vm1101, %v2282, 0
      %v2306 = vsel %vm1101, %v2283, 0
      %v2309 = vsel %vm1101, %v2284, 0
      %v2312 = vsel %vm1101, %v2285, 0
      %v2315 = vsel %vm1101, %v2286, 0
      %v2318 = vsel %vm1132, %v2256, 0
      %2320 = vmatprep.subr.bf16.mxu0 0
      %2321 = vmatpush1.bf16.msra.mxu0 %v2318
      %2322 = vmatprep.subr.bf16.mxu0 0
      %2323 = vmatpush1.bf16.msra.mxu0 0
      %2324 = vmatprep.subr.bf16.mxu0 0
      %2325 = vmatpush1.bf16.msra.mxu0 0
      %2326 = vmatprep.subr.bf16.mxu0 0
      %2327 = vmatpush1.bf16.msra.mxu0 0
      %2328 = vmatprep.subr.bf16.mxu0 0
      %2329 = vmatpush1.bf16.msra.mxu0 0
      %2330 = vmatprep.subr.bf16.mxu0 0
      %2331 = vmatpush1.bf16.msra.mxu0 0
      %2332 = vmatprep.subr.bf16.mxu0 0
      %2333 = vmatpush1.bf16.msra.mxu0 0
      %2334 = vmatprep.subr.bf16.mxu0 0
      %2335 = vmatpush1.bf16.msra.mxu0 0
      %2336 = vmatprep.subr.bf16.mxu0 0
      %2337 = vmatpush1.bf16.msra.mxu0 0
      %2338 = vmatprep.subr.bf16.mxu0 0
      %2339 = vmatpush1.bf16.msra.mxu0 0
      %2340 = vmatprep.subr.bf16.mxu0 0
      %2341 = vmatpush1.bf16.msra.mxu0 0
      %2342 = vmatprep.subr.bf16.mxu0 0
      %2343 = vmatpush1.bf16.msra.mxu0 0
      %2344 = vmatprep.subr.bf16.mxu0 0
      %2345 = vmatpush1.bf16.msra.mxu0 0
      %2346 = vmatprep.subr.bf16.mxu0 0
      %2347 = vmatpush1.bf16.msra.mxu0 0
      %2348 = vmatprep.subr.bf16.mxu0 0
      %2349 = vmatpush1.bf16.msra.mxu0 0
      %2350 = vmatprep.subr.bf16.mxu0 0
      %2351 = vmatpush1.bf16.msra.mxu0 0
      %2352 = vmatprep.mubr.bf16.mxu0 0
      %2353 = vmatmul.mubr.bf16.gmra.mrb[0].mxu0 %v2288
      %v2354 = vpop.f32.mrb[0].mxu0
      %v2355 = vadd.f32 0.0, %v2354
      %v2356 = vpop.f32.mrb[0].mxu0
      %v2357 = vpop.f32.mrb[0].mxu0
      %v2358 = vadd.f32 0.0, %v2357
      %v2359 = vpop.f32.mrb[0].mxu0
      %2360 = vmatprep.mubr.bf16.mxu0 0
      %2361 = vmatmul.mubr.bf16.gmra.mrb[0].mxu0 %v2291
      %v2362 = vpop.f32.mrb[0].mxu0
      %v2363 = vadd.f32 0.0, %v2362
      %v2364 = vpop.f32.mrb[0].mxu0
      %v2365 = vpop.f32.mrb[0].mxu0
      %v2366 = vadd.f32 0.0, %v2365
      %v2367 = vpop.f32.mrb[0].mxu0
      %2368 = vmatprep.mubr.bf16.mxu0 0
      %2369 = vmatmul.mubr.bf16.gmra.mrb[0].mxu0 %v2294
      %v2370 = vpop.f32.mrb[0].mxu0
      %v2371 = vadd.f32 0.0, %v2370
      %v2372 = vpop.f32.mrb[0].mxu0
      %v2373 = vpop.f32.mrb[0].mxu0
      %v2374 = vadd.f32 0.0, %v2373
      %v2375 = vpop.f32.mrb[0].mxu0
      %2376 = vmatprep.mubr.bf16.mxu0 0
      %2377 = vmatmul.mubr.bf16.gmra.mrb[0].mxu0 %v2297
      %v2378 = vpop.f32.mrb[0].mxu0
      %v2379 = vadd.f32 0.0, %v2378
      %v2380 = vpop.f32.mrb[0].mxu0
      %v2381 = vpop.f32.mrb[0].mxu0
      %v2382 = vadd.f32 0.0, %v2381
      %v2383 = vpop.f32.mrb[0].mxu0
      %2384 = vmatprep.mubr.bf16.mxu0 0
      %2385 = vmatmul.mubr.bf16.gmra.mrb[0].mxu0 %v2300
      %v2386 = vpop.f32.mrb[0].mxu0
      %v2387 = vadd.f32 0.0, %v2386
      %v2388 = vpop.f32.mrb[0].mxu0
      %v2389 = vpop.f32.mrb[0].mxu0
      %v2390 = vadd.f32 0.0, %v2389
      %v2391 = vpop.f32.mrb[0].mxu0
      %2392 = vmatprep.mubr.bf16.mxu0 0
      %2393 = vmatmul.mubr.bf16.gmra.mrb[0].mxu0 %v2303
      %v2394 = vpop.f32.mrb[0].mxu0
      %v2395 = vadd.f32 0.0, %v2394
      %v2396 = vpop.f32.mrb[0].mxu0
      %v2397 = vpop.f32.mrb[0].mxu0
      %v2398 = vadd.f32 0.0, %v2397
      %v2399 = vpop.f32.mrb[0].mxu0
      %2400 = vmatprep.mubr.bf16.mxu0 0
      %2401 = vmatmul.mubr.bf16.gmra.mrb[0].mxu0 %v2306
      %v2402 = vpop.f32.mrb[0].mxu0
      %v2403 = vadd.f32 0.0, %v2402
      %v2404 = vpop.f32.mrb[0].mxu0
      %v2405 = vpop.f32.mrb[0].mxu0
      %v2406 = vadd.f32 0.0, %v2405
      %v2407 = vpop.f32.mrb[0].mxu0
      %2408 = vmatprep.mubr.bf16.mxu0 0
      %2409 = vmatmul.mubr.bf16.gmra.mrb[0].mxu0 %v2309
      %v2410 = vpop.f32.mrb[0].mxu0
      %v2411 = vadd.f32 0.0, %v2410
      %v2412 = vpop.f32.mrb[0].mxu0
      %v2413 = vpop.f32.mrb[0].mxu0
      %v2414 = vadd.f32 0.0, %v2413
      %v2415 = vpop.f32.mrb[0].mxu0
      %2416 = vmatprep.mubr.bf16.mxu0 0
      %2417 = vmatmul.mubr.bf16.gmra.mrb[0].mxu0 %v2312
      %v2418 = vpop.f32.mrb[0].mxu0
      %v2419 = vadd.f32 0.0, %v2418
      %v2420 = vpop.f32.mrb[0].mxu0
      %v2421 = vpop.f32.mrb[0].mxu0
      %v2422 = vadd.f32 0.0, %v2421
      %v2423 = vpop.f32.mrb[0].mxu0
      %2424 = vmatprep.mubr.bf16.mxu0 0
      %2425 = vmatmul.mubr.bf16.gmra.mrb[0].mxu0 %v2315
      %v2426 = vpop.f32.mrb[0].mxu0
      %v2427 = vadd.f32 0.0, %v2426
      %v2428 = vpop.f32.mrb[0].mxu0
      %v2429 = vpop.f32.mrb[0].mxu0
      %v2430 = vadd.f32 0.0, %v2429
      %v2431 = vpop.f32.mrb[0].mxu0
      %2432 = vdwg.mxu0
      %v2433 = vadd.f32 %v1965, %v2355
      %v2434 = vadd.f32 %v1966, %v2358
      %v2435 = vadd.f32 %v1967, %v2363
      %v2436 = vadd.f32 %v1968, %v2366
      %v2437 = vadd.f32 %v1969, %v2371
      %v2438 = vadd.f32 %v1970, %v2374
      %v2439 = vadd.f32 %v1971, %v2379
      %v2440 = vadd.f32 %v1972, %v2382
      %v2441 = vadd.f32 %v1973, %v2387
      %v2442 = vadd.f32 %v1974, %v2390
      %v2443 = vadd.f32 %v1975, %v2395
      %v2444 = vadd.f32 %v1976, %v2398
      %v2445 = vadd.f32 %v1977, %v2403
      %v2446 = vadd.f32 %v1978, %v2406
      %v2447 = vadd.f32 %v1979, %v2411
      %v2448 = vadd.f32 %v1980, %v2414
      %v2449 = vadd.f32 %v1981, %v2419
      %v2450 = vadd.f32 %v1982, %v2422
      %v2451 = vadd.f32 %v1983, %v2427
      %v2452 = vadd.f32 %v1984, %v2430
      %v2453 = vld [vmem:[%s1746] sm:$0xe]
      %v2454 = vld [vmem:[%s1746 + $0xc] sm:$0xe]
      %v2455 = vld [vmem:[%s1746 + $0x18] sm:$0xe]
      %v2456 = vld [vmem:[%s1746 + $0x24] sm:$0xe]
      %v2457 = vld [vmem:[%s1746 + $0x30] sm:$0xe]
      %v2458 = vld [vmem:[%s1746 + $0x3c] sm:$0xe]
      %v2459 = vld [vmem:[%s1746 + $0x48] sm:$0xe]
      %v2460 = vld [vmem:[%s1746 + $0x54] sm:$0xe]
      %v2461 = vld [vmem:[%s1746 + $0x60] sm:$0xe]
      %v2462 = vld [vmem:[%s1746 + $0x6c] sm:$0xe]
      %v2493 = vrot.slane %v2453, 5
      %v2494 = vrot.slane %v2493, 4
      %v2495 = vrot.slane %v1986, 5
      %v2496 = vsel %vm1477, %v2494, %v2495
      %v2497 = vrot.slane %v2495, 4
      %v2498 = vrot.slane %v1987, 5
      %v2499 = vsel %vm1477, %v2497, %v2498
      %v2500 = vrot.slane %v2454, 5
      %v2501 = vrot.slane %v2500, 4
      %v2502 = vrot.slane %v1989, 5
      %v2503 = vsel %vm1477, %v2501, %v2502
      %v2504 = vrot.slane %v2502, 4
      %v2505 = vrot.slane %v1990, 5
      %v2506 = vsel %vm1477, %v2504, %v2505
      %v2507 = vrot.slane %v2455, 5
      %v2508 = vrot.slane %v2507, 4
      %v2509 = vrot.slane %v1992, 5
      %v2510 = vsel %vm1477, %v2508, %v2509
      %v2511 = vrot.slane %v2509, 4
      %v2512 = vrot.slane %v1993, 5
      %v2513 = vsel %vm1477, %v2511, %v2512
      %v2514 = vrot.slane %v2456, 5
      %v2515 = vrot.slane %v2514, 4
      %v2516 = vrot.slane %v1995, 5
      %v2517 = vsel %vm1477, %v2515, %v2516
      %v2518 = vrot.slane %v2516, 4
      %v2519 = vrot.slane %v1996, 5
      %v2520 = vsel %vm1477, %v2518, %v2519
      %v2521 = vrot.slane %v2457, 5
      %v2522 = vrot.slane %v2521, 4
      %v2523 = vrot.slane %v1998, 5
      %v2524 = vsel %vm1477, %v2522, %v2523
      %v2525 = vrot.slane %v2523, 4
      %v2526 = vrot.slane %v1999, 5
      %v2527 = vsel %vm1477, %v2525, %v2526
      %v2528 = vrot.slane %v2458, 5
      %v2529 = vrot.slane %v2528, 4
      %v2530 = vrot.slane %v2001, 5
      %v2531 = vsel %vm1477, %v2529, %v2530
      %v2532 = vrot.slane %v2530, 4
      %v2533 = vrot.slane %v2002, 5
      %v2534 = vsel %vm1477, %v2532, %v2533
      %v2535 = vrot.slane %v2459, 5
      %v2536 = vrot.slane %v2535, 4
      %v2537 = vrot.slane %v2004, 5
      %v2538 = vsel %vm1477, %v2536, %v2537
      %v2539 = vrot.slane %v2537, 4
      %v2540 = vrot.slane %v2005, 5
      %v2541 = vsel %vm1477, %v2539, %v2540
      %v2542 = vrot.slane %v2460, 5
      %v2543 = vrot.slane %v2542, 4
      %v2544 = vrot.slane %v2007, 5
      %v2545 = vsel %vm1477, %v2543, %v2544
      %v2546 = vrot.slane %v2544, 4
      %v2547 = vrot.slane %v2008, 5
      %v2548 = vsel %vm1477, %v2546, %v2547
      %v2549 = vrot.slane %v2461, 5
      %v2550 = vrot.slane %v2549, 4
      %v2551 = vrot.slane %v2010, 5
      %v2552 = vsel %vm1477, %v2550, %v2551
      %v2553 = vrot.slane %v2551, 4
      %v2554 = vrot.slane %v2011, 5
      %v2555 = vsel %vm1477, %v2553, %v2554
      %v2556 = vrot.slane %v2462, 5
      %v2557 = vrot.slane %v2556, 4
      %v2558 = vrot.slane %v2013, 5
      %v2559 = vsel %vm1477, %v2557, %v2558
      %v2560 = vrot.slane %v2558, 4
      %v2561 = vrot.slane %v2014, 5
      %v2562 = vsel %vm1477, %v2560, %v2561
      %s2563 = scalar_lea.vmem %s1, 10
      %v2564 = vld [vmem:[%s2563] sm:$0x3]
      %v2565 = vunpack.c.l.b16 %v2496
      %v2566 = vunpack.c.l.b16 %v2499
      %v2567 = vunpack.c.l.b16 %v2503
      %v2568 = vunpack.c.l.b16 %v2506
      %v2569 = vunpack.c.l.b16 %v2510
      %v2570 = vunpack.c.l.b16 %v2513
      %v2571 = vunpack.c.l.b16 %v2517
      %v2572 = vunpack.c.l.b16 %v2520
      %v2573 = vunpack.c.l.b16 %v2524
      %v2574 = vunpack.c.l.b16 %v2527
      %v2575 = vunpack.c.l.b16 %v2531
      %v2576 = vunpack.c.l.b16 %v2534
      %v2577 = vunpack.c.l.b16 %v2538
      %v2578 = vunpack.c.l.b16 %v2541
      %v2579 = vunpack.c.l.b16 %v2545
      %v2580 = vunpack.c.l.b16 %v2548
      %v2581 = vunpack.c.l.b16 %v2552
      %v2582 = vunpack.c.l.b16 %v2555
      %v2583 = vunpack.c.l.b16 %v2559
      %v2584 = vunpack.c.l.b16 %v2562
      %v2585 = vpack.c.b16 %v2566, %v2565
      %v2586 = vpack.c.b16 %v2568, %v2567
      %v2587 = vpack.c.b16 %v2570, %v2569
      %v2588 = vpack.c.b16 %v2572, %v2571
      %v2589 = vpack.c.b16 %v2574, %v2573
      %v2590 = vpack.c.b16 %v2576, %v2575
      %v2591 = vpack.c.b16 %v2578, %v2577
      %v2592 = vpack.c.b16 %v2580, %v2579
      %v2593 = vpack.c.b16 %v2582, %v2581
      %v2594 = vpack.c.b16 %v2584, %v2583
      %v2596 = vsel %vm1101, %v2585, 0
      %v2599 = vsel %vm1101, %v2586, 0
      %v2602 = vsel %vm1101, %v2587, 0
      %v2605 = vsel %vm1101, %v2588, 0
      %v2608 = vsel %vm1101, %v2589, 0
      %v2611 = vsel %vm1101, %v2590, 0
      %v2614 = vsel %vm1101, %v2591, 0
      %v2617 = vsel %vm1101, %v2592, 0
      %v2620 = vsel %vm1101, %v2593, 0
      %v2623 = vsel %vm1101, %v2594, 0
      %v2626 = vsel %vm1132, %v2564, 0
      %2628 = vmatprep.subr.bf16.mxu0 0
      %2629 = vmatpush1.bf16.msra.mxu0 %v2626
      %2630 = vmatprep.subr.bf16.mxu0 0
      %2631 = vmatpush1.bf16.msra.mxu0 0
      %2632 = vmatprep.subr.bf16.mxu0 0
      %2633 = vmatpush1.bf16.msra.mxu0 0
      %2634 = vmatprep.subr.bf16.mxu0 0
      %2635 = vmatpush1.bf16.msra.mxu0 0
      %2636 = vmatprep.subr.bf16.mxu0 0
      %2637 = vmatpush1.bf16.msra.mxu0 0
      %2638 = vmatprep.subr.bf16.mxu0 0
      %2639 = vmatpush1.bf16.msra.mxu0 0
      %2640 = vmatprep.subr.bf16.mxu0 0
      %2641 = vmatpush1.bf16.msra.mxu0 0
      %2642 = vmatprep.subr.bf16.mxu0 0
      %2643 = vmatpush1.bf16.msra.mxu0 0
      %2644 = vmatprep.subr.bf16.mxu0 0
      %2645 = vmatpush1.bf16.msra.mxu0 0
      %2646 = vmatprep.subr.bf16.mxu0 0
      %2647 = vmatpush1.bf16.msra.mxu0 0
      %2648 = vmatprep.subr.bf16.mxu0 0
      %2649 = vmatpush1.bf16.msra.mxu0 0
      %2650 = vmatprep.subr.bf16.mxu0 0
      %2651 = vmatpush1.bf16.msra.mxu0 0
      %2652 = vmatprep.subr.bf16.mxu0 0
      %2653 = vmatpush1.bf16.msra.mxu0 0
      %2654 = vmatprep.subr.bf16.mxu0 0
      %2655 = vmatpush1.bf16.msra.mxu0 0
      %2656 = vmatprep.subr.bf16.mxu0 0
      %2657 = vmatpush1.bf16.msra.mxu0 0
      %2658 = vmatprep.subr.bf16.mxu0 0
      %2659 = vmatpush1.bf16.msra.mxu0 0
      %2660 = vmatprep.mubr.bf16.mxu0 0
      %2661 = vmatmul.mubr.bf16.gmra.mrb[0].mxu0 %v2596
      %v2662 = vpop.f32.mrb[0].mxu0
      %v2663 = vadd.f32 0.0, %v2662
      %v2664 = vpop.f32.mrb[0].mxu0
      %v2665 = vpop.f32.mrb[0].mxu0
      %v2666 = vadd.f32 0.0, %v2665
      %v2667 = vpop.f32.mrb[0].mxu0
      %2668 = vmatprep.mubr.bf16.mxu0 0
      %2669 = vmatmul.mubr.bf16.gmra.mrb[0].mxu0 %v2599
      %v2670 = vpop.f32.mrb[0].mxu0
      %v2671 = vadd.f32 0.0, %v2670
      %v2672 = vpop.f32.mrb[0].mxu0
      %v2673 = vpop.f32.mrb[0].mxu0
      %v2674 = vadd.f32 0.0, %v2673
      %v2675 = vpop.f32.mrb[0].mxu0
      %2676 = vmatprep.mubr.bf16.mxu0 0
      %2677 = vmatmul.mubr.bf16.gmra.mrb[0].mxu0 %v2602
      %v2678 = vpop.f32.mrb[0].mxu0
      %v2679 = vadd.f32 0.0, %v2678
      %v2680 = vpop.f32.mrb[0].mxu0
      %v2681 = vpop.f32.mrb[0].mxu0
      %v2682 = vadd.f32 0.0, %v2681
      %v2683 = vpop.f32.mrb[0].mxu0
      %2684 = vmatprep.mubr.bf16.mxu0 0
      %2685 = vmatmul.mubr.bf16.gmra.mrb[0].mxu0 %v2605
      %v2686 = vpop.f32.mrb[0].mxu0
      %v2687 = vadd.f32 0.0, %v2686
      %v2688 = vpop.f32.mrb[0].mxu0
      %v2689 = vpop.f32.mrb[0].mxu0
      %v2690 = vadd.f32 0.0, %v2689
      %v2691 = vpop.f32.mrb[0].mxu0
      %2692 = vmatprep.mubr.bf16.mxu0 0
      %2693 = vmatmul.mubr.bf16.gmra.mrb[0].mxu0 %v2608
      %v2694 = vpop.f32.mrb[0].mxu0
      %v2695 = vadd.f32 0.0, %v2694
      %v2696 = vpop.f32.mrb[0].mxu0
      %v2697 = vpop.f32.mrb[0].mxu0
      %v2698 = vadd.f32 0.0, %v2697
      %v2699 = vpop.f32.mrb[0].mxu0
      %2700 = vmatprep.mubr.bf16.mxu0 0
      %2701 = vmatmul.mubr.bf16.gmra.mrb[0].mxu0 %v2611
      %v2702 = vpop.f32.mrb[0].mxu0
      %v2703 = vadd.f32 0.0, %v2702
      %v2704 = vpop.f32.mrb[0].mxu0
      %v2705 = vpop.f32.mrb[0].mxu0
      %v2706 = vadd.f32 0.0, %v2705
      %v2707 = vpop.f32.mrb[0].mxu0
      %2708 = vmatprep.mubr.bf16.mxu0 0
      %2709 = vmatmul.mubr.bf16.gmra.mrb[0].mxu0 %v2614
      %v2710 = vpop.f32.mrb[0].mxu0
      %v2711 = vadd.f32 0.0, %v2710
      %v2712 = vpop.f32.mrb[0].mxu0
      %v2713 = vpop.f32.mrb[0].mxu0
      %v2714 = vadd.f32 0.0, %v2713
      %v2715 = vpop.f32.mrb[0].mxu0
      %2716 = vmatprep.mubr.bf16.mxu0 0
      %2717 = vmatmul.mubr.bf16.gmra.mrb[0].mxu0 %v2617
      %v2718 = vpop.f32.mrb[0].mxu0
      %v2719 = vadd.f32 0.0, %v2718
      %v2720 = vpop.f32.mrb[0].mxu0
      %v2721 = vpop.f32.mrb[0].mxu0
      %v2722 = vadd.f32 0.0, %v2721
      %v2723 = vpop.f32.mrb[0].mxu0
      %2724 = vmatprep.mubr.bf16.mxu0 0
      %2725 = vmatmul.mubr.bf16.gmra.mrb[0].mxu0 %v2620
      %v2726 = vpop.f32.mrb[0].mxu0
      %v2727 = vadd.f32 0.0, %v2726
      %v2728 = vpop.f32.mrb[0].mxu0
      %v2729 = vpop.f32.mrb[0].mxu0
      %v2730 = vadd.f32 0.0, %v2729
      %v2731 = vpop.f32.mrb[0].mxu0
      %2732 = vmatprep.mubr.bf16.mxu0 0
      %2733 = vmatmul.mubr.bf16.gmra.mrb[0].mxu0 %v2623
      %v2734 = vpop.f32.mrb[0].mxu0
      %v2735 = vadd.f32 0.0, %v2734
      %v2736 = vpop.f32.mrb[0].mxu0
      %v2737 = vpop.f32.mrb[0].mxu0
      %v2738 = vadd.f32 0.0, %v2737
      %v2739 = vpop.f32.mrb[0].mxu0
      %2740 = vdwg.mxu0
      %v2741 = vadd.f32 %v2433, %v2663
      %v2742 = vadd.f32 %v2434, %v2666
      %v2743 = vadd.f32 %v2435, %v2671
      %v2744 = vadd.f32 %v2436, %v2674
      %v2745 = vadd.f32 %v2437, %v2679
      %v2746 = vadd.f32 %v2438, %v2682
      %v2747 = vadd.f32 %v2439, %v2687
      %v2748 = vadd.f32 %v2440, %v2690
      %v2749 = vadd.f32 %v2441, %v2695
      %v2750 = vadd.f32 %v2442, %v2698
      %v2751 = vadd.f32 %v2443, %v2703
      %v2752 = vadd.f32 %v2444, %v2706
      %v2753 = vadd.f32 %v2445, %v2711
      %v2754 = vadd.f32 %v2446, %v2714
      %v2755 = vadd.f32 %v2447, %v2719
      %v2756 = vadd.f32 %v2448, %v2722
      %v2757 = vadd.f32 %v2449, %v2727
      %v2758 = vadd.f32 %v2450, %v2730
      %v2759 = vadd.f32 %v2451, %v2735
      %v2760 = vadd.f32 %v2452, %v2738
      %v2761 = vld [vmem:[%s557] sm:$0xf]
      %v2762 = vld [vmem:[%s557 + $0x4] sm:$0xf]
      %v2763 = vld [vmem:[%s557 + $0xc] sm:$0xf]
      %v2764 = vld [vmem:[%s557 + $0x10] sm:$0xf]
      %v2765 = vld [vmem:[%s557 + $0x18] sm:$0xf]
      %v2766 = vld [vmem:[%s557 + $0x1c] sm:$0xf]
      %v2767 = vld [vmem:[%s557 + $0x24] sm:$0xf]
      %v2768 = vld [vmem:[%s557 + $0x28] sm:$0xf]
      %v2769 = vld [vmem:[%s557 + $0x30] sm:$0xf]
      %v2770 = vld [vmem:[%s557 + $0x34] sm:$0xf]
      %v2771 = vld [vmem:[%s557 + $0x3c] sm:$0xf]
      %v2772 = vld [vmem:[%s557 + $0x40] sm:$0xf]
      %v2773 = vld [vmem:[%s557 + $0x48] sm:$0xf]
      %v2774 = vld [vmem:[%s557 + $0x4c] sm:$0xf]
      %v2775 = vld [vmem:[%s557 + $0x54] sm:$0xf]
      %v2776 = vld [vmem:[%s557 + $0x58] sm:$0xf]
      %v2777 = vld [vmem:[%s557 + $0x60] sm:$0xf]
      %v2778 = vld [vmem:[%s557 + $0x64] sm:$0xf]
      %v2779 = vld [vmem:[%s557 + $0x6c] sm:$0xf]
      %v2780 = vld [vmem:[%s557 + $0x70] sm:$0xf]
      %s2781 = scalar_lea.vmem %s1, 12
      %v2782 = vld [vmem:[%s2781] sm:$0x3]
      %v2803 = vunpack.c.l.b16 %v2761
      %v2804 = vunpack.c.l.b16 %v2762
      %v2805 = vunpack.c.l.b16 %v2763
      %v2806 = vunpack.c.l.b16 %v2764
      %v2807 = vunpack.c.l.b16 %v2765
      %v2808 = vunpack.c.l.b16 %v2766
      %v2809 = vunpack.c.l.b16 %v2767
      %v2810 = vunpack.c.l.b16 %v2768
      %v2811 = vunpack.c.l.b16 %v2769
      %v2812 = vunpack.c.l.b16 %v2770
      %v2813 = vunpack.c.l.b16 %v2771
      %v2814 = vunpack.c.l.b16 %v2772
      %v2815 = vunpack.c.l.b16 %v2773
      %v2816 = vunpack.c.l.b16 %v2774
      %v2817 = vunpack.c.l.b16 %v2775
      %v2818 = vunpack.c.l.b16 %v2776
      %v2819 = vunpack.c.l.b16 %v2777
      %v2820 = vunpack.c.l.b16 %v2778
      %v2821 = vunpack.c.l.b16 %v2779
      %v2822 = vunpack.c.l.b16 %v2780
      %v2823 = vpack.c.b16 %v2804, %v2803
      %v2824 = vpack.c.b16 %v2806, %v2805
      %v2825 = vpack.c.b16 %v2808, %v2807
      %v2826 = vpack.c.b16 %v2810, %v2809
      %v2827 = vpack.c.b16 %v2812, %v2811
      %v2828 = vpack.c.b16 %v2814, %v2813
      %v2829 = vpack.c.b16 %v2816, %v2815
      %v2830 = vpack.c.b16 %v2818, %v2817
      %v2831 = vpack.c.b16 %v2820, %v2819
      %v2832 = vpack.c.b16 %v2822, %v2821
      %v2834 = vsel %vm1101, %v2823, 0
      %v2837 = vsel %vm1101, %v2824, 0
      %v2840 = vsel %vm1101, %v2825, 0
      %v2843 = vsel %vm1101, %v2826, 0
      %v2846 = vsel %vm1101, %v2827, 0
      %v2849 = vsel %vm1101, %v2828, 0
      %v2852 = vsel %vm1101, %v2829, 0
      %v2855 = vsel %vm1101, %v2830, 0
      %v2858 = vsel %vm1101, %v2831, 0
      %v2861 = vsel %vm1101, %v2832, 0
      %v2864 = vsel %vm1132, %v2782, 0
      %2866 = vmatprep.subr.bf16.mxu0 0
      %2867 = vmatpush1.bf16.msra.mxu0 %v2864
      %2868 = vmatprep.subr.bf16.mxu0 0
      %2869 = vmatpush1.bf16.msra.mxu0 0
      %2870 = vmatprep.subr.bf16.mxu0 0
      %2871 = vmatpush1.bf16.msra.mxu0 0
      %2872 = vmatprep.subr.bf16.mxu0 0
      %2873 = vmatpush1.bf16.msra.mxu0 0
      %2874 = vmatprep.subr.bf16.mxu0 0
      %2875 = vmatpush1.bf16.msra.mxu0 0
      %2876 = vmatprep.subr.bf16.mxu0 0
      %2877 = vmatpush1.bf16.msra.mxu0 0
      %2878 = vmatprep.subr.bf16.mxu0 0
      %2879 = vmatpush1.bf16.msra.mxu0 0
      %2880 = vmatprep.subr.bf16.mxu0 0
      %2881 = vmatpush1.bf16.msra.mxu0 0
      %2882 = vmatprep.subr.bf16.mxu0 0
      %2883 = vmatpush1.bf16.msra.mxu0 0
      %2884 = vmatprep.subr.bf16.mxu0 0
      %2885 = vmatpush1.bf16.msra.mxu0 0
      %2886 = vmatprep.subr.bf16.mxu0 0
      %2887 = vmatpush1.bf16.msra.mxu0 0
      %2888 = vmatprep.subr.bf16.mxu0 0
      %2889 = vmatpush1.bf16.msra.mxu0 0
      %2890 = vmatprep.subr.bf16.mxu0 0
      %2891 = vmatpush1.bf16.msra.mxu0 0
      %2892 = vmatprep.subr.bf16.mxu0 0
      %2893 = vmatpush1.bf16.msra.mxu0 0
      %2894 = vmatprep.subr.bf16.mxu0 0
      %2895 = vmatpush1.bf16.msra.mxu0 0
      %2896 = vmatprep.subr.bf16.mxu0 0
      %2897 = vmatpush1.bf16.msra.mxu0 0
      %2898 = vmatprep.mubr.bf16.mxu0 0
      %2899 = vmatmul.mubr.bf16.gmra.mrb[0].mxu0 %v2834
      %v2900 = vpop.f32.mrb[0].mxu0
      %v2901 = vadd.f32 0.0, %v2900
      %v2902 = vpop.f32.mrb[0].mxu0
      %v2903 = vpop.f32.mrb[0].mxu0
      %v2904 = vadd.f32 0.0, %v2903
      %v2905 = vpop.f32.mrb[0].mxu0
      %2906 = vmatprep.mubr.bf16.mxu0 0
      %2907 = vmatmul.mubr.bf16.gmra.mrb[0].mxu0 %v2837
      %v2908 = vpop.f32.mrb[0].mxu0
      %v2909 = vadd.f32 0.0, %v2908
      %v2910 = vpop.f32.mrb[0].mxu0
      %v2911 = vpop.f32.mrb[0].mxu0
      %v2912 = vadd.f32 0.0, %v2911
      %v2913 = vpop.f32.mrb[0].mxu0
      %2914 = vmatprep.mubr.bf16.mxu0 0
      %2915 = vmatmul.mubr.bf16.gmra.mrb[0].mxu0 %v2840
      %v2916 = vpop.f32.mrb[0].mxu0
      %v2917 = vadd.f32 0.0, %v2916
      %v2918 = vpop.f32.mrb[0].mxu0
      %v2919 = vpop.f32.mrb[0].mxu0
      %v2920 = vadd.f32 0.0, %v2919
      %v2921 = vpop.f32.mrb[0].mxu0
      %2922 = vmatprep.mubr.bf16.mxu0 0
      %2923 = vmatmul.mubr.bf16.gmra.mrb[0].mxu0 %v2843
      %v2924 = vpop.f32.mrb[0].mxu0
      %v2925 = vadd.f32 0.0, %v2924
      %v2926 = vpop.f32.mrb[0].mxu0
      %v2927 = vpop.f32.mrb[0].mxu0
      %v2928 = vadd.f32 0.0, %v2927
      %v2929 = vpop.f32.mrb[0].mxu0
      %2930 = vmatprep.mubr.bf16.mxu0 0
      %2931 = vmatmul.mubr.bf16.gmra.mrb[0].mxu0 %v2846
      %v2932 = vpop.f32.mrb[0].mxu0
      %v2933 = vadd.f32 0.0, %v2932
      %v2934 = vpop.f32.mrb[0].mxu0
      %v2935 = vpop.f32.mrb[0].mxu0
      %v2936 = vadd.f32 0.0, %v2935
      %v2937 = vpop.f32.mrb[0].mxu0
      %2938 = vmatprep.mubr.bf16.mxu0 0
      %2939 = vmatmul.mubr.bf16.gmra.mrb[0].mxu0 %v2849
      %v2940 = vpop.f32.mrb[0].mxu0
      %v2941 = vadd.f32 0.0, %v2940
      %v2942 = vpop.f32.mrb[0].mxu0
      %v2943 = vpop.f32.mrb[0].mxu0
      %v2944 = vadd.f32 0.0, %v2943
      %v2945 = vpop.f32.mrb[0].mxu0
      %2946 = vmatprep.mubr.bf16.mxu0 0
      %2947 = vmatmul.mubr.bf16.gmra.mrb[0].mxu0 %v2852
      %v2948 = vpop.f32.mrb[0].mxu0
      %v2949 = vadd.f32 0.0, %v2948
      %v2950 = vpop.f32.mrb[0].mxu0
      %v2951 = vpop.f32.mrb[0].mxu0
      %v2952 = vadd.f32 0.0, %v2951
      %v2953 = vpop.f32.mrb[0].mxu0
      %2954 = vmatprep.mubr.bf16.mxu0 0
      %2955 = vmatmul.mubr.bf16.gmra.mrb[0].mxu0 %v2855
      %v2956 = vpop.f32.mrb[0].mxu0
      %v2957 = vadd.f32 0.0, %v2956
      %v2958 = vpop.f32.mrb[0].mxu0
      %v2959 = vpop.f32.mrb[0].mxu0
      %v2960 = vadd.f32 0.0, %v2959
      %v2961 = vpop.f32.mrb[0].mxu0
      %2962 = vmatprep.mubr.bf16.mxu0 0
      %2963 = vmatmul.mubr.bf16.gmra.mrb[0].mxu0 %v2858
      %v2964 = vpop.f32.mrb[0].mxu0
      %v2965 = vadd.f32 0.0, %v2964
      %v2966 = vpop.f32.mrb[0].mxu0
      %v2967 = vpop.f32.mrb[0].mxu0
      %v2968 = vadd.f32 0.0, %v2967
      %v2969 = vpop.f32.mrb[0].mxu0
      %2970 = vmatprep.mubr.bf16.mxu0 0
      %2971 = vmatmul.mubr.bf16.gmra.mrb[0].mxu0 %v2861
      %v2972 = vpop.f32.mrb[0].mxu0
      %v2973 = vadd.f32 0.0, %v2972
      %v2974 = vpop.f32.mrb[0].mxu0
      %v2975 = vpop.f32.mrb[0].mxu0
      %v2976 = vadd.f32 0.0, %v2975
      %v2977 = vpop.f32.mrb[0].mxu0
      %2978 = vdwg.mxu0
      %v2979 = vadd.f32 %v2741, %v2901
      %v2980 = vadd.f32 %v2742, %v2904
      %v2981 = vadd.f32 %v2743, %v2909
      %v2982 = vadd.f32 %v2744, %v2912
      %v2983 = vadd.f32 %v2745, %v2917
      %v2984 = vadd.f32 %v2746, %v2920
      %v2985 = vadd.f32 %v2747, %v2925
      %v2986 = vadd.f32 %v2748, %v2928
      %v2987 = vadd.f32 %v2749, %v2933
      %v2988 = vadd.f32 %v2750, %v2936
      %v2989 = vadd.f32 %v2751, %v2941
      %v2990 = vadd.f32 %v2752, %v2944
      %v2991 = vadd.f32 %v2753, %v2949
      %v2992 = vadd.f32 %v2754, %v2952
      %v2993 = vadd.f32 %v2755, %v2957
      %v2994 = vadd.f32 %v2756, %v2960
      %v2995 = vadd.f32 %v2757, %v2965
      %v2996 = vadd.f32 %v2758, %v2968
      %v2997 = vadd.f32 %v2759, %v2973
      %v2998 = vadd.f32 %v2760, %v2976
      %v2999 = vld [vmem:[%s557] sm:$0xf]
      %v3000 = vld [vmem:[%s557 + $0x4] sm:$0xf]
      %v3001 = vld [vmem:[%s557 + $0x8] sm:$0x1]
      %v3002 = vld [vmem:[%s557 + $0xc] sm:$0xf]
      %v3003 = vld [vmem:[%s557 + $0x10] sm:$0xf]
      %v3004 = vld [vmem:[%s557 + $0x14] sm:$0x1]
      %v3005 = vld [vmem:[%s557 + $0x18] sm:$0xf]
      %v3006 = vld [vmem:[%s557 + $0x1c] sm:$0xf]
      %v3007 = vld [vmem:[%s557 + $0x20] sm:$0x1]
      %v3008 = vld [vmem:[%s557 + $0x24] sm:$0xf]
      %v3009 = vld [vmem:[%s557 + $0x28] sm:$0xf]
      %v3010 = vld [vmem:[%s557 + $0x2c] sm:$0x1]
      %v3011 = vld [vmem:[%s557 + $0x30] sm:$0xf]
      %v3012 = vld [vmem:[%s557 + $0x34] sm:$0xf]
      %v3013 = vld [vmem:[%s557 + $0x38] sm:$0x1]
      %v3014 = vld [vmem:[%s557 + $0x3c] sm:$0xf]
      %v3015 = vld [vmem:[%s557 + $0x40] sm:$0xf]
      %v3016 = vld [vmem:[%s557 + $0x44] sm:$0x1]
      %v3017 = vld [vmem:[%s557 + $0x48] sm:$0xf]
      %v3018 = vld [vmem:[%s557 + $0x4c] sm:$0xf]
      %v3019 = vld [vmem:[%s557 + $0x50] sm:$0x1]
      %v3020 = vld [vmem:[%s557 + $0x54] sm:$0xf]
      %v3021 = vld [vmem:[%s557 + $0x58] sm:$0xf]
      %v3022 = vld [vmem:[%s557 + $0x5c] sm:$0x1]
      %v3023 = vld [vmem:[%s557 + $0x60] sm:$0xf]
      %v3024 = vld [vmem:[%s557 + $0x64] sm:$0xf]
      %v3025 = vld [vmem:[%s557 + $0x68] sm:$0x1]
      %v3026 = vld [vmem:[%s557 + $0x6c] sm:$0xf]
      %v3027 = vld [vmem:[%s557 + $0x70] sm:$0xf]
      %v3028 = vld [vmem:[%s557 + $0x74] sm:$0x1]
      %v3030 = vshrl.u32 %v2999, 16
      %v3032 = vrot.slane %v3030, 4
      %v3033 = vshll.u32 %v2999, 16
      %v3035 = vrot.slane %v3033, 5
      %v3036 = vor.u32 %v3032, %v3035
      %v3037 = vrot.slane %v3036, 4
      %v3039 = vshll.u32 %v3000, 16
      %v3041 = vrot.slane %v3039, 5
      %v3042 = vsel %vm828, %v3037, %v3041
      %v3043 = vshrl.u32 %v3000, 16
      %v3045 = vrot.slane %v3043, 4
      %v3046 = vor.u32 %v3045, %v3041
      %v3047 = vrot.slane %v3046, 4
      %v3049 = vshll.u32 %v3001, 16
      %v3051 = vrot.slane %v3049, 5
      %v3052 = vsel %vm828, %v3047, %v3051
      %v3054 = vshrl.u32 %v3002, 16
      %v3056 = vrot.slane %v3054, 4
      %v3057 = vshll.u32 %v3002, 16
      %v3059 = vrot.slane %v3057, 5
      %v3060 = vor.u32 %v3056, %v3059
      %v3061 = vrot.slane %v3060, 4
      %v3063 = vshll.u32 %v3003, 16
      %v3065 = vrot.slane %v3063, 5
      %v3066 = vsel %vm828, %v3061, %v3065
      %v3067 = vshrl.u32 %v3003, 16
      %v3069 = vrot.slane %v3067, 4
      %v3070 = vor.u32 %v3069, %v3065
      %v3071 = vrot.slane %v3070, 4
      %v3073 = vshll.u32 %v3004, 16
      %v3075 = vrot.slane %v3073, 5
      %v3076 = vsel %vm828, %v3071, %v3075
      %v3078 = vshrl.u32 %v3005, 16
      %v3080 = vrot.slane %v3078, 4
      %v3081 = vshll.u32 %v3005, 16
      %v3083 = vrot.slane %v3081, 5
      %v3084 = vor.u32 %v3080, %v3083
      %v3085 = vrot.slane %v3084, 4
      %v3087 = vshll.u32 %v3006, 16
      %v3089 = vrot.slane %v3087, 5
      %v3090 = vsel %vm828, %v3085, %v3089
      %v3091 = vshrl.u32 %v3006, 16
      %v3093 = vrot.slane %v3091, 4
      %v3094 = vor.u32 %v3093, %v3089
      %v3095 = vrot.slane %v3094, 4
      %v3097 = vshll.u32 %v3007, 16
      %v3099 = vrot.slane %v3097, 5
      %v3100 = vsel %vm828, %v3095, %v3099
      %v3102 = vshrl.u32 %v3008, 16
      %v3104 = vrot.slane %v3102, 4
      %v3105 = vshll.u32 %v3008, 16
      %v3107 = vrot.slane %v3105, 5
      %v3108 = vor.u32 %v3104, %v3107
      %v3109 = vrot.slane %v3108, 4
      %v3111 = vshll.u32 %v3009, 16
      %v3113 = vrot.slane %v3111, 5
      %v3114 = vsel %vm828, %v3109, %v3113
      %v3115 = vshrl.u32 %v3009, 16
      %v3117 = vrot.slane %v3115, 4
      %v3118 = vor.u32 %v3117, %v3113
      %v3119 = vrot.slane %v3118, 4
      %v3121 = vshll.u32 %v3010, 16
      %v3123 = vrot.slane %v3121, 5
      %v3124 = vsel %vm828, %v3119, %v3123
      %v3126 = vshrl.u32 %v3011, 16
      %v3128 = vrot.slane %v3126, 4
      %v3129 = vshll.u32 %v3011, 16
      %v3131 = vrot.slane %v3129, 5
      %v3132 = vor.u32 %v3128, %v3131
      %v3133 = vrot.slane %v3132, 4
      %v3135 = vshll.u32 %v3012, 16
      %v3137 = vrot.slane %v3135, 5
      %v3138 = vsel %vm828, %v3133, %v3137
      %v3139 = vshrl.u32 %v3012, 16
      %v3141 = vrot.slane %v3139, 4
      %v3142 = vor.u32 %v3141, %v3137
      %v3143 = vrot.slane %v3142, 4
      %v3145 = vshll.u32 %v3013, 16
      %v3147 = vrot.slane %v3145, 5
      %v3148 = vsel %vm828, %v3143, %v3147
      %v3150 = vshrl.u32 %v3014, 16
      %v3152 = vrot.slane %v3150, 4
      %v3153 = vshll.u32 %v3014, 16
      %v3155 = vrot.slane %v3153, 5
      %v3156 = vor.u32 %v3152, %v3155
      %v3157 = vrot.slane %v3156, 4
      %v3159 = vshll.u32 %v3015, 16
      %v3161 = vrot.slane %v3159, 5
      %v3162 = vsel %vm828, %v3157, %v3161
      %v3163 = vshrl.u32 %v3015, 16
      %v3165 = vrot.slane %v3163, 4
      %v3166 = vor.u32 %v3165, %v3161
      %v3167 = vrot.slane %v3166, 4
      %v3169 = vshll.u32 %v3016, 16
      %v3171 = vrot.slane %v3169, 5
      %v3172 = vsel %vm828, %v3167, %v3171
      %v3174 = vshrl.u32 %v3017, 16
      %v3176 = vrot.slane %v3174, 4
      %v3177 = vshll.u32 %v3017, 16
      %v3179 = vrot.slane %v3177, 5
      %v3180 = vor.u32 %v3176, %v3179
      %v3181 = vrot.slane %v3180, 4
      %v3183 = vshll.u32 %v3018, 16
      %v3185 = vrot.slane %v3183, 5
      %v3186 = vsel %vm828, %v3181, %v3185
      %v3187 = vshrl.u32 %v3018, 16
      %v3189 = vrot.slane %v3187, 4
      %v3190 = vor.u32 %v3189, %v3185
      %v3191 = vrot.slane %v3190, 4
      %v3193 = vshll.u32 %v3019, 16
      %v3195 = vrot.slane %v3193, 5
      %v3196 = vsel %vm828, %v3191, %v3195
      %v3198 = vshrl.u32 %v3020, 16
      %v3200 = vrot.slane %v3198, 4
      %v3201 = vshll.u32 %v3020, 16
      %v3203 = vrot.slane %v3201, 5
      %v3204 = vor.u32 %v3200, %v3203
      %v3205 = vrot.slane %v3204, 4
      %v3207 = vshll.u32 %v3021, 16
      %v3209 = vrot.slane %v3207, 5
      %v3210 = vsel %vm828, %v3205, %v3209
      %v3211 = vshrl.u32 %v3021, 16
      %v3213 = vrot.slane %v3211, 4
      %v3214 = vor.u32 %v3213, %v3209
      %v3215 = vrot.slane %v3214, 4
      %v3217 = vshll.u32 %v3022, 16
      %v3219 = vrot.slane %v3217, 5
      %v3220 = vsel %vm828, %v3215, %v3219
      %v3222 = vshrl.u32 %v3023, 16
      %v3224 = vrot.slane %v3222, 4
      %v3225 = vshll.u32 %v3023, 16
      %v3227 = vrot.slane %v3225, 5
      %v3228 = vor.u32 %v3224, %v3227
      %v3229 = vrot.slane %v3228, 4
      %v3231 = vshll.u32 %v3024, 16
      %v3233 = vrot.slane %v3231, 5
      %v3234 = vsel %vm828, %v3229, %v3233
      %v3235 = vshrl.u32 %v3024, 16
      %v3237 = vrot.slane %v3235, 4
      %v3238 = vor.u32 %v3237, %v3233
      %v3239 = vrot.slane %v3238, 4
      %v3241 = vshll.u32 %v3025, 16
      %v3243 = vrot.slane %v3241, 5
      %v3244 = vsel %vm828, %v3239, %v3243
      %v3246 = vshrl.u32 %v3026, 16
      %v3248 = vrot.slane %v3246, 4
      %v3249 = vshll.u32 %v3026, 16
      %v3251 = vrot.slane %v3249, 5
      %v3252 = vor.u32 %v3248, %v3251
      %v3253 = vrot.slane %v3252, 4
      %v3255 = vshll.u32 %v3027, 16
      %v3257 = vrot.slane %v3255, 5
      %v3258 = vsel %vm828, %v3253, %v3257
      %v3259 = vshrl.u32 %v3027, 16
      %v3261 = vrot.slane %v3259, 4
      %v3262 = vor.u32 %v3261, %v3257
      %v3263 = vrot.slane %v3262, 4
      %v3265 = vshll.u32 %v3028, 16
      %v3267 = vrot.slane %v3265, 5
      %v3268 = vsel %vm828, %v3263, %v3267
      %s3269 = scalar_lea.vmem %s1, 14
      %v3270 = vld [vmem:[%s3269] sm:$0x3]
      %v3271 = vunpack.c.l.b16 %v3042
      %v3272 = vunpack.c.l.b16 %v3052
      %v3273 = vunpack.c.l.b16 %v3066
      %v3274 = vunpack.c.l.b16 %v3076
      %v3275 = vunpack.c.l.b16 %v3090
      %v3276 = vunpack.c.l.b16 %v3100
      %v3277 = vunpack.c.l.b16 %v3114
      %v3278 = vunpack.c.l.b16 %v3124
      %v3279 = vunpack.c.l.b16 %v3138
      %v3280 = vunpack.c.l.b16 %v3148
      %v3281 = vunpack.c.l.b16 %v3162
      %v3282 = vunpack.c.l.b16 %v3172
      %v3283 = vunpack.c.l.b16 %v3186
      %v3284 = vunpack.c.l.b16 %v3196
      %v3285 = vunpack.c.l.b16 %v3210
      %v3286 = vunpack.c.l.b16 %v3220
      %v3287 = vunpack.c.l.b16 %v3234
      %v3288 = vunpack.c.l.b16 %v3244
      %v3289 = vunpack.c.l.b16 %v3258
      %v3290 = vunpack.c.l.b16 %v3268
      %v3291 = vpack.c.b16 %v3272, %v3271
      %v3292 = vpack.c.b16 %v3274, %v3273
      %v3293 = vpack.c.b16 %v3276, %v3275
      %v3294 = vpack.c.b16 %v3278, %v3277
      %v3295 = vpack.c.b16 %v3280, %v3279
      %v3296 = vpack.c.b16 %v3282, %v3281
      %v3297 = vpack.c.b16 %v3284, %v3283
      %v3298 = vpack.c.b16 %v3286, %v3285
      %v3299 = vpack.c.b16 %v3288, %v3287
      %v3300 = vpack.c.b16 %v3290, %v3289
      %v3302 = vsel %vm1101, %v3291, 0
      %v3305 = vsel %vm1101, %v3292, 0
      %v3308 = vsel %vm1101, %v3293, 0
      %v3311 = vsel %vm1101, %v3294, 0
      %v3314 = vsel %vm1101, %v3295, 0
      %v3317 = vsel %vm1101, %v3296, 0
      %v3320 = vsel %vm1101, %v3297, 0
      %v3323 = vsel %vm1101, %v3298, 0
      %v3326 = vsel %vm1101, %v3299, 0
      %v3329 = vsel %vm1101, %v3300, 0
      %v3332 = vsel %vm1132, %v3270, 0
      %3334 = vmatprep.subr.bf16.mxu0 0
      %3335 = vmatpush1.bf16.msra.mxu0 %v3332
      %3336 = vmatprep.subr.bf16.mxu0 0
      %3337 = vmatpush1.bf16.msra.mxu0 0
      %3338 = vmatprep.subr.bf16.mxu0 0
      %3339 = vmatpush1.bf16.msra.mxu0 0
      %3340 = vmatprep.subr.bf16.mxu0 0
      %3341 = vmatpush1.bf16.msra.mxu0 0
      %3342 = vmatprep.subr.bf16.mxu0 0
      %3343 = vmatpush1.bf16.msra.mxu0 0
      %3344 = vmatprep.subr.bf16.mxu0 0
      %3345 = vmatpush1.bf16.msra.mxu0 0
      %3346 = vmatprep.subr.bf16.mxu0 0
      %3347 = vmatpush1.bf16.msra.mxu0 0
      %3348 = vmatprep.subr.bf16.mxu0 0
      %3349 = vmatpush1.bf16.msra.mxu0 0
      %3350 = vmatprep.subr.bf16.mxu0 0
      %3351 = vmatpush1.bf16.msra.mxu0 0
      %3352 = vmatprep.subr.bf16.mxu0 0
      %3353 = vmatpush1.bf16.msra.mxu0 0
      %3354 = vmatprep.subr.bf16.mxu0 0
      %3355 = vmatpush1.bf16.msra.mxu0 0
      %3356 = vmatprep.subr.bf16.mxu0 0
      %3357 = vmatpush1.bf16.msra.mxu0 0
      %3358 = vmatprep.subr.bf16.mxu0 0
      %3359 = vmatpush1.bf16.msra.mxu0 0
      %3360 = vmatprep.subr.bf16.mxu0 0
      %3361 = vmatpush1.bf16.msra.mxu0 0
      %3362 = vmatprep.subr.bf16.mxu0 0
      %3363 = vmatpush1.bf16.msra.mxu0 0
      %3364 = vmatprep.subr.bf16.mxu0 0
      %3365 = vmatpush1.bf16.msra.mxu0 0
      %3366 = vmatprep.mubr.bf16.mxu0 0
      %3367 = vmatmul.mubr.bf16.gmra.mrb[0].mxu0 %v3302
      %v3368 = vpop.f32.mrb[0].mxu0
      %v3369 = vadd.f32 0.0, %v3368
      %v3370 = vpop.f32.mrb[0].mxu0
      %v3371 = vpop.f32.mrb[0].mxu0
      %v3372 = vadd.f32 0.0, %v3371
      %v3373 = vpop.f32.mrb[0].mxu0
      %3374 = vmatprep.mubr.bf16.mxu0 0
      %3375 = vmatmul.mubr.bf16.gmra.mrb[0].mxu0 %v3305
      %v3376 = vpop.f32.mrb[0].mxu0
      %v3377 = vadd.f32 0.0, %v3376
      %v3378 = vpop.f32.mrb[0].mxu0
      %v3379 = vpop.f32.mrb[0].mxu0
      %v3380 = vadd.f32 0.0, %v3379
      %v3381 = vpop.f32.mrb[0].mxu0
      %3382 = vmatprep.mubr.bf16.mxu0 0
      %3383 = vmatmul.mubr.bf16.gmra.mrb[0].mxu0 %v3308
      %v3384 = vpop.f32.mrb[0].mxu0
      %v3385 = vadd.f32 0.0, %v3384
      %v3386 = vpop.f32.mrb[0].mxu0
      %v3387 = vpop.f32.mrb[0].mxu0
      %v3388 = vadd.f32 0.0, %v3387
      %v3389 = vpop.f32.mrb[0].mxu0
      %3390 = vmatprep.mubr.bf16.mxu0 0
      %3391 = vmatmul.mubr.bf16.gmra.mrb[0].mxu0 %v3311
      %v3392 = vpop.f32.mrb[0].mxu0
      %v3393 = vadd.f32 0.0, %v3392
      %v3394 = vpop.f32.mrb[0].mxu0
      %v3395 = vpop.f32.mrb[0].mxu0
      %v3396 = vadd.f32 0.0, %v3395
      %v3397 = vpop.f32.mrb[0].mxu0
      %3398 = vmatprep.mubr.bf16.mxu0 0
      %3399 = vmatmul.mubr.bf16.gmra.mrb[0].mxu0 %v3314
      %v3400 = vpop.f32.mrb[0].mxu0
      %v3401 = vadd.f32 0.0, %v3400
      %v3402 = vpop.f32.mrb[0].mxu0
      %v3403 = vpop.f32.mrb[0].mxu0
      %v3404 = vadd.f32 0.0, %v3403
      %v3405 = vpop.f32.mrb[0].mxu0
      %3406 = vmatprep.mubr.bf16.mxu0 0
      %3407 = vmatmul.mubr.bf16.gmra.mrb[0].mxu0 %v3317
      %v3408 = vpop.f32.mrb[0].mxu0
      %v3409 = vadd.f32 0.0, %v3408
      %v3410 = vpop.f32.mrb[0].mxu0
      %v3411 = vpop.f32.mrb[0].mxu0
      %v3412 = vadd.f32 0.0, %v3411
      %v3413 = vpop.f32.mrb[0].mxu0
      %3414 = vmatprep.mubr.bf16.mxu0 0
      %3415 = vmatmul.mubr.bf16.gmra.mrb[0].mxu0 %v3320
      %v3416 = vpop.f32.mrb[0].mxu0
      %v3417 = vadd.f32 0.0, %v3416
      %v3418 = vpop.f32.mrb[0].mxu0
      %v3419 = vpop.f32.mrb[0].mxu0
      %v3420 = vadd.f32 0.0, %v3419
      %v3421 = vpop.f32.mrb[0].mxu0
      %3422 = vmatprep.mubr.bf16.mxu0 0
      %3423 = vmatmul.mubr.bf16.gmra.mrb[0].mxu0 %v3323
      %v3424 = vpop.f32.mrb[0].mxu0
      %v3425 = vadd.f32 0.0, %v3424
      %v3426 = vpop.f32.mrb[0].mxu0
      %v3427 = vpop.f32.mrb[0].mxu0
      %v3428 = vadd.f32 0.0, %v3427
      %v3429 = vpop.f32.mrb[0].mxu0
      %3430 = vmatprep.mubr.bf16.mxu0 0
      %3431 = vmatmul.mubr.bf16.gmra.mrb[0].mxu0 %v3326
      %v3432 = vpop.f32.mrb[0].mxu0
      %v3433 = vadd.f32 0.0, %v3432
      %v3434 = vpop.f32.mrb[0].mxu0
      %v3435 = vpop.f32.mrb[0].mxu0
      %v3436 = vadd.f32 0.0, %v3435
      %v3437 = vpop.f32.mrb[0].mxu0
      %3438 = vmatprep.mubr.bf16.mxu0 0
      %3439 = vmatmul.mubr.bf16.gmra.mrb[0].mxu0 %v3329
      %v3440 = vpop.f32.mrb[0].mxu0
      %v3441 = vadd.f32 0.0, %v3440
      %v3442 = vpop.f32.mrb[0].mxu0
      %v3443 = vpop.f32.mrb[0].mxu0
      %v3444 = vadd.f32 0.0, %v3443
      %v3445 = vpop.f32.mrb[0].mxu0
      %3446 = vdwg.mxu0
      %v3447 = vadd.f32 %v2979, %v3369
      %v3448 = vadd.f32 %v2980, %v3372
      %v3449 = vadd.f32 %v2981, %v3377
      %v3450 = vadd.f32 %v2982, %v3380
      %v3451 = vadd.f32 %v2983, %v3385
      %v3452 = vadd.f32 %v2984, %v3388
      %v3453 = vadd.f32 %v2985, %v3393
      %v3454 = vadd.f32 %v2986, %v3396
      %v3455 = vadd.f32 %v2987, %v3401
      %v3456 = vadd.f32 %v2988, %v3404
      %v3457 = vadd.f32 %v2989, %v3409
      %v3458 = vadd.f32 %v2990, %v3412
      %v3459 = vadd.f32 %v2991, %v3417
      %v3460 = vadd.f32 %v2992, %v3420
      %v3461 = vadd.f32 %v2993, %v3425
      %v3462 = vadd.f32 %v2994, %v3428
      %v3463 = vadd.f32 %v2995, %v3433
      %v3464 = vadd.f32 %v2996, %v3436
      %v3465 = vadd.f32 %v2997, %v3441
      %v3466 = vadd.f32 %v2998, %v3444
      %v3467 = vld [vmem:[%s557] sm:$0xe]
      %v3468 = vld [vmem:[%s557 + $0xc] sm:$0xe]
      %v3469 = vld [vmem:[%s557 + $0x18] sm:$0xe]
      %v3470 = vld [vmem:[%s557 + $0x24] sm:$0xe]
      %v3471 = vld [vmem:[%s557 + $0x30] sm:$0xe]
      %v3472 = vld [vmem:[%s557 + $0x3c] sm:$0xe]
      %v3473 = vld [vmem:[%s557 + $0x48] sm:$0xe]
      %v3474 = vld [vmem:[%s557 + $0x54] sm:$0xe]
      %v3475 = vld [vmem:[%s557 + $0x60] sm:$0xe]
      %v3476 = vld [vmem:[%s557 + $0x6c] sm:$0xe]
      %v3507 = vrot.slane %v3467, 5
      %v3508 = vrot.slane %v3507, 4
      %v3509 = vrot.slane %v3000, 5
      %v3510 = vsel %vm1477, %v3508, %v3509
      %v3511 = vrot.slane %v3509, 4
      %v3512 = vrot.slane %v3001, 5
      %v3513 = vsel %vm1477, %v3511, %v3512
      %v3514 = vrot.slane %v3468, 5
      %v3515 = vrot.slane %v3514, 4
      %v3516 = vrot.slane %v3003, 5
      %v3517 = vsel %vm1477, %v3515, %v3516
      %v3518 = vrot.slane %v3516, 4
      %v3519 = vrot.slane %v3004, 5
      %v3520 = vsel %vm1477, %v3518, %v3519
      %v3521 = vrot.slane %v3469, 5
      %v3522 = vrot.slane %v3521, 4
      %v3523 = vrot.slane %v3006, 5
      %v3524 = vsel %vm1477, %v3522, %v3523
      %v3525 = vrot.slane %v3523, 4
      %v3526 = vrot.slane %v3007, 5
      %v3527 = vsel %vm1477, %v3525, %v3526
      %v3528 = vrot.slane %v3470, 5
      %v3529 = vrot.slane %v3528, 4
      %v3530 = vrot.slane %v3009, 5
      %v3531 = vsel %vm1477, %v3529, %v3530
      %v3532 = vrot.slane %v3530, 4
      %v3533 = vrot.slane %v3010, 5
      %v3534 = vsel %vm1477, %v3532, %v3533
      %v3535 = vrot.slane %v3471, 5
      %v3536 = vrot.slane %v3535, 4
      %v3537 = vrot.slane %v3012, 5
      %v3538 = vsel %vm1477, %v3536, %v3537
      %v3539 = vrot.slane %v3537, 4
      %v3540 = vrot.slane %v3013, 5
      %v3541 = vsel %vm1477, %v3539, %v3540
      %v3542 = vrot.slane %v3472, 5
      %v3543 = vrot.slane %v3542, 4
      %v3544 = vrot.slane %v3015, 5
      %v3545 = vsel %vm1477, %v3543, %v3544
      %v3546 = vrot.slane %v3544, 4
      %v3547 = vrot.slane %v3016, 5
      %v3548 = vsel %vm1477, %v3546, %v3547
      %v3549 = vrot.slane %v3473, 5
      %v3550 = vrot.slane %v3549, 4
      %v3551 = vrot.slane %v3018, 5
      %v3552 = vsel %vm1477, %v3550, %v3551
      %v3553 = vrot.slane %v3551, 4
      %v3554 = vrot.slane %v3019, 5
      %v3555 = vsel %vm1477, %v3553, %v3554
      %v3556 = vrot.slane %v3474, 5
      %v3557 = vrot.slane %v3556, 4
      %v3558 = vrot.slane %v3021, 5
      %v3559 = vsel %vm1477, %v3557, %v3558
      %v3560 = vrot.slane %v3558, 4
      %v3561 = vrot.slane %v3022, 5
      %v3562 = vsel %vm1477, %v3560, %v3561
      %v3563 = vrot.slane %v3475, 5
      %v3564 = vrot.slane %v3563, 4
      %v3565 = vrot.slane %v3024, 5
      %v3566 = vsel %vm1477, %v3564, %v3565
      %v3567 = vrot.slane %v3565, 4
      %v3568 = vrot.slane %v3025, 5
      %v3569 = vsel %vm1477, %v3567, %v3568
      %v3570 = vrot.slane %v3476, 5
      %v3571 = vrot.slane %v3570, 4
      %v3572 = vrot.slane %v3027, 5
      %v3573 = vsel %vm1477, %v3571, %v3572
      %v3574 = vrot.slane %v3572, 4
      %v3575 = vrot.slane %v3028, 5
      %v3576 = vsel %vm1477, %v3574, %v3575
      %s3577 = scalar_lea.vmem %s1, 16
      %v3578 = vld [vmem:[%s3577] sm:$0x3]
      %v3579 = vunpack.c.l.b16 %v3510
      %v3580 = vunpack.c.l.b16 %v3513
      %v3581 = vunpack.c.l.b16 %v3517
      %v3582 = vunpack.c.l.b16 %v3520
      %v3583 = vunpack.c.l.b16 %v3524
      %v3584 = vunpack.c.l.b16 %v3527
      %v3585 = vunpack.c.l.b16 %v3531
      %v3586 = vunpack.c.l.b16 %v3534
      %v3587 = vunpack.c.l.b16 %v3538
      %v3588 = vunpack.c.l.b16 %v3541
      %v3589 = vunpack.c.l.b16 %v3545
      %v3590 = vunpack.c.l.b16 %v3548
      %v3591 = vunpack.c.l.b16 %v3552
      %v3592 = vunpack.c.l.b16 %v3555
      %v3593 = vunpack.c.l.b16 %v3559
      %v3594 = vunpack.c.l.b16 %v3562
      %v3595 = vunpack.c.l.b16 %v3566
      %v3596 = vunpack.c.l.b16 %v3569
      %v3597 = vunpack.c.l.b16 %v3573
      %v3598 = vunpack.c.l.b16 %v3576
      %v3599 = vpack.c.b16 %v3580, %v3579
      %v3600 = vpack.c.b16 %v3582, %v3581
      %v3601 = vpack.c.b16 %v3584, %v3583
      %v3602 = vpack.c.b16 %v3586, %v3585
      %v3603 = vpack.c.b16 %v3588, %v3587
      %v3604 = vpack.c.b16 %v3590, %v3589
      %v3605 = vpack.c.b16 %v3592, %v3591
      %v3606 = vpack.c.b16 %v3594, %v3593
      %v3607 = vpack.c.b16 %v3596, %v3595
      %v3608 = vpack.c.b16 %v3598, %v3597
      %v3610 = vsel %vm1101, %v3599, 0
      %v3613 = vsel %vm1101, %v3600, 0
      %v3616 = vsel %vm1101, %v3601, 0
      %v3619 = vsel %vm1101, %v3602, 0
      %v3622 = vsel %vm1101, %v3603, 0
      %v3625 = vsel %vm1101, %v3604, 0
      %v3628 = vsel %vm1101, %v3605, 0
      %v3631 = vsel %vm1101, %v3606, 0
      %v3634 = vsel %vm1101, %v3607, 0
      %v3637 = vsel %vm1101, %v3608, 0
      %v3640 = vsel %vm1132, %v3578, 0
      %3642 = vmatprep.subr.bf16.mxu0 0
      %3643 = vmatpush1.bf16.msra.mxu0 %v3640
      %3644 = vmatprep.subr.bf16.mxu0 0
      %3645 = vmatpush1.bf16.msra.mxu0 0
      %3646 = vmatprep.subr.bf16.mxu0 0
      %3647 = vmatpush1.bf16.msra.mxu0 0
      %3648 = vmatprep.subr.bf16.mxu0 0
      %3649 = vmatpush1.bf16.msra.mxu0 0
      %3650 = vmatprep.subr.bf16.mxu0 0
      %3651 = vmatpush1.bf16.msra.mxu0 0
      %3652 = vmatprep.subr.bf16.mxu0 0
      %3653 = vmatpush1.bf16.msra.mxu0 0
      %3654 = vmatprep.subr.bf16.mxu0 0
      %3655 = vmatpush1.bf16.msra.mxu0 0
      %3656 = vmatprep.subr.bf16.mxu0 0
      %3657 = vmatpush1.bf16.msra.mxu0 0
      %3658 = vmatprep.subr.bf16.mxu0 0
      %3659 = vmatpush1.bf16.msra.mxu0 0
      %3660 = vmatprep.subr.bf16.mxu0 0
      %3661 = vmatpush1.bf16.msra.mxu0 0
      %3662 = vmatprep.subr.bf16.mxu0 0
      %3663 = vmatpush1.bf16.msra.mxu0 0
      %3664 = vmatprep.subr.bf16.mxu0 0
      %3665 = vmatpush1.bf16.msra.mxu0 0
      %3666 = vmatprep.subr.bf16.mxu0 0
      %3667 = vmatpush1.bf16.msra.mxu0 0
      %3668 = vmatprep.subr.bf16.mxu0 0
      %3669 = vmatpush1.bf16.msra.mxu0 0
      %3670 = vmatprep.subr.bf16.mxu0 0
      %3671 = vmatpush1.bf16.msra.mxu0 0
      %3672 = vmatprep.subr.bf16.mxu0 0
      %3673 = vmatpush1.bf16.msra.mxu0 0
      %3674 = vmatprep.mubr.bf16.mxu0 0
      %3675 = vmatmul.mubr.bf16.gmra.mrb[0].mxu0 %v3610
      %v3676 = vpop.f32.mrb[0].mxu0
      %v3677 = vadd.f32 0.0, %v3676
      %v3678 = vpop.f32.mrb[0].mxu0
      %v3679 = vpop.f32.mrb[0].mxu0
      %v3680 = vadd.f32 0.0, %v3679
      %v3681 = vpop.f32.mrb[0].mxu0
      %3682 = vmatprep.mubr.bf16.mxu0 0
      %3683 = vmatmul.mubr.bf16.gmra.mrb[0].mxu0 %v3613
      %v3684 = vpop.f32.mrb[0].mxu0
      %v3685 = vadd.f32 0.0, %v3684
      %v3686 = vpop.f32.mrb[0].mxu0
      %v3687 = vpop.f32.mrb[0].mxu0
      %v3688 = vadd.f32 0.0, %v3687
      %v3689 = vpop.f32.mrb[0].mxu0
      %3690 = vmatprep.mubr.bf16.mxu0 0
      %3691 = vmatmul.mubr.bf16.gmra.mrb[0].mxu0 %v3616
      %v3692 = vpop.f32.mrb[0].mxu0
      %v3693 = vadd.f32 0.0, %v3692
      %v3694 = vpop.f32.mrb[0].mxu0
      %v3695 = vpop.f32.mrb[0].mxu0
      %v3696 = vadd.f32 0.0, %v3695
      %v3697 = vpop.f32.mrb[0].mxu0
      %3698 = vmatprep.mubr.bf16.mxu0 0
      %3699 = vmatmul.mubr.bf16.gmra.mrb[0].mxu0 %v3619
      %v3700 = vpop.f32.mrb[0].mxu0
      %v3701 = vadd.f32 0.0, %v3700
      %v3702 = vpop.f32.mrb[0].mxu0
      %v3703 = vpop.f32.mrb[0].mxu0
      %v3704 = vadd.f32 0.0, %v3703
      %v3705 = vpop.f32.mrb[0].mxu0
      %3706 = vmatprep.mubr.bf16.mxu0 0
      %3707 = vmatmul.mubr.bf16.gmra.mrb[0].mxu0 %v3622
      %v3708 = vpop.f32.mrb[0].mxu0
      %v3709 = vadd.f32 0.0, %v3708
      %v3710 = vpop.f32.mrb[0].mxu0
      %v3711 = vpop.f32.mrb[0].mxu0
      %v3712 = vadd.f32 0.0, %v3711
      %v3713 = vpop.f32.mrb[0].mxu0
      %3714 = vmatprep.mubr.bf16.mxu0 0
      %3715 = vmatmul.mubr.bf16.gmra.mrb[0].mxu0 %v3625
      %v3716 = vpop.f32.mrb[0].mxu0
      %v3717 = vadd.f32 0.0, %v3716
      %v3718 = vpop.f32.mrb[0].mxu0
      %v3719 = vpop.f32.mrb[0].mxu0
      %v3720 = vadd.f32 0.0, %v3719
      %v3721 = vpop.f32.mrb[0].mxu0
      %3722 = vmatprep.mubr.bf16.mxu0 0
      %3723 = vmatmul.mubr.bf16.gmra.mrb[0].mxu0 %v3628
      %v3724 = vpop.f32.mrb[0].mxu0
      %v3725 = vadd.f32 0.0, %v3724
      %v3726 = vpop.f32.mrb[0].mxu0
      %v3727 = vpop.f32.mrb[0].mxu0
      %v3728 = vadd.f32 0.0, %v3727
      %v3729 = vpop.f32.mrb[0].mxu0
      %3730 = vmatprep.mubr.bf16.mxu0 0
      %3731 = vmatmul.mubr.bf16.gmra.mrb[0].mxu0 %v3631
      %v3732 = vpop.f32.mrb[0].mxu0
      %v3733 = vadd.f32 0.0, %v3732
      %v3734 = vpop.f32.mrb[0].mxu0
      %v3735 = vpop.f32.mrb[0].mxu0
      %v3736 = vadd.f32 0.0, %v3735
      %v3737 = vpop.f32.mrb[0].mxu0
      %3738 = vmatprep.mubr.bf16.mxu0 0
      %3739 = vmatmul.mubr.bf16.gmra.mrb[0].mxu0 %v3634
      %v3740 = vpop.f32.mrb[0].mxu0
      %v3741 = vadd.f32 0.0, %v3740
      %v3742 = vpop.f32.mrb[0].mxu0
      %v3743 = vpop.f32.mrb[0].mxu0
      %v3744 = vadd.f32 0.0, %v3743
      %v3745 = vpop.f32.mrb[0].mxu0
      %3746 = vmatprep.mubr.bf16.mxu0 0
      %3747 = vmatmul.mubr.bf16.gmra.mrb[0].mxu0 %v3637
      %v3748 = vpop.f32.mrb[0].mxu0
      %v3749 = vadd.f32 0.0, %v3748
      %v3750 = vpop.f32.mrb[0].mxu0
      %v3751 = vpop.f32.mrb[0].mxu0
      %v3752 = vadd.f32 0.0, %v3751
      %v3753 = vpop.f32.mrb[0].mxu0
      %3754 = vdwg.mxu0
      %v3755 = vadd.f32 %v3447, %v3677
      %v3756 = vadd.f32 %v3448, %v3680
      %v3757 = vadd.f32 %v3449, %v3685
      %v3758 = vadd.f32 %v3450, %v3688
      %v3759 = vadd.f32 %v3451, %v3693
      %v3760 = vadd.f32 %v3452, %v3696
      %v3761 = vadd.f32 %v3453, %v3701
      %v3762 = vadd.f32 %v3454, %v3704
      %v3763 = vadd.f32 %v3455, %v3709
      %v3764 = vadd.f32 %v3456, %v3712
      %v3765 = vadd.f32 %v3457, %v3717
      %v3766 = vadd.f32 %v3458, %v3720
      %v3767 = vadd.f32 %v3459, %v3725
      %v3768 = vadd.f32 %v3460, %v3728
      %v3769 = vadd.f32 %v3461, %v3733
      %v3770 = vadd.f32 %v3462, %v3736
      %v3771 = vadd.f32 %v3463, %v3741
      %v3772 = vadd.f32 %v3464, %v3744
      %v3773 = vadd.f32 %v3465, %v3749
      %v3774 = vadd.f32 %v3466, %v3752
      %v3775 = vld [vmem:[%s2] sm:$0x1]
      %v3777 = vlaneseq
      %v3778 = vshrl.u32 %v3777, 7
      %v3779 = vsub.s32 0, %v3778
      %v3780 = vrot.slane %v3775, %v3779
      %v3782 = vadd.f32 %v3755, %v3780
      %v3783 = vadd.f32 %v3756, %v3780
      %v3784 = vadd.f32 %v3757, %v3780
      %v3785 = vadd.f32 %v3758, %v3780
      %v3786 = vadd.f32 %v3759, %v3780
      %v3787 = vadd.f32 %v3760, %v3780
      %v3788 = vadd.f32 %v3761, %v3780
      %v3789 = vadd.f32 %v3762, %v3780
      %v3790 = vadd.f32 %v3763, %v3780
      %v3791 = vadd.f32 %v3764, %v3780
      %v3792 = vadd.f32 %v3765, %v3780
      %v3793 = vadd.f32 %v3766, %v3780
      %v3794 = vadd.f32 %v3767, %v3780
      %v3795 = vadd.f32 %v3768, %v3780
      %v3796 = vadd.f32 %v3769, %v3780
      %v3797 = vadd.f32 %v3770, %v3780
      %v3798 = vadd.f32 %v3771, %v3780
      %v3799 = vadd.f32 %v3772, %v3780
      %v3800 = vadd.f32 %v3773, %v3780
      %v3801 = vadd.f32 %v3774, %v3780
      %v3802 = vmax.f32 %v3782, 0.0
      %v3803 = vmax.f32 %v3783, 0.0
      %v3804 = vmax.f32 %v3784, 0.0
      %v3805 = vmax.f32 %v3785, 0.0
      %v3806 = vmax.f32 %v3786, 0.0
      %v3807 = vmax.f32 %v3787, 0.0
      %v3808 = vmax.f32 %v3788, 0.0
      %v3809 = vmax.f32 %v3789, 0.0
      %v3810 = vmax.f32 %v3790, 0.0
      %v3811 = vmax.f32 %v3791, 0.0
      %v3812 = vmax.f32 %v3792, 0.0
      %v3813 = vmax.f32 %v3793, 0.0
      %v3814 = vmax.f32 %v3794, 0.0
      %v3815 = vmax.f32 %v3795, 0.0
      %v3816 = vmax.f32 %v3796, 0.0
      %v3817 = vmax.f32 %v3797, 0.0
      %v3818 = vmax.f32 %v3798, 0.0
      %v3819 = vmax.f32 %v3799, 0.0
      %v3820 = vmax.f32 %v3800, 0.0
      %v3821 = vmax.f32 %v3801, 0.0
      %v3822 = vld [vmem:[#allocation3] sm:$0x1]
      %v3823 = vsel %vm272, 0, %v3822
      %3824 = vst [vmem:[#allocation3] sm:$0x1] %v3823
      %v3825 = vld [vmem:[#allocation3 + $0xc] sm:$0x1]
      %v3826 = vsel %vm272, 0, %v3825
      %3827 = vst [vmem:[#allocation3 + $0xc] sm:$0x1] %v3826
      %v3828 = vld [vmem:[#allocation3 + $0x18] sm:$0x1]
      %v3829 = vsel %vm272, 0, %v3828
      %3830 = vst [vmem:[#allocation3 + $0x18] sm:$0x1] %v3829
      %v3831 = vld [vmem:[#allocation3 + $0x24] sm:$0x1]
      %v3832 = vsel %vm272, 0, %v3831
      %3833 = vst [vmem:[#allocation3 + $0x24] sm:$0x1] %v3832
      %v3834 = vld [vmem:[#allocation3 + $0x30] sm:$0x1]
      %v3835 = vsel %vm272, 0, %v3834
      %3836 = vst [vmem:[#allocation3 + $0x30] sm:$0x1] %v3835
      %v3837 = vld [vmem:[#allocation3 + $0x3c] sm:$0x1]
      %v3838 = vsel %vm272, 0, %v3837
      %3839 = vst [vmem:[#allocation3 + $0x3c] sm:$0x1] %v3838
      %v3840 = vld [vmem:[#allocation3 + $0x48] sm:$0x1]
      %v3841 = vsel %vm272, 0, %v3840
      %3842 = vst [vmem:[#allocation3 + $0x48] sm:$0x1] %v3841
      %v3843 = vld [vmem:[#allocation3 + $0x54] sm:$0x1]
      %v3844 = vsel %vm272, 0, %v3843
      %3845 = vst [vmem:[#allocation3 + $0x54] sm:$0x1] %v3844
      %v3846 = vld [vmem:[#allocation3 + $0x60] sm:$0x1]
      %v3847 = vsel %vm272, 0, %v3846
      %3848 = vst [vmem:[#allocation3 + $0x60] sm:$0x1] %v3847
      %v3849 = vld [vmem:[#allocation3 + $0x6c] sm:$0x1]
      %v3850 = vsel %vm272, 0, %v3849
      %3851 = vst [vmem:[#allocation3 + $0x6c] sm:$0x1] %v3850
      %v3852 = vld [vmem:[#allocation3 + $0x8] sm:$0x1]
      %v3853 = vsel %vm310, 0, %v3852
      %3854 = vst [vmem:[#allocation3 + $0x8] sm:$0x1] %v3853
      %v3855 = vld [vmem:[#allocation3 + $0x14] sm:$0x1]
      %v3856 = vsel %vm310, 0, %v3855
      %3857 = vst [vmem:[#allocation3 + $0x14] sm:$0x1] %v3856
      %v3858 = vld [vmem:[#allocation3 + $0x20] sm:$0x1]
      %v3859 = vsel %vm310, 0, %v3858
      %3860 = vst [vmem:[#allocation3 + $0x20] sm:$0x1] %v3859
      %v3861 = vld [vmem:[#allocation3 + $0x2c] sm:$0x1]
      %v3862 = vsel %vm310, 0, %v3861
      %3863 = vst [vmem:[#allocation3 + $0x2c] sm:$0x1] %v3862
      %v3864 = vld [vmem:[#allocation3 + $0x38] sm:$0x1]
      %v3865 = vsel %vm310, 0, %v3864
      %3866 = vst [vmem:[#allocation3 + $0x38] sm:$0x1] %v3865
      %v3867 = vld [vmem:[#allocation3 + $0x44] sm:$0x1]
      %v3868 = vsel %vm310, 0, %v3867
      %3869 = vst [vmem:[#allocation3 + $0x44] sm:$0x1] %v3868
      %v3870 = vld [vmem:[#allocation3 + $0x50] sm:$0x1]
      %v3871 = vsel %vm310, 0, %v3870
      %3872 = vst [vmem:[#allocation3 + $0x50] sm:$0x1] %v3871
      %v3873 = vld [vmem:[#allocation3 + $0x5c] sm:$0x1]
      %v3874 = vsel %vm310, 0, %v3873
      %3875 = vst [vmem:[#allocation3 + $0x5c] sm:$0x1] %v3874
      %v3876 = vld [vmem:[#allocation3 + $0x68] sm:$0x1]
      %v3877 = vsel %vm310, 0, %v3876
      %3878 = vst [vmem:[#allocation3 + $0x68] sm:$0x1] %v3877
      %v3879 = vld [vmem:[#allocation3 + $0x74] sm:$0x1]
      %v3880 = vsel %vm310, 0, %v3879
      %3881 = vst [vmem:[#allocation3 + $0x74] sm:$0x1] %v3880
      %v3882 = vpack.c.bf16 %v3803, %v3802
      %v3883 = vpack.c.bf16 %v3805, %v3804
      %v3884 = vpack.c.bf16 %v3807, %v3806
      %v3885 = vpack.c.bf16 %v3809, %v3808
      %v3886 = vpack.c.bf16 %v3811, %v3810
      %v3887 = vpack.c.bf16 %v3813, %v3812
      %v3888 = vpack.c.bf16 %v3815, %v3814
      %v3889 = vpack.c.bf16 %v3817, %v3816
      %v3890 = vpack.c.bf16 %v3819, %v3818
      %v3891 = vpack.c.bf16 %v3821, %v3820
      %v3902 = vunpack.c.l.b16 %v3882
      %v3903 = vunpack.c.h.b16 %v3882
      %v3904 = vunpack.c.l.b16 %v3883
      %v3905 = vunpack.c.h.b16 %v3883
      %v3906 = vunpack.c.l.b16 %v3884
      %v3907 = vunpack.c.h.b16 %v3884
      %v3908 = vunpack.c.l.b16 %v3885
      %v3909 = vunpack.c.h.b16 %v3885
      %v3910 = vunpack.c.l.b16 %v3886
      %v3911 = vunpack.c.h.b16 %v3886
      %v3912 = vunpack.c.l.b16 %v3887
      %v3913 = vunpack.c.h.b16 %v3887
      %v3914 = vunpack.c.l.b16 %v3888
      %v3915 = vunpack.c.h.b16 %v3888
      %v3916 = vunpack.c.l.b16 %v3889
      %v3917 = vunpack.c.h.b16 %v3889
      %v3918 = vunpack.c.l.b16 %v3890
      %v3919 = vunpack.c.h.b16 %v3890
      %v3920 = vunpack.c.l.b16 %v3891
      %v3921 = vunpack.c.h.b16 %v3891
      %v3922 = vpack.c.b16 %v3902, %v3902
      %v3923 = vpack.c.b16 %v3903, %v3903
      %v3924 = vpack.c.b16 %v3904, %v3904
      %v3925 = vpack.c.b16 %v3905, %v3905
      %v3926 = vpack.c.b16 %v3906, %v3906
      %v3927 = vpack.c.b16 %v3907, %v3907
      %v3928 = vpack.c.b16 %v3908, %v3908
      %v3929 = vpack.c.b16 %v3909, %v3909
      %v3930 = vpack.c.b16 %v3910, %v3910
      %v3931 = vpack.c.b16 %v3911, %v3911
      %v3932 = vpack.c.b16 %v3912, %v3912
      %v3933 = vpack.c.b16 %v3913, %v3913
      %v3934 = vpack.c.b16 %v3914, %v3914
      %v3935 = vpack.c.b16 %v3915, %v3915
      %v3936 = vpack.c.b16 %v3916, %v3916
      %v3937 = vpack.c.b16 %v3917, %v3917
      %v3938 = vpack.c.b16 %v3918, %v3918
      %v3939 = vpack.c.b16 %v3919, %v3919
      %v3940 = vpack.c.b16 %v3920, %v3920
      %v3941 = vpack.c.b16 %v3921, %v3921
      %v3943 = vshrl.u32 %v3922, 16
      %v3945 = vrot.slane %v3943, 7
      %v3946 = vshll.u32 %v3922, 16
      %v3948 = vor.u32 %v3945, %v3946
      %v3949 = vrot.slane %v3945, 4
      %v3951 = vshrl.u32 %v3923, 16
      %v3953 = vrot.slane %v3951, 7
      %v3954 = vshll.u32 %v3923, 16
      %v3956 = vor.u32 %v3953, %v3954
      %v3957 = vsel %vm396, %v3949, %v3956
      %v3958 = vrot.slane %v3953, 4
      %v3960 = vshrl.u32 %v3924, 16
      %v3962 = vrot.slane %v3960, 7
      %v3963 = vshll.u32 %v3924, 16
      %v3965 = vor.u32 %v3962, %v3963
      %v3966 = vrot.slane %v3962, 4
      %v3968 = vshrl.u32 %v3925, 16
      %v3970 = vrot.slane %v3968, 7
      %v3971 = vshll.u32 %v3925, 16
      %v3973 = vor.u32 %v3970, %v3971
      %v3974 = vsel %vm396, %v3966, %v3973
      %v3975 = vrot.slane %v3970, 4
      %v3977 = vshrl.u32 %v3926, 16
      %v3979 = vrot.slane %v3977, 7
      %v3980 = vshll.u32 %v3926, 16
      %v3982 = vor.u32 %v3979, %v3980
      %v3983 = vrot.slane %v3979, 4
      %v3985 = vshrl.u32 %v3927, 16
      %v3987 = vrot.slane %v3985, 7
      %v3988 = vshll.u32 %v3927, 16
      %v3990 = vor.u32 %v3987, %v3988
      %v3991 = vsel %vm396, %v3983, %v3990
      %v3992 = vrot.slane %v3987, 4
      %v3994 = vshrl.u32 %v3928, 16
      %v3996 = vrot.slane %v3994, 7
      %v3997 = vshll.u32 %v3928, 16
      %v3999 = vor.u32 %v3996, %v3997
      %v4000 = vrot.slane %v3996, 4
      %v4002 = vshrl.u32 %v3929, 16
      %v4004 = vrot.slane %v4002, 7
      %v4005 = vshll.u32 %v3929, 16
      %v4007 = vor.u32 %v4004, %v4005
      %v4008 = vsel %vm396, %v4000, %v4007
      %v4009 = vrot.slane %v4004, 4
      %v4011 = vshrl.u32 %v3930, 16
      %v4013 = vrot.slane %v4011, 7
      %v4014 = vshll.u32 %v3930, 16
      %v4016 = vor.u32 %v4013, %v4014
      %v4017 = vrot.slane %v4013, 4
      %v4019 = vshrl.u32 %v3931, 16
      %v4021 = vrot.slane %v4019, 7
      %v4022 = vshll.u32 %v3931, 16
      %v4024 = vor.u32 %v4021, %v4022
      %v4025 = vsel %vm396, %v4017, %v4024
      %v4026 = vrot.slane %v4021, 4
      %v4028 = vshrl.u32 %v3932, 16
      %v4030 = vrot.slane %v4028, 7
      %v4031 = vshll.u32 %v3932, 16
      %v4033 = vor.u32 %v4030, %v4031
      %v4034 = vrot.slane %v4030, 4
      %v4036 = vshrl.u32 %v3933, 16
      %v4038 = vrot.slane %v4036, 7
      %v4039 = vshll.u32 %v3933, 16
      %v4041 = vor.u32 %v4038, %v4039
      %v4042 = vsel %vm396, %v4034, %v4041
      %v4043 = vrot.slane %v4038, 4
      %v4045 = vshrl.u32 %v3934, 16
      %v4047 = vrot.slane %v4045, 7
      %v4048 = vshll.u32 %v3934, 16
      %v4050 = vor.u32 %v4047, %v4048
      %v4051 = vrot.slane %v4047, 4
      %v4053 = vshrl.u32 %v3935, 16
      %v4055 = vrot.slane %v4053, 7
      %v4056 = vshll.u32 %v3935, 16
      %v4058 = vor.u32 %v4055, %v4056
      %v4059 = vsel %vm396, %v4051, %v4058
      %v4060 = vrot.slane %v4055, 4
      %v4062 = vshrl.u32 %v3936, 16
      %v4064 = vrot.slane %v4062, 7
      %v4065 = vshll.u32 %v3936, 16
      %v4067 = vor.u32 %v4064, %v4065
      %v4068 = vrot.slane %v4064, 4
      %v4070 = vshrl.u32 %v3937, 16
      %v4072 = vrot.slane %v4070, 7
      %v4073 = vshll.u32 %v3937, 16
      %v4075 = vor.u32 %v4072, %v4073
      %v4076 = vsel %vm396, %v4068, %v4075
      %v4077 = vrot.slane %v4072, 4
      %v4079 = vshrl.u32 %v3938, 16
      %v4081 = vrot.slane %v4079, 7
      %v4082 = vshll.u32 %v3938, 16
      %v4084 = vor.u32 %v4081, %v4082
      %v4085 = vrot.slane %v4081, 4
      %v4087 = vshrl.u32 %v3939, 16
      %v4089 = vrot.slane %v4087, 7
      %v4090 = vshll.u32 %v3939, 16
      %v4092 = vor.u32 %v4089, %v4090
      %v4093 = vsel %vm396, %v4085, %v4092
      %v4094 = vrot.slane %v4089, 4
      %v4096 = vshrl.u32 %v3940, 16
      %v4098 = vrot.slane %v4096, 7
      %v4099 = vshll.u32 %v3940, 16
      %v4101 = vor.u32 %v4098, %v4099
      %v4102 = vrot.slane %v4098, 4
      %v4104 = vshrl.u32 %v3941, 16
      %v4106 = vrot.slane %v4104, 7
      %v4107 = vshll.u32 %v3941, 16
      %v4109 = vor.u32 %v4106, %v4107
      %v4110 = vsel %vm396, %v4102, %v4109
      %v4111 = vrot.slane %v4106, 4
      %v4142 = vld [vmem:[#allocation3] sm:$0xf]
      %v4143 = vsel %vm559, %v3948, %v4142
      %4144 = vst [vmem:[#allocation3] sm:$0xf] %v4143
      %4145 = vst.msk [vmem:[#allocation3 + $0x4] sm:$0xf] %vm563, %v3957
      %v4146 = vld [vmem:[#allocation3 + $0x8] sm:$0x1]
      %v4147 = vsel %vm272, %v3958, %v4146
      %4148 = vst [vmem:[#allocation3 + $0x8] sm:$0x1] %v4147
      %v4149 = vld [vmem:[#allocation3 + $0xc] sm:$0xf]
      %v4150 = vsel %vm559, %v3965, %v4149
      %4151 = vst [vmem:[#allocation3 + $0xc] sm:$0xf] %v4150
      %4152 = vst.msk [vmem:[#allocation3 + $0x10] sm:$0xf] %vm563, %v3974
      %v4153 = vld [vmem:[#allocation3 + $0x14] sm:$0x1]
      %v4154 = vsel %vm272, %v3975, %v4153
      %4155 = vst [vmem:[#allocation3 + $0x14] sm:$0x1] %v4154
      %v4156 = vld [vmem:[#allocation3 + $0x18] sm:$0xf]
      %v4157 = vsel %vm559, %v3982, %v4156
      %4158 = vst [vmem:[#allocation3 + $0x18] sm:$0xf] %v4157
      %4159 = vst.msk [vmem:[#allocation3 + $0x1c] sm:$0xf] %vm563, %v3991
      %v4160 = vld [vmem:[#allocation3 + $0x20] sm:$0x1]
      %v4161 = vsel %vm272, %v3992, %v4160
      %4162 = vst [vmem:[#allocation3 + $0x20] sm:$0x1] %v4161
      %v4163 = vld [vmem:[#allocation3 + $0x24] sm:$0xf]
      %v4164 = vsel %vm559, %v3999, %v4163
      %4165 = vst [vmem:[#allocation3 + $0x24] sm:$0xf] %v4164
      %4166 = vst.msk [vmem:[#allocation3 + $0x28] sm:$0xf] %vm563, %v4008
      %v4167 = vld [vmem:[#allocation3 + $0x2c] sm:$0x1]
      %v4168 = vsel %vm272, %v4009, %v4167
      %4169 = vst [vmem:[#allocation3 + $0x2c] sm:$0x1] %v4168
      %v4170 = vld [vmem:[#allocation3 + $0x30] sm:$0xf]
      %v4171 = vsel %vm559, %v4016, %v4170
      %4172 = vst [vmem:[#allocation3 + $0x30] sm:$0xf] %v4171
      %4173 = vst.msk [vmem:[#allocation3 + $0x34] sm:$0xf] %vm563, %v4025
      %v4174 = vld [vmem:[#allocation3 + $0x38] sm:$0x1]
      %v4175 = vsel %vm272, %v4026, %v4174
      %4176 = vst [vmem:[#allocation3 + $0x38] sm:$0x1] %v4175
      %v4177 = vld [vmem:[#allocation3 + $0x3c] sm:$0xf]
      %v4178 = vsel %vm559, %v4033, %v4177
      %4179 = vst [vmem:[#allocation3 + $0x3c] sm:$0xf] %v4178
      %4180 = vst.msk [vmem:[#allocation3 + $0x40] sm:$0xf] %vm563, %v4042
      %v4181 = vld [vmem:[#allocation3 + $0x44] sm:$0x1]
      %v4182 = vsel %vm272, %v4043, %v4181
      %4183 = vst [vmem:[#allocation3 + $0x44] sm:$0x1] %v4182
      %v4184 = vld [vmem:[#allocation3 + $0x48] sm:$0xf]
      %v4185 = vsel %vm559, %v4050, %v4184
      %4186 = vst [vmem:[#allocation3 + $0x48] sm:$0xf] %v4185
      %4187 = vst.msk [vmem:[#allocation3 + $0x4c] sm:$0xf] %vm563, %v4059
      %v4188 = vld [vmem:[#allocation3 + $0x50] sm:$0x1]
      %v4189 = vsel %vm272, %v4060, %v4188
      %4190 = vst [vmem:[#allocation3 + $0x50] sm:$0x1] %v4189
      %v4191 = vld [vmem:[#allocation3 + $0x54] sm:$0xf]
      %v4192 = vsel %vm559, %v4067, %v4191
      %4193 = vst [vmem:[#allocation3 + $0x54] sm:$0xf] %v4192
      %4194 = vst.msk [vmem:[#allocation3 + $0x58] sm:$0xf] %vm563, %v4076
      %v4195 = vld [vmem:[#allocation3 + $0x5c] sm:$0x1]
      %v4196 = vsel %vm272, %v4077, %v4195
      %4197 = vst [vmem:[#allocation3 + $0x5c] sm:$0x1] %v4196
      %v4198 = vld [vmem:[#allocation3 + $0x60] sm:$0xf]
      %v4199 = vsel %vm559, %v4084, %v4198
      %4200 = vst [vmem:[#allocation3 + $0x60] sm:$0xf] %v4199
      %4201 = vst.msk [vmem:[#allocation3 + $0x64] sm:$0xf] %vm563, %v4093
      %v4202 = vld [vmem:[#allocation3 + $0x68] sm:$0x1]
      %v4203 = vsel %vm272, %v4094, %v4202
      %4204 = vst [vmem:[#allocation3 + $0x68] sm:$0x1] %v4203
      %v4205 = vld [vmem:[#allocation3 + $0x6c] sm:$0xf]
      %v4206 = vsel %vm559, %v4101, %v4205
      %4207 = vst [vmem:[#allocation3 + $0x6c] sm:$0xf] %v4206
      %4208 = vst.msk [vmem:[#allocation3 + $0x70] sm:$0xf] %vm563, %v4110
      %v4209 = vld [vmem:[#allocation3 + $0x74] sm:$0x1]
      %v4210 = vsel %vm272, %v4111, %v4209
      %4211 = vst [vmem:[#allocation3 + $0x74] sm:$0x1] %v4210
      // Predicated region
      $region57: #{tpu_custom_call.1} parent=39 // pred_check
        %p4212 = pneg %p694
      $region58: #{tpu_custom_call.1} parent=39 // pred_check_branch
        %4214 = sbr.rel (%p4212) target = $region60
      $region59: #{tpu_custom_call.1} parent=39 // pred_region
        %4215 = vst.msk [vmem:[#allocation3] sm:$0xf] %vm563, 0
        %4216 = vst.msk [vmem:[#allocation3 + $0x4] sm:$0xf] %vm563, 0
        %vm4217 = vcmask 24576
        %4218 = vst.msk [vmem:[#allocation3 + $0x8] sm:$0x1] %vm4217, 0
      $region60: #{tpu_custom_call.1} parent=39 // pred_fallthru
        _
      // Predicated region
      $region61: #{tpu_custom_call.1} parent=39 // pred_check
        %p4219 = pneg %p783
      $region62: #{tpu_custom_call.1} parent=39 // pred_check_branch
        %4221 = sbr.rel (%p4219) target = $region64
      $region63: #{tpu_custom_call.1} parent=39 // pred_region
        %s4222 = scalar_lea.vmem [#allocation3], 108
        %4223 = vst.msk [vmem:[%s4222] sm:$0xf] %vm563, 0
        %4224 = vst.msk [vmem:[%s4222 + $0x4] sm:$0xf] %vm563, 0
        %vm4225 = vcmask 24576
        %4226 = vst.msk [vmem:[%s4222 + $0x8] sm:$0x1] %vm4225, 0
      $region64: #{tpu_custom_call.1} parent=39 // pred_fallthru
        _
      %v4227 = vld [vmem:[#allocation3] sm:$0xf]
      %v4228 = vld [vmem:[#allocation3 + $0x4] sm:$0xf]
      %v4229 = vld [vmem:[#allocation3 + $0xc] sm:$0xf]
      %v4230 = vld [vmem:[#allocation3 + $0x10] sm:$0xf]
      %v4231 = vld [vmem:[#allocation3 + $0x18] sm:$0xf]
      %v4232 = vld [vmem:[#allocation3 + $0x1c] sm:$0xf]
      %v4233 = vld [vmem:[#allocation3 + $0x24] sm:$0xf]
      %v4234 = vld [vmem:[#allocation3 + $0x28] sm:$0xf]
      %v4235 = vld [vmem:[#allocation3 + $0x30] sm:$0xf]
      %v4236 = vld [vmem:[#allocation3 + $0x34] sm:$0xf]
      %v4237 = vld [vmem:[#allocation3 + $0x3c] sm:$0xf]
      %v4238 = vld [vmem:[#allocation3 + $0x40] sm:$0xf]
      %v4239 = vld [vmem:[#allocation3 + $0x48] sm:$0xf]
      %v4240 = vld [vmem:[#allocation3 + $0x4c] sm:$0xf]
      %v4241 = vld [vmem:[#allocation3 + $0x54] sm:$0xf]
      %v4242 = vld [vmem:[#allocation3 + $0x58] sm:$0xf]
      %v4243 = vld [vmem:[%s3] sm:$0x3]
      %v4244 = vld [vmem:[#allocation3 + $0x8] sm:$0x1]
      %v4245 = vld [vmem:[#allocation3 + $0x14] sm:$0x1]
      %v4246 = vld [vmem:[#allocation3 + $0x20] sm:$0x1]
      %v4247 = vld [vmem:[#allocation3 + $0x2c] sm:$0x1]
      %v4248 = vld [vmem:[#allocation3 + $0x38] sm:$0x1]
      %v4249 = vld [vmem:[#allocation3 + $0x44] sm:$0x1]
      %v4250 = vld [vmem:[#allocation3 + $0x50] sm:$0x1]
      %v4251 = vld [vmem:[#allocation3 + $0x5c] sm:$0x1]
      %v4253 = vshrl.u32 %v4227, 16
      %v4255 = vrot.slane %v4253, 4
      %v4256 = vshll.u32 %v4227, 16
      %v4258 = vrot.slane %v4256, 5
      %v4259 = vor.u32 %v4255, %v4258
      %v4260 = vrot.slane %v4259, 4
      %v4262 = vshll.u32 %v4228, 16
      %v4264 = vrot.slane %v4262, 5
      %v4265 = vsel %vm828, %v4260, %v4264
      %v4266 = vshrl.u32 %v4228, 16
      %v4268 = vrot.slane %v4266, 4
      %v4269 = vor.u32 %v4268, %v4264
      %v4270 = vrot.slane %v4269, 4
      %v4272 = vshll.u32 %v4244, 16
      %v4274 = vrot.slane %v4272, 5
      %v4275 = vsel %vm828, %v4270, %v4274
      %v4277 = vshrl.u32 %v4229, 16
      %v4279 = vrot.slane %v4277, 4
      %v4280 = vshll.u32 %v4229, 16
      %v4282 = vrot.slane %v4280, 5
      %v4283 = vor.u32 %v4279, %v4282
      %v4284 = vrot.slane %v4283, 4
      %v4286 = vshll.u32 %v4230, 16
      %v4288 = vrot.slane %v4286, 5
      %v4289 = vsel %vm828, %v4284, %v4288
      %v4290 = vshrl.u32 %v4230, 16
      %v4292 = vrot.slane %v4290, 4
      %v4293 = vor.u32 %v4292, %v4288
      %v4294 = vrot.slane %v4293, 4
      %v4296 = vshll.u32 %v4245, 16
      %v4298 = vrot.slane %v4296, 5
      %v4299 = vsel %vm828, %v4294, %v4298
      %v4301 = vshrl.u32 %v4231, 16
      %v4303 = vrot.slane %v4301, 4
      %v4304 = vshll.u32 %v4231, 16
      %v4306 = vrot.slane %v4304, 5
      %v4307 = vor.u32 %v4303, %v4306
      %v4308 = vrot.slane %v4307, 4
      %v4310 = vshll.u32 %v4232, 16
      %v4312 = vrot.slane %v4310, 5
      %v4313 = vsel %vm828, %v4308, %v4312
      %v4314 = vshrl.u32 %v4232, 16
      %v4316 = vrot.slane %v4314, 4
      %v4317 = vor.u32 %v4316, %v4312
      %v4318 = vrot.slane %v4317, 4
      %v4320 = vshll.u32 %v4246, 16
      %v4322 = vrot.slane %v4320, 5
      %v4323 = vsel %vm828, %v4318, %v4322
      %v4325 = vshrl.u32 %v4233, 16
      %v4327 = vrot.slane %v4325, 4
      %v4328 = vshll.u32 %v4233, 16
      %v4330 = vrot.slane %v4328, 5
      %v4331 = vor.u32 %v4327, %v4330
      %v4332 = vrot.slane %v4331, 4
      %v4334 = vshll.u32 %v4234, 16
      %v4336 = vrot.slane %v4334, 5
      %v4337 = vsel %vm828, %v4332, %v4336
      %v4338 = vshrl.u32 %v4234, 16
      %v4340 = vrot.slane %v4338, 4
      %v4341 = vor.u32 %v4340, %v4336
      %v4342 = vrot.slane %v4341, 4
      %v4344 = vshll.u32 %v4247, 16
      %v4346 = vrot.slane %v4344, 5
      %v4347 = vsel %vm828, %v4342, %v4346
      %v4349 = vshrl.u32 %v4235, 16
      %v4351 = vrot.slane %v4349, 4
      %v4352 = vshll.u32 %v4235, 16
      %v4354 = vrot.slane %v4352, 5
      %v4355 = vor.u32 %v4351, %v4354
      %v4356 = vrot.slane %v4355, 4
      %v4358 = vshll.u32 %v4236, 16
      %v4360 = vrot.slane %v4358, 5
      %v4361 = vsel %vm828, %v4356, %v4360
      %v4362 = vshrl.u32 %v4236, 16
      %v4364 = vrot.slane %v4362, 4
      %v4365 = vor.u32 %v4364, %v4360
      %v4366 = vrot.slane %v4365, 4
      %v4368 = vshll.u32 %v4248, 16
      %v4370 = vrot.slane %v4368, 5
      %v4371 = vsel %vm828, %v4366, %v4370
      %v4373 = vshrl.u32 %v4237, 16
      %v4375 = vrot.slane %v4373, 4
      %v4376 = vshll.u32 %v4237, 16
      %v4378 = vrot.slane %v4376, 5
      %v4379 = vor.u32 %v4375, %v4378
      %v4380 = vrot.slane %v4379, 4
      %v4382 = vshll.u32 %v4238, 16
      %v4384 = vrot.slane %v4382, 5
      %v4385 = vsel %vm828, %v4380, %v4384
      %v4386 = vshrl.u32 %v4238, 16
      %v4388 = vrot.slane %v4386, 4
      %v4389 = vor.u32 %v4388, %v4384
      %v4390 = vrot.slane %v4389, 4
      %v4392 = vshll.u32 %v4249, 16
      %v4394 = vrot.slane %v4392, 5
      %v4395 = vsel %vm828, %v4390, %v4394
      %v4397 = vshrl.u32 %v4239, 16
      %v4399 = vrot.slane %v4397, 4
      %v4400 = vshll.u32 %v4239, 16
      %v4402 = vrot.slane %v4400, 5
      %v4403 = vor.u32 %v4399, %v4402
      %v4404 = vrot.slane %v4403, 4
      %v4406 = vshll.u32 %v4240, 16
      %v4408 = vrot.slane %v4406, 5
      %v4409 = vsel %vm828, %v4404, %v4408
      %v4410 = vshrl.u32 %v4240, 16
      %v4412 = vrot.slane %v4410, 4
      %v4413 = vor.u32 %v4412, %v4408
      %v4414 = vrot.slane %v4413, 4
      %v4416 = vshll.u32 %v4250, 16
      %v4418 = vrot.slane %v4416, 5
      %v4419 = vsel %vm828, %v4414, %v4418
      %v4421 = vshrl.u32 %v4241, 16
      %v4423 = vrot.slane %v4421, 4
      %v4424 = vshll.u32 %v4241, 16
      %v4426 = vrot.slane %v4424, 5
      %v4427 = vor.u32 %v4423, %v4426
      %v4428 = vrot.slane %v4427, 4
      %v4430 = vshll.u32 %v4242, 16
      %v4432 = vrot.slane %v4430, 5
      %v4433 = vsel %vm828, %v4428, %v4432
      %v4434 = vshrl.u32 %v4242, 16
      %v4436 = vrot.slane %v4434, 4
      %v4437 = vor.u32 %v4436, %v4432
      %v4438 = vrot.slane %v4437, 4
      %v4440 = vshll.u32 %v4251, 16
      %v4442 = vrot.slane %v4440, 5
      %v4443 = vsel %vm828, %v4438, %v4442
      %s4444 = scalar_lea.vmem %s3, 2
      %v4445 = vld [vmem:[%s4444] sm:$0x3]
      %v4446 = vunpack.c.l.b16 %v4265
      %v4447 = vunpack.c.l.b16 %v4275
      %v4448 = vunpack.c.l.b16 %v4289
      %v4449 = vunpack.c.l.b16 %v4299
      %v4450 = vunpack.c.l.b16 %v4313
      %v4451 = vunpack.c.l.b16 %v4323
      %v4452 = vunpack.c.l.b16 %v4337
      %v4453 = vunpack.c.l.b16 %v4347
      %v4454 = vunpack.c.l.b16 %v4361
      %v4455 = vunpack.c.l.b16 %v4371
      %v4456 = vunpack.c.l.b16 %v4385
      %v4457 = vunpack.c.l.b16 %v4395
      %v4458 = vunpack.c.l.b16 %v4409
      %v4459 = vunpack.c.l.b16 %v4419
      %v4460 = vunpack.c.l.b16 %v4433
      %v4461 = vunpack.c.l.b16 %v4443
      %v4462 = vpack.c.b16 %v4447, %v4446
      %v4463 = vpack.c.b16 %v4449, %v4448
      %v4464 = vpack.c.b16 %v4451, %v4450
      %v4465 = vpack.c.b16 %v4453, %v4452
      %v4466 = vpack.c.b16 %v4455, %v4454
      %v4467 = vpack.c.b16 %v4457, %v4456
      %v4468 = vpack.c.b16 %v4459, %v4458
      %v4469 = vpack.c.b16 %v4461, %v4460
      %v4471 = vsel %vm1101, %v4462, 0
      %v4474 = vsel %vm1101, %v4463, 0
      %v4477 = vsel %vm1101, %v4464, 0
      %v4480 = vsel %vm1101, %v4465, 0
      %v4483 = vsel %vm1101, %v4466, 0
      %v4486 = vsel %vm1101, %v4467, 0
      %v4489 = vsel %vm1101, %v4468, 0
      %v4492 = vsel %vm1101, %v4469, 0
      %v4495 = vsel %vm1132, %v4445, 0
      %4497 = vmatprep.subr.bf16.mxu0 0
      %4498 = vmatpush1.bf16.msra.mxu0 %v4495
      %4499 = vmatprep.subr.bf16.mxu0 0
      %4500 = vmatpush1.bf16.msra.mxu0 0
      %4501 = vmatprep.subr.bf16.mxu0 0
      %4502 = vmatpush1.bf16.msra.mxu0 0
      %4503 = vmatprep.subr.bf16.mxu0 0
      %4504 = vmatpush1.bf16.msra.mxu0 0
      %4505 = vmatprep.subr.bf16.mxu0 0
      %4506 = vmatpush1.bf16.msra.mxu0 0
      %4507 = vmatprep.subr.bf16.mxu0 0
      %4508 = vmatpush1.bf16.msra.mxu0 0
      %4509 = vmatprep.subr.bf16.mxu0 0
      %4510 = vmatpush1.bf16.msra.mxu0 0
      %4511 = vmatprep.subr.bf16.mxu0 0
      %4512 = vmatpush1.bf16.msra.mxu0 0
      %4513 = vmatprep.subr.bf16.mxu0 0
      %4514 = vmatpush1.bf16.msra.mxu0 0
      %4515 = vmatprep.subr.bf16.mxu0 0
      %4516 = vmatpush1.bf16.msra.mxu0 0
      %4517 = vmatprep.subr.bf16.mxu0 0
      %4518 = vmatpush1.bf16.msra.mxu0 0
      %4519 = vmatprep.subr.bf16.mxu0 0
      %4520 = vmatpush1.bf16.msra.mxu0 0
      %4521 = vmatprep.subr.bf16.mxu0 0
      %4522 = vmatpush1.bf16.msra.mxu0 0
      %4523 = vmatprep.subr.bf16.mxu0 0
      %4524 = vmatpush1.bf16.msra.mxu0 0
      %4525 = vmatprep.subr.bf16.mxu0 0
      %4526 = vmatpush1.bf16.msra.mxu0 0
      %4527 = vmatprep.subr.bf16.mxu0 0
      %4528 = vmatpush1.bf16.msra.mxu0 0
      %4529 = vmatprep.mubr.bf16.mxu0 0
      %4530 = vmatmul.mubr.bf16.gmra.mrb[0].mxu0 %v4471
      %v4531 = vpop.f32.mrb[0].mxu0
      %v4532 = vadd.f32 0.0, %v4531
      %v4533 = vpop.f32.mrb[0].mxu0
      %v4534 = vpop.f32.mrb[0].mxu0
      %v4535 = vadd.f32 0.0, %v4534
      %v4536 = vpop.f32.mrb[0].mxu0
      %4537 = vmatprep.mubr.bf16.mxu0 0
      %4538 = vmatmul.mubr.bf16.gmra.mrb[0].mxu0 %v4474
      %v4539 = vpop.f32.mrb[0].mxu0
      %v4540 = vadd.f32 0.0, %v4539
      %v4541 = vpop.f32.mrb[0].mxu0
      %v4542 = vpop.f32.mrb[0].mxu0
      %v4543 = vadd.f32 0.0, %v4542
      %v4544 = vpop.f32.mrb[0].mxu0
      %4545 = vmatprep.mubr.bf16.mxu0 0
      %4546 = vmatmul.mubr.bf16.gmra.mrb[0].mxu0 %v4477
      %v4547 = vpop.f32.mrb[0].mxu0
      %v4548 = vadd.f32 0.0, %v4547
      %v4549 = vpop.f32.mrb[0].mxu0
      %v4550 = vpop.f32.mrb[0].mxu0
      %v4551 = vadd.f32 0.0, %v4550
      %v4552 = vpop.f32.mrb[0].mxu0
      %4553 = vmatprep.mubr.bf16.mxu0 0
      %4554 = vmatmul.mubr.bf16.gmra.mrb[0].mxu0 %v4480
      %v4555 = vpop.f32.mrb[0].mxu0
      %v4556 = vadd.f32 0.0, %v4555
      %v4557 = vpop.f32.mrb[0].mxu0
      %v4558 = vpop.f32.mrb[0].mxu0
      %v4559 = vadd.f32 0.0, %v4558
      %v4560 = vpop.f32.mrb[0].mxu0
      %4561 = vmatprep.mubr.bf16.mxu0 0
      %4562 = vmatmul.mubr.bf16.gmra.mrb[0].mxu0 %v4483
      %v4563 = vpop.f32.mrb[0].mxu0
      %v4564 = vadd.f32 0.0, %v4563
      %v4565 = vpop.f32.mrb[0].mxu0
      %v4566 = vpop.f32.mrb[0].mxu0
      %v4567 = vadd.f32 0.0, %v4566
      %v4568 = vpop.f32.mrb[0].mxu0
      %4569 = vmatprep.mubr.bf16.mxu0 0
      %4570 = vmatmul.mubr.bf16.gmra.mrb[0].mxu0 %v4486
      %v4571 = vpop.f32.mrb[0].mxu0
      %v4572 = vadd.f32 0.0, %v4571
      %v4573 = vpop.f32.mrb[0].mxu0
      %v4574 = vpop.f32.mrb[0].mxu0
      %v4575 = vadd.f32 0.0, %v4574
      %v4576 = vpop.f32.mrb[0].mxu0
      %4577 = vmatprep.mubr.bf16.mxu0 0
      %4578 = vmatmul.mubr.bf16.gmra.mrb[0].mxu0 %v4489
      %v4579 = vpop.f32.mrb[0].mxu0
      %v4580 = vadd.f32 0.0, %v4579
      %v4581 = vpop.f32.mrb[0].mxu0
      %v4582 = vpop.f32.mrb[0].mxu0
      %v4583 = vadd.f32 0.0, %v4582
      %v4584 = vpop.f32.mrb[0].mxu0
      %4585 = vmatprep.mubr.bf16.mxu0 0
      %4586 = vmatmul.mubr.bf16.gmra.mrb[0].mxu0 %v4492
      %v4587 = vpop.f32.mrb[0].mxu0
      %v4588 = vadd.f32 0.0, %v4587
      %v4589 = vpop.f32.mrb[0].mxu0
      %v4590 = vpop.f32.mrb[0].mxu0
      %v4591 = vadd.f32 0.0, %v4590
      %v4592 = vpop.f32.mrb[0].mxu0
      %4593 = vdwg.mxu0
      %v4610 = vunpack.c.l.b16 %v4227
      %v4611 = vunpack.c.l.b16 %v4228
      %v4612 = vunpack.c.l.b16 %v4229
      %v4613 = vunpack.c.l.b16 %v4230
      %v4614 = vunpack.c.l.b16 %v4231
      %v4615 = vunpack.c.l.b16 %v4232
      %v4616 = vunpack.c.l.b16 %v4233
      %v4617 = vunpack.c.l.b16 %v4234
      %v4618 = vunpack.c.l.b16 %v4235
      %v4619 = vunpack.c.l.b16 %v4236
      %v4620 = vunpack.c.l.b16 %v4237
      %v4621 = vunpack.c.l.b16 %v4238
      %v4622 = vunpack.c.l.b16 %v4239
      %v4623 = vunpack.c.l.b16 %v4240
      %v4624 = vunpack.c.l.b16 %v4241
      %v4625 = vunpack.c.l.b16 %v4242
      %v4626 = vpack.c.b16 %v4611, %v4610
      %v4627 = vpack.c.b16 %v4613, %v4612
      %v4628 = vpack.c.b16 %v4615, %v4614
      %v4629 = vpack.c.b16 %v4617, %v4616
      %v4630 = vpack.c.b16 %v4619, %v4618
      %v4631 = vpack.c.b16 %v4621, %v4620
      %v4632 = vpack.c.b16 %v4623, %v4622
      %v4633 = vpack.c.b16 %v4625, %v4624
      %v4635 = vsel %vm1101, %v4626, 0
      %v4638 = vsel %vm1101, %v4627, 0
      %v4641 = vsel %vm1101, %v4628, 0
      %v4644 = vsel %vm1101, %v4629, 0
      %v4647 = vsel %vm1101, %v4630, 0
      %v4650 = vsel %vm1101, %v4631, 0
      %v4653 = vsel %vm1101, %v4632, 0
      %v4656 = vsel %vm1101, %v4633, 0
      %v4659 = vsel %vm1132, %v4243, 0
      %4661 = vmatprep.subr.bf16.mxu0 0
      %4662 = vmatpush1.bf16.msra.mxu0 %v4659
      %4663 = vmatprep.subr.bf16.mxu0 0
      %4664 = vmatpush1.bf16.msra.mxu0 0
      %4665 = vmatprep.subr.bf16.mxu0 0
      %4666 = vmatpush1.bf16.msra.mxu0 0
      %4667 = vmatprep.subr.bf16.mxu0 0
      %4668 = vmatpush1.bf16.msra.mxu0 0
      %4669 = vmatprep.subr.bf16.mxu0 0
      %4670 = vmatpush1.bf16.msra.mxu0 0
      %4671 = vmatprep.subr.bf16.mxu0 0
      %4672 = vmatpush1.bf16.msra.mxu0 0
      %4673 = vmatprep.subr.bf16.mxu0 0
      %4674 = vmatpush1.bf16.msra.mxu0 0
      %4675 = vmatprep.subr.bf16.mxu0 0
      %4676 = vmatpush1.bf16.msra.mxu0 0
      %4677 = vmatprep.subr.bf16.mxu0 0
      %4678 = vmatpush1.bf16.msra.mxu0 0
      %4679 = vmatprep.subr.bf16.mxu0 0
      %4680 = vmatpush1.bf16.msra.mxu0 0
      %4681 = vmatprep.subr.bf16.mxu0 0
      %4682 = vmatpush1.bf16.msra.mxu0 0
      %4683 = vmatprep.subr.bf16.mxu0 0
      %4684 = vmatpush1.bf16.msra.mxu0 0
      %4685 = vmatprep.subr.bf16.mxu0 0
      %4686 = vmatpush1.bf16.msra.mxu0 0
      %4687 = vmatprep.subr.bf16.mxu0 0
      %4688 = vmatpush1.bf16.msra.mxu0 0
      %4689 = vmatprep.subr.bf16.mxu0 0
      %4690 = vmatpush1.bf16.msra.mxu0 0
      %4691 = vmatprep.subr.bf16.mxu0 0
      %4692 = vmatpush1.bf16.msra.mxu0 0
      %4693 = vmatprep.mubr.bf16.mxu0 0
      %4694 = vmatmul.mubr.bf16.gmra.mrb[0].mxu0 %v4635
      %v4695 = vpop.f32.mrb[0].mxu0
      %v4696 = vadd.f32 %v4532, %v4695
      %v4697 = vpop.f32.mrb[0].mxu0
      %v4698 = vpop.f32.mrb[0].mxu0
      %v4699 = vadd.f32 %v4535, %v4698
      %v4700 = vpop.f32.mrb[0].mxu0
      %4701 = vmatprep.mubr.bf16.mxu0 0
      %4702 = vmatmul.mubr.bf16.gmra.mrb[0].mxu0 %v4638
      %v4703 = vpop.f32.mrb[0].mxu0
      %v4704 = vadd.f32 %v4540, %v4703
      %v4705 = vpop.f32.mrb[0].mxu0
      %v4706 = vpop.f32.mrb[0].mxu0
      %v4707 = vadd.f32 %v4543, %v4706
      %v4708 = vpop.f32.mrb[0].mxu0
      %4709 = vmatprep.mubr.bf16.mxu0 0
      %4710 = vmatmul.mubr.bf16.gmra.mrb[0].mxu0 %v4641
      %v4711 = vpop.f32.mrb[0].mxu0
      %v4712 = vadd.f32 %v4548, %v4711
      %v4713 = vpop.f32.mrb[0].mxu0
      %v4714 = vpop.f32.mrb[0].mxu0
      %v4715 = vadd.f32 %v4551, %v4714
      %v4716 = vpop.f32.mrb[0].mxu0
      %4717 = vmatprep.mubr.bf16.mxu0 0
      %4718 = vmatmul.mubr.bf16.gmra.mrb[0].mxu0 %v4644
      %v4719 = vpop.f32.mrb[0].mxu0
      %v4720 = vadd.f32 %v4556, %v4719
      %v4721 = vpop.f32.mrb[0].mxu0
      %v4722 = vpop.f32.mrb[0].mxu0
      %v4723 = vadd.f32 %v4559, %v4722
      %v4724 = vpop.f32.mrb[0].mxu0
      %4725 = vmatprep.mubr.bf16.mxu0 0
      %4726 = vmatmul.mubr.bf16.gmra.mrb[0].mxu0 %v4647
      %v4727 = vpop.f32.mrb[0].mxu0
      %v4728 = vadd.f32 %v4564, %v4727
      %v4729 = vpop.f32.mrb[0].mxu0
      %v4730 = vpop.f32.mrb[0].mxu0
      %v4731 = vadd.f32 %v4567, %v4730
      %v4732 = vpop.f32.mrb[0].mxu0
      %4733 = vmatprep.mubr.bf16.mxu0 0
      %4734 = vmatmul.mubr.bf16.gmra.mrb[0].mxu0 %v4650
      %v4735 = vpop.f32.mrb[0].mxu0
      %v4736 = vadd.f32 %v4572, %v4735
      %v4737 = vpop.f32.mrb[0].mxu0
      %v4738 = vpop.f32.mrb[0].mxu0
      %v4739 = vadd.f32 %v4575, %v4738
      %v4740 = vpop.f32.mrb[0].mxu0
      %4741 = vmatprep.mubr.bf16.mxu0 0
      %4742 = vmatmul.mubr.bf16.gmra.mrb[0].mxu0 %v4653
      %v4743 = vpop.f32.mrb[0].mxu0
      %v4744 = vadd.f32 %v4580, %v4743
      %v4745 = vpop.f32.mrb[0].mxu0
      %v4746 = vpop.f32.mrb[0].mxu0
      %v4747 = vadd.f32 %v4583, %v4746
      %v4748 = vpop.f32.mrb[0].mxu0
      %4749 = vmatprep.mubr.bf16.mxu0 0
      %4750 = vmatmul.mubr.bf16.gmra.mrb[0].mxu0 %v4656
      %v4751 = vpop.f32.mrb[0].mxu0
      %v4752 = vadd.f32 %v4588, %v4751
      %v4753 = vpop.f32.mrb[0].mxu0
      %v4754 = vpop.f32.mrb[0].mxu0
      %v4755 = vadd.f32 %v4591, %v4754
      %v4756 = vpop.f32.mrb[0].mxu0
      %4757 = vdwg.mxu0
      %v4758 = vld [vmem:[#allocation3] sm:$0xe]
      %v4759 = vld [vmem:[#allocation3 + $0xc] sm:$0xe]
      %v4760 = vld [vmem:[#allocation3 + $0x18] sm:$0xe]
      %v4761 = vld [vmem:[#allocation3 + $0x24] sm:$0xe]
      %v4762 = vld [vmem:[#allocation3 + $0x30] sm:$0xe]
      %v4763 = vld [vmem:[#allocation3 + $0x3c] sm:$0xe]
      %v4764 = vld [vmem:[#allocation3 + $0x48] sm:$0xe]
      %v4765 = vld [vmem:[#allocation3 + $0x54] sm:$0xe]
      %v4782 = vrot.slane %v4758, 5
      %v4783 = vrot.slane %v4782, 4
      %v4784 = vrot.slane %v4228, 5
      %v4785 = vsel %vm1477, %v4783, %v4784
      %v4786 = vrot.slane %v4784, 4
      %v4787 = vrot.slane %v4244, 5
      %v4788 = vsel %vm1477, %v4786, %v4787
      %v4789 = vrot.slane %v4759, 5
      %v4790 = vrot.slane %v4789, 4
      %v4791 = vrot.slane %v4230, 5
      %v4792 = vsel %vm1477, %v4790, %v4791
      %v4793 = vrot.slane %v4791, 4
      %v4794 = vrot.slane %v4245, 5
      %v4795 = vsel %vm1477, %v4793, %v4794
      %v4796 = vrot.slane %v4760, 5
      %v4797 = vrot.slane %v4796, 4
      %v4798 = vrot.slane %v4232, 5
      %v4799 = vsel %vm1477, %v4797, %v4798
      %v4800 = vrot.slane %v4798, 4
      %v4801 = vrot.slane %v4246, 5
      %v4802 = vsel %vm1477, %v4800, %v4801
      %v4803 = vrot.slane %v4761, 5
      %v4804 = vrot.slane %v4803, 4
      %v4805 = vrot.slane %v4234, 5
      %v4806 = vsel %vm1477, %v4804, %v4805
      %v4807 = vrot.slane %v4805, 4
      %v4808 = vrot.slane %v4247, 5
      %v4809 = vsel %vm1477, %v4807, %v4808
      %v4810 = vrot.slane %v4762, 5
      %v4811 = vrot.slane %v4810, 4
      %v4812 = vrot.slane %v4236, 5
      %v4813 = vsel %vm1477, %v4811, %v4812
      %v4814 = vrot.slane %v4812, 4
      %v4815 = vrot.slane %v4248, 5
      %v4816 = vsel %vm1477, %v4814, %v4815
      %v4817 = vrot.slane %v4763, 5
      %v4818 = vrot.slane %v4817, 4
      %v4819 = vrot.slane %v4238, 5
      %v4820 = vsel %vm1477, %v4818, %v4819
      %v4821 = vrot.slane %v4819, 4
      %v4822 = vrot.slane %v4249, 5
      %v4823 = vsel %vm1477, %v4821, %v4822
      %v4824 = vrot.slane %v4764, 5
      %v4825 = vrot.slane %v4824, 4
      %v4826 = vrot.slane %v4240, 5
      %v4827 = vsel %vm1477, %v4825, %v4826
      %v4828 = vrot.slane %v4826, 4
      %v4829 = vrot.slane %v4250, 5
      %v4830 = vsel %vm1477, %v4828, %v4829
      %v4831 = vrot.slane %v4765, 5
      %v4832 = vrot.slane %v4831, 4
      %v4833 = vrot.slane %v4242, 5
      %v4834 = vsel %vm1477, %v4832, %v4833
      %v4835 = vrot.slane %v4833, 4
      %v4836 = vrot.slane %v4251, 5
      %v4837 = vsel %vm1477, %v4835, %v4836
      %s4838 = scalar_lea.vmem %s3, 4
      %v4839 = vld [vmem:[%s4838] sm:$0x3]
      %v4840 = vunpack.c.l.b16 %v4785
      %v4841 = vunpack.c.l.b16 %v4788
      %v4842 = vunpack.c.l.b16 %v4792
      %v4843 = vunpack.c.l.b16 %v4795
      %v4844 = vunpack.c.l.b16 %v4799
      %v4845 = vunpack.c.l.b16 %v4802
      %v4846 = vunpack.c.l.b16 %v4806
      %v4847 = vunpack.c.l.b16 %v4809
      %v4848 = vunpack.c.l.b16 %v4813
      %v4849 = vunpack.c.l.b16 %v4816
      %v4850 = vunpack.c.l.b16 %v4820
      %v4851 = vunpack.c.l.b16 %v4823
      %v4852 = vunpack.c.l.b16 %v4827
      %v4853 = vunpack.c.l.b16 %v4830
      %v4854 = vunpack.c.l.b16 %v4834
      %v4855 = vunpack.c.l.b16 %v4837
      %v4856 = vpack.c.b16 %v4841, %v4840
      %v4857 = vpack.c.b16 %v4843, %v4842
      %v4858 = vpack.c.b16 %v4845, %v4844
      %v4859 = vpack.c.b16 %v4847, %v4846
      %v4860 = vpack.c.b16 %v4849, %v4848
      %v4861 = vpack.c.b16 %v4851, %v4850
      %v4862 = vpack.c.b16 %v4853, %v4852
      %v4863 = vpack.c.b16 %v4855, %v4854
      %v4865 = vsel %vm1101, %v4856, 0
      %v4868 = vsel %vm1101, %v4857, 0
      %v4871 = vsel %vm1101, %v4858, 0
      %v4874 = vsel %vm1101, %v4859, 0
      %v4877 = vsel %vm1101, %v4860, 0
      %v4880 = vsel %vm1101, %v4861, 0
      %v4883 = vsel %vm1101, %v4862, 0
      %v4886 = vsel %vm1101, %v4863, 0
      %v4889 = vsel %vm1132, %v4839, 0
      %4891 = vmatprep.subr.bf16.mxu0 0
      %4892 = vmatpush1.bf16.msra.mxu0 %v4889
      %4893 = vmatprep.subr.bf16.mxu0 0
      %4894 = vmatpush1.bf16.msra.mxu0 0
      %4895 = vmatprep.subr.bf16.mxu0 0
      %4896 = vmatpush1.bf16.msra.mxu0 0
      %4897 = vmatprep.subr.bf16.mxu0 0
      %4898 = vmatpush1.bf16.msra.mxu0 0
      %4899 = vmatprep.subr.bf16.mxu0 0
      %4900 = vmatpush1.bf16.msra.mxu0 0
      %4901 = vmatprep.subr.bf16.mxu0 0
      %4902 = vmatpush1.bf16.msra.mxu0 0
      %4903 = vmatprep.subr.bf16.mxu0 0
      %4904 = vmatpush1.bf16.msra.mxu0 0
      %4905 = vmatprep.subr.bf16.mxu0 0
      %4906 = vmatpush1.bf16.msra.mxu0 0
      %4907 = vmatprep.subr.bf16.mxu0 0
      %4908 = vmatpush1.bf16.msra.mxu0 0
      %4909 = vmatprep.subr.bf16.mxu0 0
      %4910 = vmatpush1.bf16.msra.mxu0 0
      %4911 = vmatprep.subr.bf16.mxu0 0
      %4912 = vmatpush1.bf16.msra.mxu0 0
      %4913 = vmatprep.subr.bf16.mxu0 0
      %4914 = vmatpush1.bf16.msra.mxu0 0
      %4915 = vmatprep.subr.bf16.mxu0 0
      %4916 = vmatpush1.bf16.msra.mxu0 0
      %4917 = vmatprep.subr.bf16.mxu0 0
      %4918 = vmatpush1.bf16.msra.mxu0 0
      %4919 = vmatprep.subr.bf16.mxu0 0
      %4920 = vmatpush1.bf16.msra.mxu0 0
      %4921 = vmatprep.subr.bf16.mxu0 0
      %4922 = vmatpush1.bf16.msra.mxu0 0
      %4923 = vmatprep.mubr.bf16.mxu0 0
      %4924 = vmatmul.mubr.bf16.gmra.mrb[0].mxu0 %v4865
      %v4925 = vpop.f32.mrb[0].mxu0
      %v4926 = vadd.f32 0.0, %v4925
      %v4927 = vpop.f32.mrb[0].mxu0
      %v4928 = vpop.f32.mrb[0].mxu0
      %v4929 = vadd.f32 0.0, %v4928
      %v4930 = vpop.f32.mrb[0].mxu0
      %4931 = vmatprep.mubr.bf16.mxu0 0
      %4932 = vmatmul.mubr.bf16.gmra.mrb[0].mxu0 %v4868
      %v4933 = vpop.f32.mrb[0].mxu0
      %v4934 = vadd.f32 0.0, %v4933
      %v4935 = vpop.f32.mrb[0].mxu0
      %v4936 = vpop.f32.mrb[0].mxu0
      %v4937 = vadd.f32 0.0, %v4936
      %v4938 = vpop.f32.mrb[0].mxu0
      %4939 = vmatprep.mubr.bf16.mxu0 0
      %4940 = vmatmul.mubr.bf16.gmra.mrb[0].mxu0 %v4871
      %v4941 = vpop.f32.mrb[0].mxu0
      %v4942 = vadd.f32 0.0, %v4941
      %v4943 = vpop.f32.mrb[0].mxu0
      %v4944 = vpop.f32.mrb[0].mxu0
      %v4945 = vadd.f32 0.0, %v4944
      %v4946 = vpop.f32.mrb[0].mxu0
      %4947 = vmatprep.mubr.bf16.mxu0 0
      %4948 = vmatmul.mubr.bf16.gmra.mrb[0].mxu0 %v4874
      %v4949 = vpop.f32.mrb[0].mxu0
      %v4950 = vadd.f32 0.0, %v4949
      %v4951 = vpop.f32.mrb[0].mxu0
      %v4952 = vpop.f32.mrb[0].mxu0
      %v4953 = vadd.f32 0.0, %v4952
      %v4954 = vpop.f32.mrb[0].mxu0
      %4955 = vmatprep.mubr.bf16.mxu0 0
      %4956 = vmatmul.mubr.bf16.gmra.mrb[0].mxu0 %v4877
      %v4957 = vpop.f32.mrb[0].mxu0
      %v4958 = vadd.f32 0.0, %v4957
      %v4959 = vpop.f32.mrb[0].mxu0
      %v4960 = vpop.f32.mrb[0].mxu0
      %v4961 = vadd.f32 0.0, %v4960
      %v4962 = vpop.f32.mrb[0].mxu0
      %4963 = vmatprep.mubr.bf16.mxu0 0
      %4964 = vmatmul.mubr.bf16.gmra.mrb[0].mxu0 %v4880
      %v4965 = vpop.f32.mrb[0].mxu0
      %v4966 = vadd.f32 0.0, %v4965
      %v4967 = vpop.f32.mrb[0].mxu0
      %v4968 = vpop.f32.mrb[0].mxu0
      %v4969 = vadd.f32 0.0, %v4968
      %v4970 = vpop.f32.mrb[0].mxu0
      %4971 = vmatprep.mubr.bf16.mxu0 0
      %4972 = vmatmul.mubr.bf16.gmra.mrb[0].mxu0 %v4883
      %v4973 = vpop.f32.mrb[0].mxu0
      %v4974 = vadd.f32 0.0, %v4973
      %v4975 = vpop.f32.mrb[0].mxu0
      %v4976 = vpop.f32.mrb[0].mxu0
      %v4977 = vadd.f32 0.0, %v4976
      %v4978 = vpop.f32.mrb[0].mxu0
      %4979 = vmatprep.mubr.bf16.mxu0 0
      %4980 = vmatmul.mubr.bf16.gmra.mrb[0].mxu0 %v4886
      %v4981 = vpop.f32.mrb[0].mxu0
      %v4982 = vadd.f32 0.0, %v4981
      %v4983 = vpop.f32.mrb[0].mxu0
      %v4984 = vpop.f32.mrb[0].mxu0
      %v4985 = vadd.f32 0.0, %v4984
      %v4986 = vpop.f32.mrb[0].mxu0
      %4987 = vdwg.mxu0
      %v4988 = vadd.f32 %v4696, %v4926
      %v4989 = vadd.f32 %v4699, %v4929
      %v4990 = vadd.f32 %v4704, %v4934
      %v4991 = vadd.f32 %v4707, %v4937
      %v4992 = vadd.f32 %v4712, %v4942
      %v4993 = vadd.f32 %v4715, %v4945
      %v4994 = vadd.f32 %v4720, %v4950
      %v4995 = vadd.f32 %v4723, %v4953
      %v4996 = vadd.f32 %v4728, %v4958
      %v4997 = vadd.f32 %v4731, %v4961
      %v4998 = vadd.f32 %v4736, %v4966
      %v4999 = vadd.f32 %v4739, %v4969
      %v5000 = vadd.f32 %v4744, %v4974
      %v5001 = vadd.f32 %v4747, %v4977
      %v5002 = vadd.f32 %v4752, %v4982
      %v5003 = vadd.f32 %v4755, %v4985
      %s5004 = scalar_lea.vmem [#allocation3], 12
      %v5005 = vld [vmem:[%s5004] sm:$0xf]
      %v5006 = vld [vmem:[%s5004 + $0x4] sm:$0xf]
      %v5007 = vld [vmem:[%s5004 + $0xc] sm:$0xf]
      %v5008 = vld [vmem:[%s5004 + $0x10] sm:$0xf]
      %v5009 = vld [vmem:[%s5004 + $0x18] sm:$0xf]
      %v5010 = vld [vmem:[%s5004 + $0x1c] sm:$0xf]
      %v5011 = vld [vmem:[%s5004 + $0x24] sm:$0xf]
      %v5012 = vld [vmem:[%s5004 + $0x28] sm:$0xf]
      %v5013 = vld [vmem:[%s5004 + $0x30] sm:$0xf]
      %v5014 = vld [vmem:[%s5004 + $0x34] sm:$0xf]
      %v5015 = vld [vmem:[%s5004 + $0x3c] sm:$0xf]
      %v5016 = vld [vmem:[%s5004 + $0x40] sm:$0xf]
      %v5017 = vld [vmem:[%s5004 + $0x48] sm:$0xf]
      %v5018 = vld [vmem:[%s5004 + $0x4c] sm:$0xf]
      %v5019 = vld [vmem:[%s5004 + $0x54] sm:$0xf]
      %v5020 = vld [vmem:[%s5004 + $0x58] sm:$0xf]
      %s5021 = scalar_lea.vmem %s3, 6
      %v5022 = vld [vmem:[%s5021] sm:$0x3]
      %v5039 = vunpack.c.l.b16 %v5005
      %v5040 = vunpack.c.l.b16 %v5006
      %v5041 = vunpack.c.l.b16 %v5007
      %v5042 = vunpack.c.l.b16 %v5008
      %v5043 = vunpack.c.l.b16 %v5009
      %v5044 = vunpack.c.l.b16 %v5010
      %v5045 = vunpack.c.l.b16 %v5011
      %v5046 = vunpack.c.l.b16 %v5012
      %v5047 = vunpack.c.l.b16 %v5013
      %v5048 = vunpack.c.l.b16 %v5014
      %v5049 = vunpack.c.l.b16 %v5015
      %v5050 = vunpack.c.l.b16 %v5016
      %v5051 = vunpack.c.l.b16 %v5017
      %v5052 = vunpack.c.l.b16 %v5018
      %v5053 = vunpack.c.l.b16 %v5019
      %v5054 = vunpack.c.l.b16 %v5020
      %v5055 = vpack.c.b16 %v5040, %v5039
      %v5056 = vpack.c.b16 %v5042, %v5041
      %v5057 = vpack.c.b16 %v5044, %v5043
      %v5058 = vpack.c.b16 %v5046, %v5045
      %v5059 = vpack.c.b16 %v5048, %v5047
      %v5060 = vpack.c.b16 %v5050, %v5049
      %v5061 = vpack.c.b16 %v5052, %v5051
      %v5062 = vpack.c.b16 %v5054, %v5053
      %v5064 = vsel %vm1101, %v5055, 0
      %v5067 = vsel %vm1101, %v5056, 0
      %v5070 = vsel %vm1101, %v5057, 0
      %v5073 = vsel %vm1101, %v5058, 0
      %v5076 = vsel %vm1101, %v5059, 0
      %v5079 = vsel %vm1101, %v5060, 0
      %v5082 = vsel %vm1101, %v5061, 0
      %v5085 = vsel %vm1101, %v5062, 0
      %v5088 = vsel %vm1132, %v5022, 0
      %5090 = vmatprep.subr.bf16.mxu0 0
      %5091 = vmatpush1.bf16.msra.mxu0 %v5088
      %5092 = vmatprep.subr.bf16.mxu0 0
      %5093 = vmatpush1.bf16.msra.mxu0 0
      %5094 = vmatprep.subr.bf16.mxu0 0
      %5095 = vmatpush1.bf16.msra.mxu0 0
      %5096 = vmatprep.subr.bf16.mxu0 0
      %5097 = vmatpush1.bf16.msra.mxu0 0
      %5098 = vmatprep.subr.bf16.mxu0 0
      %5099 = vmatpush1.bf16.msra.mxu0 0
      %5100 = vmatprep.subr.bf16.mxu0 0
      %5101 = vmatpush1.bf16.msra.mxu0 0
      %5102 = vmatprep.subr.bf16.mxu0 0
      %5103 = vmatpush1.bf16.msra.mxu0 0
      %5104 = vmatprep.subr.bf16.mxu0 0
      %5105 = vmatpush1.bf16.msra.mxu0 0
      %5106 = vmatprep.subr.bf16.mxu0 0
      %5107 = vmatpush1.bf16.msra.mxu0 0
      %5108 = vmatprep.subr.bf16.mxu0 0
      %5109 = vmatpush1.bf16.msra.mxu0 0
      %5110 = vmatprep.subr.bf16.mxu0 0
      %5111 = vmatpush1.bf16.msra.mxu0 0
      %5112 = vmatprep.subr.bf16.mxu0 0
      %5113 = vmatpush1.bf16.msra.mxu0 0
      %5114 = vmatprep.subr.bf16.mxu0 0
      %5115 = vmatpush1.bf16.msra.mxu0 0
      %5116 = vmatprep.subr.bf16.mxu0 0
      %5117 = vmatpush1.bf16.msra.mxu0 0
      %5118 = vmatprep.subr.bf16.mxu0 0
      %5119 = vmatpush1.bf16.msra.mxu0 0
      %5120 = vmatprep.subr.bf16.mxu0 0
      %5121 = vmatpush1.bf16.msra.mxu0 0
      %5122 = vmatprep.mubr.bf16.mxu0 0
      %5123 = vmatmul.mubr.bf16.gmra.mrb[0].mxu0 %v5064
      %v5124 = vpop.f32.mrb[0].mxu0
      %v5125 = vadd.f32 0.0, %v5124
      %v5126 = vpop.f32.mrb[0].mxu0
      %v5127 = vpop.f32.mrb[0].mxu0
      %v5128 = vadd.f32 0.0, %v5127
      %v5129 = vpop.f32.mrb[0].mxu0
      %5130 = vmatprep.mubr.bf16.mxu0 0
      %5131 = vmatmul.mubr.bf16.gmra.mrb[0].mxu0 %v5067
      %v5132 = vpop.f32.mrb[0].mxu0
      %v5133 = vadd.f32 0.0, %v5132
      %v5134 = vpop.f32.mrb[0].mxu0
      %v5135 = vpop.f32.mrb[0].mxu0
      %v5136 = vadd.f32 0.0, %v5135
      %v5137 = vpop.f32.mrb[0].mxu0
      %5138 = vmatprep.mubr.bf16.mxu0 0
      %5139 = vmatmul.mubr.bf16.gmra.mrb[0].mxu0 %v5070
      %v5140 = vpop.f32.mrb[0].mxu0
      %v5141 = vadd.f32 0.0, %v5140
      %v5142 = vpop.f32.mrb[0].mxu0
      %v5143 = vpop.f32.mrb[0].mxu0
      %v5144 = vadd.f32 0.0, %v5143
      %v5145 = vpop.f32.mrb[0].mxu0
      %5146 = vmatprep.mubr.bf16.mxu0 0
      %5147 = vmatmul.mubr.bf16.gmra.mrb[0].mxu0 %v5073
      %v5148 = vpop.f32.mrb[0].mxu0
      %v5149 = vadd.f32 0.0, %v5148
      %v5150 = vpop.f32.mrb[0].mxu0
      %v5151 = vpop.f32.mrb[0].mxu0
      %v5152 = vadd.f32 0.0, %v5151
      %v5153 = vpop.f32.mrb[0].mxu0
      %5154 = vmatprep.mubr.bf16.mxu0 0
      %5155 = vmatmul.mubr.bf16.gmra.mrb[0].mxu0 %v5076
      %v5156 = vpop.f32.mrb[0].mxu0
      %v5157 = vadd.f32 0.0, %v5156
      %v5158 = vpop.f32.mrb[0].mxu0
      %v5159 = vpop.f32.mrb[0].mxu0
      %v5160 = vadd.f32 0.0, %v5159
      %v5161 = vpop.f32.mrb[0].mxu0
      %5162 = vmatprep.mubr.bf16.mxu0 0
      %5163 = vmatmul.mubr.bf16.gmra.mrb[0].mxu0 %v5079
      %v5164 = vpop.f32.mrb[0].mxu0
      %v5165 = vadd.f32 0.0, %v5164
      %v5166 = vpop.f32.mrb[0].mxu0
      %v5167 = vpop.f32.mrb[0].mxu0
      %v5168 = vadd.f32 0.0, %v5167
      %v5169 = vpop.f32.mrb[0].mxu0
      %5170 = vmatprep.mubr.bf16.mxu0 0
      %5171 = vmatmul.mubr.bf16.gmra.mrb[0].mxu0 %v5082
      %v5172 = vpop.f32.mrb[0].mxu0
      %v5173 = vadd.f32 0.0, %v5172
      %v5174 = vpop.f32.mrb[0].mxu0
      %v5175 = vpop.f32.mrb[0].mxu0
      %v5176 = vadd.f32 0.0, %v5175
      %v5177 = vpop.f32.mrb[0].mxu0
      %5178 = vmatprep.mubr.bf16.mxu0 0
      %5179 = vmatmul.mubr.bf16.gmra.mrb[0].mxu0 %v5085
      %v5180 = vpop.f32.mrb[0].mxu0
      %v5181 = vadd.f32 0.0, %v5180
      %v5182 = vpop.f32.mrb[0].mxu0
      %v5183 = vpop.f32.mrb[0].mxu0
      %v5184 = vadd.f32 0.0, %v5183
      %v5185 = vpop.f32.mrb[0].mxu0
      %5186 = vdwg.mxu0
      %v5187 = vadd.f32 %v4988, %v5125
      %v5188 = vadd.f32 %v4989, %v5128
      %v5189 = vadd.f32 %v4990, %v5133
      %v5190 = vadd.f32 %v4991, %v5136
      %v5191 = vadd.f32 %v4992, %v5141
      %v5192 = vadd.f32 %v4993, %v5144
      %v5193 = vadd.f32 %v4994, %v5149
      %v5194 = vadd.f32 %v4995, %v5152
      %v5195 = vadd.f32 %v4996, %v5157
      %v5196 = vadd.f32 %v4997, %v5160
      %v5197 = vadd.f32 %v4998, %v5165
      %v5198 = vadd.f32 %v4999, %v5168
      %v5199 = vadd.f32 %v5000, %v5173
      %v5200 = vadd.f32 %v5001, %v5176
      %v5201 = vadd.f32 %v5002, %v5181
      %v5202 = vadd.f32 %v5003, %v5184
      %v5203 = vld [vmem:[%s5004] sm:$0xf]
      %v5204 = vld [vmem:[%s5004 + $0x4] sm:$0xf]
      %v5205 = vld [vmem:[%s5004 + $0x8] sm:$0x1]
      %v5206 = vld [vmem:[%s5004 + $0xc] sm:$0xf]
      %v5207 = vld [vmem:[%s5004 + $0x10] sm:$0xf]
      %v5208 = vld [vmem:[%s5004 + $0x14] sm:$0x1]
      %v5209 = vld [vmem:[%s5004 + $0x18] sm:$0xf]
      %v5210 = vld [vmem:[%s5004 + $0x1c] sm:$0xf]
      %v5211 = vld [vmem:[%s5004 + $0x20] sm:$0x1]
      %v5212 = vld [vmem:[%s5004 + $0x24] sm:$0xf]
      %v5213 = vld [vmem:[%s5004 + $0x28] sm:$0xf]
      %v5214 = vld [vmem:[%s5004 + $0x2c] sm:$0x1]
      %v5215 = vld [vmem:[%s5004 + $0x30] sm:$0xf]
      %v5216 = vld [vmem:[%s5004 + $0x34] sm:$0xf]
      %v5217 = vld [vmem:[%s5004 + $0x38] sm:$0x1]
      %v5218 = vld [vmem:[%s5004 + $0x3c] sm:$0xf]
      %v5219 = vld [vmem:[%s5004 + $0x40] sm:$0xf]
      %v5220 = vld [vmem:[%s5004 + $0x44] sm:$0x1]
      %v5221 = vld [vmem:[%s5004 + $0x48] sm:$0xf]
      %v5222 = vld [vmem:[%s5004 + $0x4c] sm:$0xf]
      %v5223 = vld [vmem:[%s5004 + $0x50] sm:$0x1]
      %v5224 = vld [vmem:[%s5004 + $0x54] sm:$0xf]
      %v5225 = vld [vmem:[%s5004 + $0x58] sm:$0xf]
      %v5226 = vld [vmem:[%s5004 + $0x5c] sm:$0x1]
      %v5228 = vshrl.u32 %v5203, 16
      %v5230 = vrot.slane %v5228, 4
      %v5231 = vshll.u32 %v5203, 16
      %v5233 = vrot.slane %v5231, 5
      %v5234 = vor.u32 %v5230, %v5233
      %v5235 = vrot.slane %v5234, 4
      %v5237 = vshll.u32 %v5204, 16
      %v5239 = vrot.slane %v5237, 5
      %v5240 = vsel %vm828, %v5235, %v5239
      %v5241 = vshrl.u32 %v5204, 16
      %v5243 = vrot.slane %v5241, 4
      %v5244 = vor.u32 %v5243, %v5239
      %v5245 = vrot.slane %v5244, 4
      %v5247 = vshll.u32 %v5205, 16
      %v5249 = vrot.slane %v5247, 5
      %v5250 = vsel %vm828, %v5245, %v5249
      %v5252 = vshrl.u32 %v5206, 16
      %v5254 = vrot.slane %v5252, 4
      %v5255 = vshll.u32 %v5206, 16
      %v5257 = vrot.slane %v5255, 5
      %v5258 = vor.u32 %v5254, %v5257
      %v5259 = vrot.slane %v5258, 4
      %v5261 = vshll.u32 %v5207, 16
      %v5263 = vrot.slane %v5261, 5
      %v5264 = vsel %vm828, %v5259, %v5263
      %v5265 = vshrl.u32 %v5207, 16
      %v5267 = vrot.slane %v5265, 4
      %v5268 = vor.u32 %v5267, %v5263
      %v5269 = vrot.slane %v5268, 4
      %v5271 = vshll.u32 %v5208, 16
      %v5273 = vrot.slane %v5271, 5
      %v5274 = vsel %vm828, %v5269, %v5273
      %v5276 = vshrl.u32 %v5209, 16
      %v5278 = vrot.slane %v5276, 4
      %v5279 = vshll.u32 %v5209, 16
      %v5281 = vrot.slane %v5279, 5
      %v5282 = vor.u32 %v5278, %v5281
      %v5283 = vrot.slane %v5282, 4
      %v5285 = vshll.u32 %v5210, 16
      %v5287 = vrot.slane %v5285, 5
      %v5288 = vsel %vm828, %v5283, %v5287
      %v5289 = vshrl.u32 %v5210, 16
      %v5291 = vrot.slane %v5289, 4
      %v5292 = vor.u32 %v5291, %v5287
      %v5293 = vrot.slane %v5292, 4
      %v5295 = vshll.u32 %v5211, 16
      %v5297 = vrot.slane %v5295, 5
      %v5298 = vsel %vm828, %v5293, %v5297
      %v5300 = vshrl.u32 %v5212, 16
      %v5302 = vrot.slane %v5300, 4
      %v5303 = vshll.u32 %v5212, 16
      %v5305 = vrot.slane %v5303, 5
      %v5306 = vor.u32 %v5302, %v5305
      %v5307 = vrot.slane %v5306, 4
      %v5309 = vshll.u32 %v5213, 16
      %v5311 = vrot.slane %v5309, 5
      %v5312 = vsel %vm828, %v5307, %v5311
      %v5313 = vshrl.u32 %v5213, 16
      %v5315 = vrot.slane %v5313, 4
      %v5316 = vor.u32 %v5315, %v5311
      %v5317 = vrot.slane %v5316, 4
      %v5319 = vshll.u32 %v5214, 16
      %v5321 = vrot.slane %v5319, 5
      %v5322 = vsel %vm828, %v5317, %v5321
      %v5324 = vshrl.u32 %v5215, 16
      %v5326 = vrot.slane %v5324, 4
      %v5327 = vshll.u32 %v5215, 16
      %v5329 = vrot.slane %v5327, 5
      %v5330 = vor.u32 %v5326, %v5329
      %v5331 = vrot.slane %v5330, 4
      %v5333 = vshll.u32 %v5216, 16
      %v5335 = vrot.slane %v5333, 5
      %v5336 = vsel %vm828, %v5331, %v5335
      %v5337 = vshrl.u32 %v5216, 16
      %v5339 = vrot.slane %v5337, 4
      %v5340 = vor.u32 %v5339, %v5335
      %v5341 = vrot.slane %v5340, 4
      %v5343 = vshll.u32 %v5217, 16
      %v5345 = vrot.slane %v5343, 5
      %v5346 = vsel %vm828, %v5341, %v5345
      %v5348 = vshrl.u32 %v5218, 16
      %v5350 = vrot.slane %v5348, 4
      %v5351 = vshll.u32 %v5218, 16
      %v5353 = vrot.slane %v5351, 5
      %v5354 = vor.u32 %v5350, %v5353
      %v5355 = vrot.slane %v5354, 4
      %v5357 = vshll.u32 %v5219, 16
      %v5359 = vrot.slane %v5357, 5
      %v5360 = vsel %vm828, %v5355, %v5359
      %v5361 = vshrl.u32 %v5219, 16
      %v5363 = vrot.slane %v5361, 4
      %v5364 = vor.u32 %v5363, %v5359
      %v5365 = vrot.slane %v5364, 4
      %v5367 = vshll.u32 %v5220, 16
      %v5369 = vrot.slane %v5367, 5
      %v5370 = vsel %vm828, %v5365, %v5369
      %v5372 = vshrl.u32 %v5221, 16
      %v5374 = vrot.slane %v5372, 4
      %v5375 = vshll.u32 %v5221, 16
      %v5377 = vrot.slane %v5375, 5
      %v5378 = vor.u32 %v5374, %v5377
      %v5379 = vrot.slane %v5378, 4
      %v5381 = vshll.u32 %v5222, 16
      %v5383 = vrot.slane %v5381, 5
      %v5384 = vsel %vm828, %v5379, %v5383
      %v5385 = vshrl.u32 %v5222, 16
      %v5387 = vrot.slane %v5385, 4
      %v5388 = vor.u32 %v5387, %v5383
      %v5389 = vrot.slane %v5388, 4
      %v5391 = vshll.u32 %v5223, 16
      %v5393 = vrot.slane %v5391, 5
      %v5394 = vsel %vm828, %v5389, %v5393
      %v5396 = vshrl.u32 %v5224, 16
      %v5398 = vrot.slane %v5396, 4
      %v5399 = vshll.u32 %v5224, 16
      %v5401 = vrot.slane %v5399, 5
      %v5402 = vor.u32 %v5398, %v5401
      %v5403 = vrot.slane %v5402, 4
      %v5405 = vshll.u32 %v5225, 16
      %v5407 = vrot.slane %v5405, 5
      %v5408 = vsel %vm828, %v5403, %v5407
      %v5409 = vshrl.u32 %v5225, 16
      %v5411 = vrot.slane %v5409, 4
      %v5412 = vor.u32 %v5411, %v5407
      %v5413 = vrot.slane %v5412, 4
      %v5415 = vshll.u32 %v5226, 16
      %v5417 = vrot.slane %v5415, 5
      %v5418 = vsel %vm828, %v5413, %v5417
      %s5419 = scalar_lea.vmem %s3, 8
      %v5420 = vld [vmem:[%s5419] sm:$0x3]
      %v5421 = vunpack.c.l.b16 %v5240
      %v5422 = vunpack.c.l.b16 %v5250
      %v5423 = vunpack.c.l.b16 %v5264
      %v5424 = vunpack.c.l.b16 %v5274
      %v5425 = vunpack.c.l.b16 %v5288
      %v5426 = vunpack.c.l.b16 %v5298
      %v5427 = vunpack.c.l.b16 %v5312
      %v5428 = vunpack.c.l.b16 %v5322
      %v5429 = vunpack.c.l.b16 %v5336
      %v5430 = vunpack.c.l.b16 %v5346
      %v5431 = vunpack.c.l.b16 %v5360
      %v5432 = vunpack.c.l.b16 %v5370
      %v5433 = vunpack.c.l.b16 %v5384
      %v5434 = vunpack.c.l.b16 %v5394
      %v5435 = vunpack.c.l.b16 %v5408
      %v5436 = vunpack.c.l.b16 %v5418
      %v5437 = vpack.c.b16 %v5422, %v5421
      %v5438 = vpack.c.b16 %v5424, %v5423
      %v5439 = vpack.c.b16 %v5426, %v5425
      %v5440 = vpack.c.b16 %v5428, %v5427
      %v5441 = vpack.c.b16 %v5430, %v5429
      %v5442 = vpack.c.b16 %v5432, %v5431
      %v5443 = vpack.c.b16 %v5434, %v5433
      %v5444 = vpack.c.b16 %v5436, %v5435
      %v5446 = vsel %vm1101, %v5437, 0
      %v5449 = vsel %vm1101, %v5438, 0
      %v5452 = vsel %vm1101, %v5439, 0
      %v5455 = vsel %vm1101, %v5440, 0
      %v5458 = vsel %vm1101, %v5441, 0
      %v5461 = vsel %vm1101, %v5442, 0
      %v5464 = vsel %vm1101, %v5443, 0
      %v5467 = vsel %vm1101, %v5444, 0
      %v5470 = vsel %vm1132, %v5420, 0
      %5472 = vmatprep.subr.bf16.mxu0 0
      %5473 = vmatpush1.bf16.msra.mxu0 %v5470
      %5474 = vmatprep.subr.bf16.mxu0 0
      %5475 = vmatpush1.bf16.msra.mxu0 0
      %5476 = vmatprep.subr.bf16.mxu0 0
      %5477 = vmatpush1.bf16.msra.mxu0 0
      %5478 = vmatprep.subr.bf16.mxu0 0
      %5479 = vmatpush1.bf16.msra.mxu0 0
      %5480 = vmatprep.subr.bf16.mxu0 0
      %5481 = vmatpush1.bf16.msra.mxu0 0
      %5482 = vmatprep.subr.bf16.mxu0 0
      %5483 = vmatpush1.bf16.msra.mxu0 0
      %5484 = vmatprep.subr.bf16.mxu0 0
      %5485 = vmatpush1.bf16.msra.mxu0 0
      %5486 = vmatprep.subr.bf16.mxu0 0
      %5487 = vmatpush1.bf16.msra.mxu0 0
      %5488 = vmatprep.subr.bf16.mxu0 0
      %5489 = vmatpush1.bf16.msra.mxu0 0
      %5490 = vmatprep.subr.bf16.mxu0 0
      %5491 = vmatpush1.bf16.msra.mxu0 0
      %5492 = vmatprep.subr.bf16.mxu0 0
      %5493 = vmatpush1.bf16.msra.mxu0 0
      %5494 = vmatprep.subr.bf16.mxu0 0
      %5495 = vmatpush1.bf16.msra.mxu0 0
      %5496 = vmatprep.subr.bf16.mxu0 0
      %5497 = vmatpush1.bf16.msra.mxu0 0
      %5498 = vmatprep.subr.bf16.mxu0 0
      %5499 = vmatpush1.bf16.msra.mxu0 0
      %5500 = vmatprep.subr.bf16.mxu0 0
      %5501 = vmatpush1.bf16.msra.mxu0 0
      %5502 = vmatprep.subr.bf16.mxu0 0
      %5503 = vmatpush1.bf16.msra.mxu0 0
      %5504 = vmatprep.mubr.bf16.mxu0 0
      %5505 = vmatmul.mubr.bf16.gmra.mrb[0].mxu0 %v5446
      %v5506 = vpop.f32.mrb[0].mxu0
      %v5507 = vadd.f32 0.0, %v5506
      %v5508 = vpop.f32.mrb[0].mxu0
      %v5509 = vpop.f32.mrb[0].mxu0
      %v5510 = vadd.f32 0.0, %v5509
      %v5511 = vpop.f32.mrb[0].mxu0
      %5512 = vmatprep.mubr.bf16.mxu0 0
      %5513 = vmatmul.mubr.bf16.gmra.mrb[0].mxu0 %v5449
      %v5514 = vpop.f32.mrb[0].mxu0
      %v5515 = vadd.f32 0.0, %v5514
      %v5516 = vpop.f32.mrb[0].mxu0
      %v5517 = vpop.f32.mrb[0].mxu0
      %v5518 = vadd.f32 0.0, %v5517
      %v5519 = vpop.f32.mrb[0].mxu0
      %5520 = vmatprep.mubr.bf16.mxu0 0
      %5521 = vmatmul.mubr.bf16.gmra.mrb[0].mxu0 %v5452
      %v5522 = vpop.f32.mrb[0].mxu0
      %v5523 = vadd.f32 0.0, %v5522
      %v5524 = vpop.f32.mrb[0].mxu0
      %v5525 = vpop.f32.mrb[0].mxu0
      %v5526 = vadd.f32 0.0, %v5525
      %v5527 = vpop.f32.mrb[0].mxu0
      %5528 = vmatprep.mubr.bf16.mxu0 0
      %5529 = vmatmul.mubr.bf16.gmra.mrb[0].mxu0 %v5455
      %v5530 = vpop.f32.mrb[0].mxu0
      %v5531 = vadd.f32 0.0, %v5530
      %v5532 = vpop.f32.mrb[0].mxu0
      %v5533 = vpop.f32.mrb[0].mxu0
      %v5534 = vadd.f32 0.0, %v5533
      %v5535 = vpop.f32.mrb[0].mxu0
      %5536 = vmatprep.mubr.bf16.mxu0 0
      %5537 = vmatmul.mubr.bf16.gmra.mrb[0].mxu0 %v5458
      %v5538 = vpop.f32.mrb[0].mxu0
      %v5539 = vadd.f32 0.0, %v5538
      %v5540 = vpop.f32.mrb[0].mxu0
      %v5541 = vpop.f32.mrb[0].mxu0
      %v5542 = vadd.f32 0.0, %v5541
      %v5543 = vpop.f32.mrb[0].mxu0
      %5544 = vmatprep.mubr.bf16.mxu0 0
      %5545 = vmatmul.mubr.bf16.gmra.mrb[0].mxu0 %v5461
      %v5546 = vpop.f32.mrb[0].mxu0
      %v5547 = vadd.f32 0.0, %v5546
      %v5548 = vpop.f32.mrb[0].mxu0
      %v5549 = vpop.f32.mrb[0].mxu0
      %v5550 = vadd.f32 0.0, %v5549
      %v5551 = vpop.f32.mrb[0].mxu0
      %5552 = vmatprep.mubr.bf16.mxu0 0
      %5553 = vmatmul.mubr.bf16.gmra.mrb[0].mxu0 %v5464
      %v5554 = vpop.f32.mrb[0].mxu0
      %v5555 = vadd.f32 0.0, %v5554
      %v5556 = vpop.f32.mrb[0].mxu0
      %v5557 = vpop.f32.mrb[0].mxu0
      %v5558 = vadd.f32 0.0, %v5557
      %v5559 = vpop.f32.mrb[0].mxu0
      %5560 = vmatprep.mubr.bf16.mxu0 0
      %5561 = vmatmul.mubr.bf16.gmra.mrb[0].mxu0 %v5467
      %v5562 = vpop.f32.mrb[0].mxu0
      %v5563 = vadd.f32 0.0, %v5562
      %v5564 = vpop.f32.mrb[0].mxu0
      %v5565 = vpop.f32.mrb[0].mxu0
      %v5566 = vadd.f32 0.0, %v5565
      %v5567 = vpop.f32.mrb[0].mxu0
      %5568 = vdwg.mxu0
      %v5569 = vadd.f32 %v5187, %v5507
      %v5570 = vadd.f32 %v5188, %v5510
      %v5571 = vadd.f32 %v5189, %v5515
      %v5572 = vadd.f32 %v5190, %v5518
      %v5573 = vadd.f32 %v5191, %v5523
      %v5574 = vadd.f32 %v5192, %v5526
      %v5575 = vadd.f32 %v5193, %v5531
      %v5576 = vadd.f32 %v5194, %v5534
      %v5577 = vadd.f32 %v5195, %v5539
      %v5578 = vadd.f32 %v5196, %v5542
      %v5579 = vadd.f32 %v5197, %v5547
      %v5580 = vadd.f32 %v5198, %v5550
      %v5581 = vadd.f32 %v5199, %v5555
      %v5582 = vadd.f32 %v5200, %v5558
      %v5583 = vadd.f32 %v5201, %v5563
      %v5584 = vadd.f32 %v5202, %v5566
      %v5585 = vld [vmem:[%s5004] sm:$0xe]
      %v5586 = vld [vmem:[%s5004 + $0xc] sm:$0xe]
      %v5587 = vld [vmem:[%s5004 + $0x18] sm:$0xe]
      %v5588 = vld [vmem:[%s5004 + $0x24] sm:$0xe]
      %v5589 = vld [vmem:[%s5004 + $0x30] sm:$0xe]
      %v5590 = vld [vmem:[%s5004 + $0x3c] sm:$0xe]
      %v5591 = vld [vmem:[%s5004 + $0x48] sm:$0xe]
      %v5592 = vld [vmem:[%s5004 + $0x54] sm:$0xe]
      %v5617 = vrot.slane %v5585, 5
      %v5618 = vrot.slane %v5617, 4
      %v5619 = vrot.slane %v5204, 5
      %v5620 = vsel %vm1477, %v5618, %v5619
      %v5621 = vrot.slane %v5619, 4
      %v5622 = vrot.slane %v5205, 5
      %v5623 = vsel %vm1477, %v5621, %v5622
      %v5624 = vrot.slane %v5586, 5
      %v5625 = vrot.slane %v5624, 4
      %v5626 = vrot.slane %v5207, 5
      %v5627 = vsel %vm1477, %v5625, %v5626
      %v5628 = vrot.slane %v5626, 4
      %v5629 = vrot.slane %v5208, 5
      %v5630 = vsel %vm1477, %v5628, %v5629
      %v5631 = vrot.slane %v5587, 5
      %v5632 = vrot.slane %v5631, 4
      %v5633 = vrot.slane %v5210, 5
      %v5634 = vsel %vm1477, %v5632, %v5633
      %v5635 = vrot.slane %v5633, 4
      %v5636 = vrot.slane %v5211, 5
      %v5637 = vsel %vm1477, %v5635, %v5636
      %v5638 = vrot.slane %v5588, 5
      %v5639 = vrot.slane %v5638, 4
      %v5640 = vrot.slane %v5213, 5
      %v5641 = vsel %vm1477, %v5639, %v5640
      %v5642 = vrot.slane %v5640, 4
      %v5643 = vrot.slane %v5214, 5
      %v5644 = vsel %vm1477, %v5642, %v5643
      %v5645 = vrot.slane %v5589, 5
      %v5646 = vrot.slane %v5645, 4
      %v5647 = vrot.slane %v5216, 5
      %v5648 = vsel %vm1477, %v5646, %v5647
      %v5649 = vrot.slane %v5647, 4
      %v5650 = vrot.slane %v5217, 5
      %v5651 = vsel %vm1477, %v5649, %v5650
      %v5652 = vrot.slane %v5590, 5
      %v5653 = vrot.slane %v5652, 4
      %v5654 = vrot.slane %v5219, 5
      %v5655 = vsel %vm1477, %v5653, %v5654
      %v5656 = vrot.slane %v5654, 4
      %v5657 = vrot.slane %v5220, 5
      %v5658 = vsel %vm1477, %v5656, %v5657
      %v5659 = vrot.slane %v5591, 5
      %v5660 = vrot.slane %v5659, 4
      %v5661 = vrot.slane %v5222, 5
      %v5662 = vsel %vm1477, %v5660, %v5661
      %v5663 = vrot.slane %v5661, 4
      %v5664 = vrot.slane %v5223, 5
      %v5665 = vsel %vm1477, %v5663, %v5664
      %v5666 = vrot.slane %v5592, 5
      %v5667 = vrot.slane %v5666, 4
      %v5668 = vrot.slane %v5225, 5
      %v5669 = vsel %vm1477, %v5667, %v5668
      %v5670 = vrot.slane %v5668, 4
      %v5671 = vrot.slane %v5226, 5
      %v5672 = vsel %vm1477, %v5670, %v5671
      %s5673 = scalar_lea.vmem %s3, 10
      %v5674 = vld [vmem:[%s5673] sm:$0x3]
      %v5675 = vunpack.c.l.b16 %v5620
      %v5676 = vunpack.c.l.b16 %v5623
      %v5677 = vunpack.c.l.b16 %v5627
      %v5678 = vunpack.c.l.b16 %v5630
      %v5679 = vunpack.c.l.b16 %v5634
      %v5680 = vunpack.c.l.b16 %v5637
      %v5681 = vunpack.c.l.b16 %v5641
      %v5682 = vunpack.c.l.b16 %v5644
      %v5683 = vunpack.c.l.b16 %v5648
      %v5684 = vunpack.c.l.b16 %v5651
      %v5685 = vunpack.c.l.b16 %v5655
      %v5686 = vunpack.c.l.b16 %v5658
      %v5687 = vunpack.c.l.b16 %v5662
      %v5688 = vunpack.c.l.b16 %v5665
      %v5689 = vunpack.c.l.b16 %v5669
      %v5690 = vunpack.c.l.b16 %v5672
      %v5691 = vpack.c.b16 %v5676, %v5675
      %v5692 = vpack.c.b16 %v5678, %v5677
      %v5693 = vpack.c.b16 %v5680, %v5679
      %v5694 = vpack.c.b16 %v5682, %v5681
      %v5695 = vpack.c.b16 %v5684, %v5683
      %v5696 = vpack.c.b16 %v5686, %v5685
      %v5697 = vpack.c.b16 %v5688, %v5687
      %v5698 = vpack.c.b16 %v5690, %v5689
      %v5700 = vsel %vm1101, %v5691, 0
      %v5703 = vsel %vm1101, %v5692, 0
      %v5706 = vsel %vm1101, %v5693, 0
      %v5709 = vsel %vm1101, %v5694, 0
      %v5712 = vsel %vm1101, %v5695, 0
      %v5715 = vsel %vm1101, %v5696, 0
      %v5718 = vsel %vm1101, %v5697, 0
      %v5721 = vsel %vm1101, %v5698, 0
      %v5724 = vsel %vm1132, %v5674, 0
      %5726 = vmatprep.subr.bf16.mxu0 0
      %5727 = vmatpush1.bf16.msra.mxu0 %v5724
      %5728 = vmatprep.subr.bf16.mxu0 0
      %5729 = vmatpush1.bf16.msra.mxu0 0
      %5730 = vmatprep.subr.bf16.mxu0 0
      %5731 = vmatpush1.bf16.msra.mxu0 0
      %5732 = vmatprep.subr.bf16.mxu0 0
      %5733 = vmatpush1.bf16.msra.mxu0 0
      %5734 = vmatprep.subr.bf16.mxu0 0
      %5735 = vmatpush1.bf16.msra.mxu0 0
      %5736 = vmatprep.subr.bf16.mxu0 0
      %5737 = vmatpush1.bf16.msra.mxu0 0
      %5738 = vmatprep.subr.bf16.mxu0 0
      %5739 = vmatpush1.bf16.msra.mxu0 0
      %5740 = vmatprep.subr.bf16.mxu0 0
      %5741 = vmatpush1.bf16.msra.mxu0 0
      %5742 = vmatprep.subr.bf16.mxu0 0
      %5743 = vmatpush1.bf16.msra.mxu0 0
      %5744 = vmatprep.subr.bf16.mxu0 0
      %5745 = vmatpush1.bf16.msra.mxu0 0
      %5746 = vmatprep.subr.bf16.mxu0 0
      %5747 = vmatpush1.bf16.msra.mxu0 0
      %5748 = vmatprep.subr.bf16.mxu0 0
      %5749 = vmatpush1.bf16.msra.mxu0 0
      %5750 = vmatprep.subr.bf16.mxu0 0
      %5751 = vmatpush1.bf16.msra.mxu0 0
      %5752 = vmatprep.subr.bf16.mxu0 0
      %5753 = vmatpush1.bf16.msra.mxu0 0
      %5754 = vmatprep.subr.bf16.mxu0 0
      %5755 = vmatpush1.bf16.msra.mxu0 0
      %5756 = vmatprep.subr.bf16.mxu0 0
      %5757 = vmatpush1.bf16.msra.mxu0 0
      %5758 = vmatprep.mubr.bf16.mxu0 0
      %5759 = vmatmul.mubr.bf16.gmra.mrb[0].mxu0 %v5700
      %v5760 = vpop.f32.mrb[0].mxu0
      %v5761 = vadd.f32 0.0, %v5760
      %v5762 = vpop.f32.mrb[0].mxu0
      %v5763 = vpop.f32.mrb[0].mxu0
      %v5764 = vadd.f32 0.0, %v5763
      %v5765 = vpop.f32.mrb[0].mxu0
      %5766 = vmatprep.mubr.bf16.mxu0 0
      %5767 = vmatmul.mubr.bf16.gmra.mrb[0].mxu0 %v5703
      %v5768 = vpop.f32.mrb[0].mxu0
      %v5769 = vadd.f32 0.0, %v5768
      %v5770 = vpop.f32.mrb[0].mxu0
      %v5771 = vpop.f32.mrb[0].mxu0
      %v5772 = vadd.f32 0.0, %v5771
      %v5773 = vpop.f32.mrb[0].mxu0
      %5774 = vmatprep.mubr.bf16.mxu0 0
      %5775 = vmatmul.mubr.bf16.gmra.mrb[0].mxu0 %v5706
      %v5776 = vpop.f32.mrb[0].mxu0
      %v5777 = vadd.f32 0.0, %v5776
      %v5778 = vpop.f32.mrb[0].mxu0
      %v5779 = vpop.f32.mrb[0].mxu0
      %v5780 = vadd.f32 0.0, %v5779
      %v5781 = vpop.f32.mrb[0].mxu0
      %5782 = vmatprep.mubr.bf16.mxu0 0
      %5783 = vmatmul.mubr.bf16.gmra.mrb[0].mxu0 %v5709
      %v5784 = vpop.f32.mrb[0].mxu0
      %v5785 = vadd.f32 0.0, %v5784
      %v5786 = vpop.f32.mrb[0].mxu0
      %v5787 = vpop.f32.mrb[0].mxu0
      %v5788 = vadd.f32 0.0, %v5787
      %v5789 = vpop.f32.mrb[0].mxu0
      %5790 = vmatprep.mubr.bf16.mxu0 0
      %5791 = vmatmul.mubr.bf16.gmra.mrb[0].mxu0 %v5712
      %v5792 = vpop.f32.mrb[0].mxu0
      %v5793 = vadd.f32 0.0, %v5792
      %v5794 = vpop.f32.mrb[0].mxu0
      %v5795 = vpop.f32.mrb[0].mxu0
      %v5796 = vadd.f32 0.0, %v5795
      %v5797 = vpop.f32.mrb[0].mxu0
      %5798 = vmatprep.mubr.bf16.mxu0 0
      %5799 = vmatmul.mubr.bf16.gmra.mrb[0].mxu0 %v5715
      %v5800 = vpop.f32.mrb[0].mxu0
      %v5801 = vadd.f32 0.0, %v5800
      %v5802 = vpop.f32.mrb[0].mxu0
      %v5803 = vpop.f32.mrb[0].mxu0
      %v5804 = vadd.f32 0.0, %v5803
      %v5805 = vpop.f32.mrb[0].mxu0
      %5806 = vmatprep.mubr.bf16.mxu0 0
      %5807 = vmatmul.mubr.bf16.gmra.mrb[0].mxu0 %v5718
      %v5808 = vpop.f32.mrb[0].mxu0
      %v5809 = vadd.f32 0.0, %v5808
      %v5810 = vpop.f32.mrb[0].mxu0
      %v5811 = vpop.f32.mrb[0].mxu0
      %v5812 = vadd.f32 0.0, %v5811
      %v5813 = vpop.f32.mrb[0].mxu0
      %5814 = vmatprep.mubr.bf16.mxu0 0
      %5815 = vmatmul.mubr.bf16.gmra.mrb[0].mxu0 %v5721
      %v5816 = vpop.f32.mrb[0].mxu0
      %v5817 = vadd.f32 0.0, %v5816
      %v5818 = vpop.f32.mrb[0].mxu0
      %v5819 = vpop.f32.mrb[0].mxu0
      %v5820 = vadd.f32 0.0, %v5819
      %v5821 = vpop.f32.mrb[0].mxu0
      %5822 = vdwg.mxu0
      %v5823 = vadd.f32 %v5569, %v5761
      %v5824 = vadd.f32 %v5570, %v5764
      %v5825 = vadd.f32 %v5571, %v5769
      %v5826 = vadd.f32 %v5572, %v5772
      %v5827 = vadd.f32 %v5573, %v5777
      %v5828 = vadd.f32 %v5574, %v5780
      %v5829 = vadd.f32 %v5575, %v5785
      %v5830 = vadd.f32 %v5576, %v5788
      %v5831 = vadd.f32 %v5577, %v5793
      %v5832 = vadd.f32 %v5578, %v5796
      %v5833 = vadd.f32 %v5579, %v5801
      %v5834 = vadd.f32 %v5580, %v5804
      %v5835 = vadd.f32 %v5581, %v5809
      %v5836 = vadd.f32 %v5582, %v5812
      %v5837 = vadd.f32 %v5583, %v5817
      %v5838 = vadd.f32 %v5584, %v5820
      %s5839 = scalar_lea.vmem [#allocation3], 24
      %v5840 = vld [vmem:[%s5839] sm:$0xf]
      %v5841 = vld [vmem:[%s5839 + $0x4] sm:$0xf]
      %v5842 = vld [vmem:[%s5839 + $0xc] sm:$0xf]
      %v5843 = vld [vmem:[%s5839 + $0x10] sm:$0xf]
      %v5844 = vld [vmem:[%s5839 + $0x18] sm:$0xf]
      %v5845 = vld [vmem:[%s5839 + $0x1c] sm:$0xf]
      %v5846 = vld [vmem:[%s5839 + $0x24] sm:$0xf]
      %v5847 = vld [vmem:[%s5839 + $0x28] sm:$0xf]
      %v5848 = vld [vmem:[%s5839 + $0x30] sm:$0xf]
      %v5849 = vld [vmem:[%s5839 + $0x34] sm:$0xf]
      %v5850 = vld [vmem:[%s5839 + $0x3c] sm:$0xf]
      %v5851 = vld [vmem:[%s5839 + $0x40] sm:$0xf]
      %v5852 = vld [vmem:[%s5839 + $0x48] sm:$0xf]
      %v5853 = vld [vmem:[%s5839 + $0x4c] sm:$0xf]
      %v5854 = vld [vmem:[%s5839 + $0x54] sm:$0xf]
      %v5855 = vld [vmem:[%s5839 + $0x58] sm:$0xf]
      %s5856 = scalar_lea.vmem %s3, 12
      %v5857 = vld [vmem:[%s5856] sm:$0x3]
      %v5874 = vunpack.c.l.b16 %v5840
      %v5875 = vunpack.c.l.b16 %v5841
      %v5876 = vunpack.c.l.b16 %v5842
      %v5877 = vunpack.c.l.b16 %v5843
      %v5878 = vunpack.c.l.b16 %v5844
      %v5879 = vunpack.c.l.b16 %v5845
      %v5880 = vunpack.c.l.b16 %v5846
      %v5881 = vunpack.c.l.b16 %v5847
      %v5882 = vunpack.c.l.b16 %v5848
      %v5883 = vunpack.c.l.b16 %v5849
      %v5884 = vunpack.c.l.b16 %v5850
      %v5885 = vunpack.c.l.b16 %v5851
      %v5886 = vunpack.c.l.b16 %v5852
      %v5887 = vunpack.c.l.b16 %v5853
      %v5888 = vunpack.c.l.b16 %v5854
      %v5889 = vunpack.c.l.b16 %v5855
      %v5890 = vpack.c.b16 %v5875, %v5874
      %v5891 = vpack.c.b16 %v5877, %v5876
      %v5892 = vpack.c.b16 %v5879, %v5878
      %v5893 = vpack.c.b16 %v5881, %v5880
      %v5894 = vpack.c.b16 %v5883, %v5882
      %v5895 = vpack.c.b16 %v5885, %v5884
      %v5896 = vpack.c.b16 %v5887, %v5886
      %v5897 = vpack.c.b16 %v5889, %v5888
      %v5899 = vsel %vm1101, %v5890, 0
      %v5902 = vsel %vm1101, %v5891, 0
      %v5905 = vsel %vm1101, %v5892, 0
      %v5908 = vsel %vm1101, %v5893, 0
      %v5911 = vsel %vm1101, %v5894, 0
      %v5914 = vsel %vm1101, %v5895, 0
      %v5917 = vsel %vm1101, %v5896, 0
      %v5920 = vsel %vm1101, %v5897, 0
      %v5923 = vsel %vm1132, %v5857, 0
      %5925 = vmatprep.subr.bf16.mxu0 0
      %5926 = vmatpush1.bf16.msra.mxu0 %v5923
      %5927 = vmatprep.subr.bf16.mxu0 0
      %5928 = vmatpush1.bf16.msra.mxu0 0
      %5929 = vmatprep.subr.bf16.mxu0 0
      %5930 = vmatpush1.bf16.msra.mxu0 0
      %5931 = vmatprep.subr.bf16.mxu0 0
      %5932 = vmatpush1.bf16.msra.mxu0 0
      %5933 = vmatprep.subr.bf16.mxu0 0
      %5934 = vmatpush1.bf16.msra.mxu0 0
      %5935 = vmatprep.subr.bf16.mxu0 0
      %5936 = vmatpush1.bf16.msra.mxu0 0
      %5937 = vmatprep.subr.bf16.mxu0 0
      %5938 = vmatpush1.bf16.msra.mxu0 0
      %5939 = vmatprep.subr.bf16.mxu0 0
      %5940 = vmatpush1.bf16.msra.mxu0 0
      %5941 = vmatprep.subr.bf16.mxu0 0
      %5942 = vmatpush1.bf16.msra.mxu0 0
      %5943 = vmatprep.subr.bf16.mxu0 0
      %5944 = vmatpush1.bf16.msra.mxu0 0
      %5945 = vmatprep.subr.bf16.mxu0 0
      %5946 = vmatpush1.bf16.msra.mxu0 0
      %5947 = vmatprep.subr.bf16.mxu0 0
      %5948 = vmatpush1.bf16.msra.mxu0 0
      %5949 = vmatprep.subr.bf16.mxu0 0
      %5950 = vmatpush1.bf16.msra.mxu0 0
      %5951 = vmatprep.subr.bf16.mxu0 0
      %5952 = vmatpush1.bf16.msra.mxu0 0
      %5953 = vmatprep.subr.bf16.mxu0 0
      %5954 = vmatpush1.bf16.msra.mxu0 0
      %5955 = vmatprep.subr.bf16.mxu0 0
      %5956 = vmatpush1.bf16.msra.mxu0 0
      %5957 = vmatprep.mubr.bf16.mxu0 0
      %5958 = vmatmul.mubr.bf16.gmra.mrb[0].mxu0 %v5899
      %v5959 = vpop.f32.mrb[0].mxu0
      %v5960 = vadd.f32 0.0, %v5959
      %v5961 = vpop.f32.mrb[0].mxu0
      %v5962 = vpop.f32.mrb[0].mxu0
      %v5963 = vadd.f32 0.0, %v5962
      %v5964 = vpop.f32.mrb[0].mxu0
      %5965 = vmatprep.mubr.bf16.mxu0 0
      %5966 = vmatmul.mubr.bf16.gmra.mrb[0].mxu0 %v5902
      %v5967 = vpop.f32.mrb[0].mxu0
      %v5968 = vadd.f32 0.0, %v5967
      %v5969 = vpop.f32.mrb[0].mxu0
      %v5970 = vpop.f32.mrb[0].mxu0
      %v5971 = vadd.f32 0.0, %v5970
      %v5972 = vpop.f32.mrb[0].mxu0
      %5973 = vmatprep.mubr.bf16.mxu0 0
      %5974 = vmatmul.mubr.bf16.gmra.mrb[0].mxu0 %v5905
      %v5975 = vpop.f32.mrb[0].mxu0
      %v5976 = vadd.f32 0.0, %v5975
      %v5977 = vpop.f32.mrb[0].mxu0
      %v5978 = vpop.f32.mrb[0].mxu0
      %v5979 = vadd.f32 0.0, %v5978
      %v5980 = vpop.f32.mrb[0].mxu0
      %5981 = vmatprep.mubr.bf16.mxu0 0
      %5982 = vmatmul.mubr.bf16.gmra.mrb[0].mxu0 %v5908
      %v5983 = vpop.f32.mrb[0].mxu0
      %v5984 = vadd.f32 0.0, %v5983
      %v5985 = vpop.f32.mrb[0].mxu0
      %v5986 = vpop.f32.mrb[0].mxu0
      %v5987 = vadd.f32 0.0, %v5986
      %v5988 = vpop.f32.mrb[0].mxu0
      %5989 = vmatprep.mubr.bf16.mxu0 0
      %5990 = vmatmul.mubr.bf16.gmra.mrb[0].mxu0 %v5911
      %v5991 = vpop.f32.mrb[0].mxu0
      %v5992 = vadd.f32 0.0, %v5991
      %v5993 = vpop.f32.mrb[0].mxu0
      %v5994 = vpop.f32.mrb[0].mxu0
      %v5995 = vadd.f32 0.0, %v5994
      %v5996 = vpop.f32.mrb[0].mxu0
      %5997 = vmatprep.mubr.bf16.mxu0 0
      %5998 = vmatmul.mubr.bf16.gmra.mrb[0].mxu0 %v5914
      %v5999 = vpop.f32.mrb[0].mxu0
      %v6000 = vadd.f32 0.0, %v5999
      %v6001 = vpop.f32.mrb[0].mxu0
      %v6002 = vpop.f32.mrb[0].mxu0
      %v6003 = vadd.f32 0.0, %v6002
      %v6004 = vpop.f32.mrb[0].mxu0
      %6005 = vmatprep.mubr.bf16.mxu0 0
      %6006 = vmatmul.mubr.bf16.gmra.mrb[0].mxu0 %v5917
      %v6007 = vpop.f32.mrb[0].mxu0
      %v6008 = vadd.f32 0.0, %v6007
      %v6009 = vpop.f32.mrb[0].mxu0
      %v6010 = vpop.f32.mrb[0].mxu0
      %v6011 = vadd.f32 0.0, %v6010
      %v6012 = vpop.f32.mrb[0].mxu0
      %6013 = vmatprep.mubr.bf16.mxu0 0
      %6014 = vmatmul.mubr.bf16.gmra.mrb[0].mxu0 %v5920
      %v6015 = vpop.f32.mrb[0].mxu0
      %v6016 = vadd.f32 0.0, %v6015
      %v6017 = vpop.f32.mrb[0].mxu0
      %v6018 = vpop.f32.mrb[0].mxu0
      %v6019 = vadd.f32 0.0, %v6018
      %v6020 = vpop.f32.mrb[0].mxu0
      %6021 = vdwg.mxu0
      %v6022 = vadd.f32 %v5823, %v5960
      %v6023 = vadd.f32 %v5824, %v5963
      %v6024 = vadd.f32 %v5825, %v5968
      %v6025 = vadd.f32 %v5826, %v5971
      %v6026 = vadd.f32 %v5827, %v5976
      %v6027 = vadd.f32 %v5828, %v5979
      %v6028 = vadd.f32 %v5829, %v5984
      %v6029 = vadd.f32 %v5830, %v5987
      %v6030 = vadd.f32 %v5831, %v5992
      %v6031 = vadd.f32 %v5832, %v5995
      %v6032 = vadd.f32 %v5833, %v6000
      %v6033 = vadd.f32 %v5834, %v6003
      %v6034 = vadd.f32 %v5835, %v6008
      %v6035 = vadd.f32 %v5836, %v6011
      %v6036 = vadd.f32 %v5837, %v6016
      %v6037 = vadd.f32 %v5838, %v6019
      %v6038 = vld [vmem:[%s5839] sm:$0xf]
      %v6039 = vld [vmem:[%s5839 + $0x4] sm:$0xf]
      %v6040 = vld [vmem:[%s5839 + $0x8] sm:$0x1]
      %v6041 = vld [vmem:[%s5839 + $0xc] sm:$0xf]
      %v6042 = vld [vmem:[%s5839 + $0x10] sm:$0xf]
      %v6043 = vld [vmem:[%s5839 + $0x14] sm:$0x1]
      %v6044 = vld [vmem:[%s5839 + $0x18] sm:$0xf]
      %v6045 = vld [vmem:[%s5839 + $0x1c] sm:$0xf]
      %v6046 = vld [vmem:[%s5839 + $0x20] sm:$0x1]
      %v6047 = vld [vmem:[%s5839 + $0x24] sm:$0xf]
      %v6048 = vld [vmem:[%s5839 + $0x28] sm:$0xf]
      %v6049 = vld [vmem:[%s5839 + $0x2c] sm:$0x1]
      %v6050 = vld [vmem:[%s5839 + $0x30] sm:$0xf]
      %v6051 = vld [vmem:[%s5839 + $0x34] sm:$0xf]
      %v6052 = vld [vmem:[%s5839 + $0x38] sm:$0x1]
      %v6053 = vld [vmem:[%s5839 + $0x3c] sm:$0xf]
      %v6054 = vld [vmem:[%s5839 + $0x40] sm:$0xf]
      %v6055 = vld [vmem:[%s5839 + $0x44] sm:$0x1]
      %v6056 = vld [vmem:[%s5839 + $0x48] sm:$0xf]
      %v6057 = vld [vmem:[%s5839 + $0x4c] sm:$0xf]
      %v6058 = vld [vmem:[%s5839 + $0x50] sm:$0x1]
      %v6059 = vld [vmem:[%s5839 + $0x54] sm:$0xf]
      %v6060 = vld [vmem:[%s5839 + $0x58] sm:$0xf]
      %v6061 = vld [vmem:[%s5839 + $0x5c] sm:$0x1]
      %v6063 = vshrl.u32 %v6038, 16
      %v6065 = vrot.slane %v6063, 4
      %v6066 = vshll.u32 %v6038, 16
      %v6068 = vrot.slane %v6066, 5
      %v6069 = vor.u32 %v6065, %v6068
      %v6070 = vrot.slane %v6069, 4
      %v6072 = vshll.u32 %v6039, 16
      %v6074 = vrot.slane %v6072, 5
      %v6075 = vsel %vm828, %v6070, %v6074
      %v6076 = vshrl.u32 %v6039, 16
      %v6078 = vrot.slane %v6076, 4
      %v6079 = vor.u32 %v6078, %v6074
      %v6080 = vrot.slane %v6079, 4
      %v6082 = vshll.u32 %v6040, 16
      %v6084 = vrot.slane %v6082, 5
      %v6085 = vsel %vm828, %v6080, %v6084
      %v6087 = vshrl.u32 %v6041, 16
      %v6089 = vrot.slane %v6087, 4
      %v6090 = vshll.u32 %v6041, 16
      %v6092 = vrot.slane %v6090, 5
      %v6093 = vor.u32 %v6089, %v6092
      %v6094 = vrot.slane %v6093, 4
      %v6096 = vshll.u32 %v6042, 16
      %v6098 = vrot.slane %v6096, 5
      %v6099 = vsel %vm828, %v6094, %v6098
      %v6100 = vshrl.u32 %v6042, 16
      %v6102 = vrot.slane %v6100, 4
      %v6103 = vor.u32 %v6102, %v6098
      %v6104 = vrot.slane %v6103, 4
      %v6106 = vshll.u32 %v6043, 16
      %v6108 = vrot.slane %v6106, 5
      %v6109 = vsel %vm828, %v6104, %v6108
      %v6111 = vshrl.u32 %v6044, 16
      %v6113 = vrot.slane %v6111, 4
      %v6114 = vshll.u32 %v6044, 16
      %v6116 = vrot.slane %v6114, 5
      %v6117 = vor.u32 %v6113, %v6116
      %v6118 = vrot.slane %v6117, 4
      %v6120 = vshll.u32 %v6045, 16
      %v6122 = vrot.slane %v6120, 5
      %v6123 = vsel %vm828, %v6118, %v6122
      %v6124 = vshrl.u32 %v6045, 16
      %v6126 = vrot.slane %v6124, 4
      %v6127 = vor.u32 %v6126, %v6122
      %v6128 = vrot.slane %v6127, 4
      %v6130 = vshll.u32 %v6046, 16
      %v6132 = vrot.slane %v6130, 5
      %v6133 = vsel %vm828, %v6128, %v6132
      %v6135 = vshrl.u32 %v6047, 16
      %v6137 = vrot.slane %v6135, 4
      %v6138 = vshll.u32 %v6047, 16
      %v6140 = vrot.slane %v6138, 5
      %v6141 = vor.u32 %v6137, %v6140
      %v6142 = vrot.slane %v6141, 4
      %v6144 = vshll.u32 %v6048, 16
      %v6146 = vrot.slane %v6144, 5
      %v6147 = vsel %vm828, %v6142, %v6146
      %v6148 = vshrl.u32 %v6048, 16
      %v6150 = vrot.slane %v6148, 4
      %v6151 = vor.u32 %v6150, %v6146
      %v6152 = vrot.slane %v6151, 4
      %v6154 = vshll.u32 %v6049, 16
      %v6156 = vrot.slane %v6154, 5
      %v6157 = vsel %vm828, %v6152, %v6156
      %v6159 = vshrl.u32 %v6050, 16
      %v6161 = vrot.slane %v6159, 4
      %v6162 = vshll.u32 %v6050, 16
      %v6164 = vrot.slane %v6162, 5
      %v6165 = vor.u32 %v6161, %v6164
      %v6166 = vrot.slane %v6165, 4
      %v6168 = vshll.u32 %v6051, 16
      %v6170 = vrot.slane %v6168, 5
      %v6171 = vsel %vm828, %v6166, %v6170
      %v6172 = vshrl.u32 %v6051, 16
      %v6174 = vrot.slane %v6172, 4
      %v6175 = vor.u32 %v6174, %v6170
      %v6176 = vrot.slane %v6175, 4
      %v6178 = vshll.u32 %v6052, 16
      %v6180 = vrot.slane %v6178, 5
      %v6181 = vsel %vm828, %v6176, %v6180
      %v6183 = vshrl.u32 %v6053, 16
      %v6185 = vrot.slane %v6183, 4
      %v6186 = vshll.u32 %v6053, 16
      %v6188 = vrot.slane %v6186, 5
      %v6189 = vor.u32 %v6185, %v6188
      %v6190 = vrot.slane %v6189, 4
      %v6192 = vshll.u32 %v6054, 16
      %v6194 = vrot.slane %v6192, 5
      %v6195 = vsel %vm828, %v6190, %v6194
      %v6196 = vshrl.u32 %v6054, 16
      %v6198 = vrot.slane %v6196, 4
      %v6199 = vor.u32 %v6198, %v6194
      %v6200 = vrot.slane %v6199, 4
      %v6202 = vshll.u32 %v6055, 16
      %v6204 = vrot.slane %v6202, 5
      %v6205 = vsel %vm828, %v6200, %v6204
      %v6207 = vshrl.u32 %v6056, 16
      %v6209 = vrot.slane %v6207, 4
      %v6210 = vshll.u32 %v6056, 16
      %v6212 = vrot.slane %v6210, 5
      %v6213 = vor.u32 %v6209, %v6212
      %v6214 = vrot.slane %v6213, 4
      %v6216 = vshll.u32 %v6057, 16
      %v6218 = vrot.slane %v6216, 5
      %v6219 = vsel %vm828, %v6214, %v6218
      %v6220 = vshrl.u32 %v6057, 16
      %v6222 = vrot.slane %v6220, 4
      %v6223 = vor.u32 %v6222, %v6218
      %v6224 = vrot.slane %v6223, 4
      %v6226 = vshll.u32 %v6058, 16
      %v6228 = vrot.slane %v6226, 5
      %v6229 = vsel %vm828, %v6224, %v6228
      %v6231 = vshrl.u32 %v6059, 16
      %v6233 = vrot.slane %v6231, 4
      %v6234 = vshll.u32 %v6059, 16
      %v6236 = vrot.slane %v6234, 5
      %v6237 = vor.u32 %v6233, %v6236
      %v6238 = vrot.slane %v6237, 4
      %v6240 = vshll.u32 %v6060, 16
      %v6242 = vrot.slane %v6240, 5
      %v6243 = vsel %vm828, %v6238, %v6242
      %v6244 = vshrl.u32 %v6060, 16
      %v6246 = vrot.slane %v6244, 4
      %v6247 = vor.u32 %v6246, %v6242
      %v6248 = vrot.slane %v6247, 4
      %v6250 = vshll.u32 %v6061, 16
      %v6252 = vrot.slane %v6250, 5
      %v6253 = vsel %vm828, %v6248, %v6252
      %s6254 = scalar_lea.vmem %s3, 14
      %v6255 = vld [vmem:[%s6254] sm:$0x3]
      %v6256 = vunpack.c.l.b16 %v6075
      %v6257 = vunpack.c.l.b16 %v6085
      %v6258 = vunpack.c.l.b16 %v6099
      %v6259 = vunpack.c.l.b16 %v6109
      %v6260 = vunpack.c.l.b16 %v6123
      %v6261 = vunpack.c.l.b16 %v6133
      %v6262 = vunpack.c.l.b16 %v6147
      %v6263 = vunpack.c.l.b16 %v6157
      %v6264 = vunpack.c.l.b16 %v6171
      %v6265 = vunpack.c.l.b16 %v6181
      %v6266 = vunpack.c.l.b16 %v6195
      %v6267 = vunpack.c.l.b16 %v6205
      %v6268 = vunpack.c.l.b16 %v6219
      %v6269 = vunpack.c.l.b16 %v6229
      %v6270 = vunpack.c.l.b16 %v6243
      %v6271 = vunpack.c.l.b16 %v6253
      %v6272 = vpack.c.b16 %v6257, %v6256
      %v6273 = vpack.c.b16 %v6259, %v6258
      %v6274 = vpack.c.b16 %v6261, %v6260
      %v6275 = vpack.c.b16 %v6263, %v6262
      %v6276 = vpack.c.b16 %v6265, %v6264
      %v6277 = vpack.c.b16 %v6267, %v6266
      %v6278 = vpack.c.b16 %v6269, %v6268
      %v6279 = vpack.c.b16 %v6271, %v6270
      %v6281 = vsel %vm1101, %v6272, 0
      %v6284 = vsel %vm1101, %v6273, 0
      %v6287 = vsel %vm1101, %v6274, 0
      %v6290 = vsel %vm1101, %v6275, 0
      %v6293 = vsel %vm1101, %v6276, 0
      %v6296 = vsel %vm1101, %v6277, 0
      %v6299 = vsel %vm1101, %v6278, 0
      %v6302 = vsel %vm1101, %v6279, 0
      %v6305 = vsel %vm1132, %v6255, 0
      %6307 = vmatprep.subr.bf16.mxu0 0
      %6308 = vmatpush1.bf16.msra.mxu0 %v6305
      %6309 = vmatprep.subr.bf16.mxu0 0
      %6310 = vmatpush1.bf16.msra.mxu0 0
      %6311 = vmatprep.subr.bf16.mxu0 0
      %6312 = vmatpush1.bf16.msra.mxu0 0
      %6313 = vmatprep.subr.bf16.mxu0 0
      %6314 = vmatpush1.bf16.msra.mxu0 0
      %6315 = vmatprep.subr.bf16.mxu0 0
      %6316 = vmatpush1.bf16.msra.mxu0 0
      %6317 = vmatprep.subr.bf16.mxu0 0
      %6318 = vmatpush1.bf16.msra.mxu0 0
      %6319 = vmatprep.subr.bf16.mxu0 0
      %6320 = vmatpush1.bf16.msra.mxu0 0
      %6321 = vmatprep.subr.bf16.mxu0 0
      %6322 = vmatpush1.bf16.msra.mxu0 0
      %6323 = vmatprep.subr.bf16.mxu0 0
      %6324 = vmatpush1.bf16.msra.mxu0 0
      %6325 = vmatprep.subr.bf16.mxu0 0
      %6326 = vmatpush1.bf16.msra.mxu0 0
      %6327 = vmatprep.subr.bf16.mxu0 0
      %6328 = vmatpush1.bf16.msra.mxu0 0
      %6329 = vmatprep.subr.bf16.mxu0 0
      %6330 = vmatpush1.bf16.msra.mxu0 0
      %6331 = vmatprep.subr.bf16.mxu0 0
      %6332 = vmatpush1.bf16.msra.mxu0 0
      %6333 = vmatprep.subr.bf16.mxu0 0
      %6334 = vmatpush1.bf16.msra.mxu0 0
      %6335 = vmatprep.subr.bf16.mxu0 0
      %6336 = vmatpush1.bf16.msra.mxu0 0
      %6337 = vmatprep.subr.bf16.mxu0 0
      %6338 = vmatpush1.bf16.msra.mxu0 0
      %6339 = vmatprep.mubr.bf16.mxu0 0
      %6340 = vmatmul.mubr.bf16.gmra.mrb[0].mxu0 %v6281
      %v6341 = vpop.f32.mrb[0].mxu0
      %v6342 = vadd.f32 0.0, %v6341
      %v6343 = vpop.f32.mrb[0].mxu0
      %v6344 = vpop.f32.mrb[0].mxu0
      %v6345 = vadd.f32 0.0, %v6344
      %v6346 = vpop.f32.mrb[0].mxu0
      %6347 = vmatprep.mubr.bf16.mxu0 0
      %6348 = vmatmul.mubr.bf16.gmra.mrb[0].mxu0 %v6284
      %v6349 = vpop.f32.mrb[0].mxu0
      %v6350 = vadd.f32 0.0, %v6349
      %v6351 = vpop.f32.mrb[0].mxu0
      %v6352 = vpop.f32.mrb[0].mxu0
      %v6353 = vadd.f32 0.0, %v6352
      %v6354 = vpop.f32.mrb[0].mxu0
      %6355 = vmatprep.mubr.bf16.mxu0 0
      %6356 = vmatmul.mubr.bf16.gmra.mrb[0].mxu0 %v6287
      %v6357 = vpop.f32.mrb[0].mxu0
      %v6358 = vadd.f32 0.0, %v6357
      %v6359 = vpop.f32.mrb[0].mxu0
      %v6360 = vpop.f32.mrb[0].mxu0
      %v6361 = vadd.f32 0.0, %v6360
      %v6362 = vpop.f32.mrb[0].mxu0
      %6363 = vmatprep.mubr.bf16.mxu0 0
      %6364 = vmatmul.mubr.bf16.gmra.mrb[0].mxu0 %v6290
      %v6365 = vpop.f32.mrb[0].mxu0
      %v6366 = vadd.f32 0.0, %v6365
      %v6367 = vpop.f32.mrb[0].mxu0
      %v6368 = vpop.f32.mrb[0].mxu0
      %v6369 = vadd.f32 0.0, %v6368
      %v6370 = vpop.f32.mrb[0].mxu0
      %6371 = vmatprep.mubr.bf16.mxu0 0
      %6372 = vmatmul.mubr.bf16.gmra.mrb[0].mxu0 %v6293
      %v6373 = vpop.f32.mrb[0].mxu0
      %v6374 = vadd.f32 0.0, %v6373
      %v6375 = vpop.f32.mrb[0].mxu0
      %v6376 = vpop.f32.mrb[0].mxu0
      %v6377 = vadd.f32 0.0, %v6376
      %v6378 = vpop.f32.mrb[0].mxu0
      %6379 = vmatprep.mubr.bf16.mxu0 0
      %6380 = vmatmul.mubr.bf16.gmra.mrb[0].mxu0 %v6296
      %v6381 = vpop.f32.mrb[0].mxu0
      %v6382 = vadd.f32 0.0, %v6381
      %v6383 = vpop.f32.mrb[0].mxu0
      %v6384 = vpop.f32.mrb[0].mxu0
      %v6385 = vadd.f32 0.0, %v6384
      %v6386 = vpop.f32.mrb[0].mxu0
      %6387 = vmatprep.mubr.bf16.mxu0 0
      %6388 = vmatmul.mubr.bf16.gmra.mrb[0].mxu0 %v6299
      %v6389 = vpop.f32.mrb[0].mxu0
      %v6390 = vadd.f32 0.0, %v6389
      %v6391 = vpop.f32.mrb[0].mxu0
      %v6392 = vpop.f32.mrb[0].mxu0
      %v6393 = vadd.f32 0.0, %v6392
      %v6394 = vpop.f32.mrb[0].mxu0
      %6395 = vmatprep.mubr.bf16.mxu0 0
      %6396 = vmatmul.mubr.bf16.gmra.mrb[0].mxu0 %v6302
      %v6397 = vpop.f32.mrb[0].mxu0
      %v6398 = vadd.f32 0.0, %v6397
      %v6399 = vpop.f32.mrb[0].mxu0
      %v6400 = vpop.f32.mrb[0].mxu0
      %v6401 = vadd.f32 0.0, %v6400
      %v6402 = vpop.f32.mrb[0].mxu0
      %6403 = vdwg.mxu0
      %v6404 = vadd.f32 %v6022, %v6342
      %v6405 = vadd.f32 %v6023, %v6345
      %v6406 = vadd.f32 %v6024, %v6350
      %v6407 = vadd.f32 %v6025, %v6353
      %v6408 = vadd.f32 %v6026, %v6358
      %v6409 = vadd.f32 %v6027, %v6361
      %v6410 = vadd.f32 %v6028, %v6366
      %v6411 = vadd.f32 %v6029, %v6369
      %v6412 = vadd.f32 %v6030, %v6374
      %v6413 = vadd.f32 %v6031, %v6377
      %v6414 = vadd.f32 %v6032, %v6382
      %v6415 = vadd.f32 %v6033, %v6385
      %v6416 = vadd.f32 %v6034, %v6390
      %v6417 = vadd.f32 %v6035, %v6393
      %v6418 = vadd.f32 %v6036, %v6398
      %v6419 = vadd.f32 %v6037, %v6401
      %v6420 = vld [vmem:[%s5839] sm:$0xe]
      %v6421 = vld [vmem:[%s5839 + $0xc] sm:$0xe]
      %v6422 = vld [vmem:[%s5839 + $0x18] sm:$0xe]
      %v6423 = vld [vmem:[%s5839 + $0x24] sm:$0xe]
      %v6424 = vld [vmem:[%s5839 + $0x30] sm:$0xe]
      %v6425 = vld [vmem:[%s5839 + $0x3c] sm:$0xe]
      %v6426 = vld [vmem:[%s5839 + $0x48] sm:$0xe]
      %v6427 = vld [vmem:[%s5839 + $0x54] sm:$0xe]
      %v6452 = vrot.slane %v6420, 5
      %v6453 = vrot.slane %v6452, 4
      %v6454 = vrot.slane %v6039, 5
      %v6455 = vsel %vm1477, %v6453, %v6454
      %v6456 = vrot.slane %v6454, 4
      %v6457 = vrot.slane %v6040, 5
      %v6458 = vsel %vm1477, %v6456, %v6457
      %v6459 = vrot.slane %v6421, 5
      %v6460 = vrot.slane %v6459, 4
      %v6461 = vrot.slane %v6042, 5
      %v6462 = vsel %vm1477, %v6460, %v6461
      %v6463 = vrot.slane %v6461, 4
      %v6464 = vrot.slane %v6043, 5
      %v6465 = vsel %vm1477, %v6463, %v6464
      %v6466 = vrot.slane %v6422, 5
      %v6467 = vrot.slane %v6466, 4
      %v6468 = vrot.slane %v6045, 5
      %v6469 = vsel %vm1477, %v6467, %v6468
      %v6470 = vrot.slane %v6468, 4
      %v6471 = vrot.slane %v6046, 5
      %v6472 = vsel %vm1477, %v6470, %v6471
      %v6473 = vrot.slane %v6423, 5
      %v6474 = vrot.slane %v6473, 4
      %v6475 = vrot.slane %v6048, 5
      %v6476 = vsel %vm1477, %v6474, %v6475
      %v6477 = vrot.slane %v6475, 4
      %v6478 = vrot.slane %v6049, 5
      %v6479 = vsel %vm1477, %v6477, %v6478
      %v6480 = vrot.slane %v6424, 5
      %v6481 = vrot.slane %v6480, 4
      %v6482 = vrot.slane %v6051, 5
      %v6483 = vsel %vm1477, %v6481, %v6482
      %v6484 = vrot.slane %v6482, 4
      %v6485 = vrot.slane %v6052, 5
      %v6486 = vsel %vm1477, %v6484, %v6485
      %v6487 = vrot.slane %v6425, 5
      %v6488 = vrot.slane %v6487, 4
      %v6489 = vrot.slane %v6054, 5
      %v6490 = vsel %vm1477, %v6488, %v6489
      %v6491 = vrot.slane %v6489, 4
      %v6492 = vrot.slane %v6055, 5
      %v6493 = vsel %vm1477, %v6491, %v6492
      %v6494 = vrot.slane %v6426, 5
      %v6495 = vrot.slane %v6494, 4
      %v6496 = vrot.slane %v6057, 5
      %v6497 = vsel %vm1477, %v6495, %v6496
      %v6498 = vrot.slane %v6496, 4
      %v6499 = vrot.slane %v6058, 5
      %v6500 = vsel %vm1477, %v6498, %v6499
      %v6501 = vrot.slane %v6427, 5
      %v6502 = vrot.slane %v6501, 4
      %v6503 = vrot.slane %v6060, 5
      %v6504 = vsel %vm1477, %v6502, %v6503
      %v6505 = vrot.slane %v6503, 4
      %v6506 = vrot.slane %v6061, 5
      %v6507 = vsel %vm1477, %v6505, %v6506
      %s6508 = scalar_lea.vmem %s3, 16
      %v6509 = vld [vmem:[%s6508] sm:$0x3]
      %v6510 = vunpack.c.l.b16 %v6455
      %v6511 = vunpack.c.l.b16 %v6458
      %v6512 = vunpack.c.l.b16 %v6462
      %v6513 = vunpack.c.l.b16 %v6465
      %v6514 = vunpack.c.l.b16 %v6469
      %v6515 = vunpack.c.l.b16 %v6472
      %v6516 = vunpack.c.l.b16 %v6476
      %v6517 = vunpack.c.l.b16 %v6479
      %v6518 = vunpack.c.l.b16 %v6483
      %v6519 = vunpack.c.l.b16 %v6486
      %v6520 = vunpack.c.l.b16 %v6490
      %v6521 = vunpack.c.l.b16 %v6493
      %v6522 = vunpack.c.l.b16 %v6497
      %v6523 = vunpack.c.l.b16 %v6500
      %v6524 = vunpack.c.l.b16 %v6504
      %v6525 = vunpack.c.l.b16 %v6507
      %v6526 = vpack.c.b16 %v6511, %v6510
      %v6527 = vpack.c.b16 %v6513, %v6512
      %v6528 = vpack.c.b16 %v6515, %v6514
      %v6529 = vpack.c.b16 %v6517, %v6516
      %v6530 = vpack.c.b16 %v6519, %v6518
      %v6531 = vpack.c.b16 %v6521, %v6520
      %v6532 = vpack.c.b16 %v6523, %v6522
      %v6533 = vpack.c.b16 %v6525, %v6524
      %v6535 = vsel %vm1101, %v6526, 0
      %v6538 = vsel %vm1101, %v6527, 0
      %v6541 = vsel %vm1101, %v6528, 0
      %v6544 = vsel %vm1101, %v6529, 0
      %v6547 = vsel %vm1101, %v6530, 0
      %v6550 = vsel %vm1101, %v6531, 0
      %v6553 = vsel %vm1101, %v6532, 0
      %v6556 = vsel %vm1101, %v6533, 0
      %v6559 = vsel %vm1132, %v6509, 0
      %6561 = vmatprep.subr.bf16.mxu0 0
      %6562 = vmatpush1.bf16.msra.mxu0 %v6559
      %6563 = vmatprep.subr.bf16.mxu0 0
      %6564 = vmatpush1.bf16.msra.mxu0 0
      %6565 = vmatprep.subr.bf16.mxu0 0
      %6566 = vmatpush1.bf16.msra.mxu0 0
      %6567 = vmatprep.subr.bf16.mxu0 0
      %6568 = vmatpush1.bf16.msra.mxu0 0
      %6569 = vmatprep.subr.bf16.mxu0 0
      %6570 = vmatpush1.bf16.msra.mxu0 0
      %6571 = vmatprep.subr.bf16.mxu0 0
      %6572 = vmatpush1.bf16.msra.mxu0 0
      %6573 = vmatprep.subr.bf16.mxu0 0
      %6574 = vmatpush1.bf16.msra.mxu0 0
      %6575 = vmatprep.subr.bf16.mxu0 0
      %6576 = vmatpush1.bf16.msra.mxu0 0
      %6577 = vmatprep.subr.bf16.mxu0 0
      %6578 = vmatpush1.bf16.msra.mxu0 0
      %6579 = vmatprep.subr.bf16.mxu0 0
      %6580 = vmatpush1.bf16.msra.mxu0 0
      %6581 = vmatprep.subr.bf16.mxu0 0
      %6582 = vmatpush1.bf16.msra.mxu0 0
      %6583 = vmatprep.subr.bf16.mxu0 0
      %6584 = vmatpush1.bf16.msra.mxu0 0
      %6585 = vmatprep.subr.bf16.mxu0 0
      %6586 = vmatpush1.bf16.msra.mxu0 0
      %6587 = vmatprep.subr.bf16.mxu0 0
      %6588 = vmatpush1.bf16.msra.mxu0 0
      %6589 = vmatprep.subr.bf16.mxu0 0
      %6590 = vmatpush1.bf16.msra.mxu0 0
      %6591 = vmatprep.subr.bf16.mxu0 0
      %6592 = vmatpush1.bf16.msra.mxu0 0
      %6593 = vmatprep.mubr.bf16.mxu0 0
      %6594 = vmatmul.mubr.bf16.gmra.mrb[0].mxu0 %v6535
      %v6595 = vpop.f32.mrb[0].mxu0
      %v6596 = vadd.f32 0.0, %v6595
      %v6597 = vpop.f32.mrb[0].mxu0
      %v6598 = vpop.f32.mrb[0].mxu0
      %v6599 = vadd.f32 0.0, %v6598
      %v6600 = vpop.f32.mrb[0].mxu0
      %6601 = vmatprep.mubr.bf16.mxu0 0
      %6602 = vmatmul.mubr.bf16.gmra.mrb[0].mxu0 %v6538
      %v6603 = vpop.f32.mrb[0].mxu0
      %v6604 = vadd.f32 0.0, %v6603
      %v6605 = vpop.f32.mrb[0].mxu0
      %v6606 = vpop.f32.mrb[0].mxu0
      %v6607 = vadd.f32 0.0, %v6606
      %v6608 = vpop.f32.mrb[0].mxu0
      %6609 = vmatprep.mubr.bf16.mxu0 0
      %6610 = vmatmul.mubr.bf16.gmra.mrb[0].mxu0 %v6541
      %v6611 = vpop.f32.mrb[0].mxu0
      %v6612 = vadd.f32 0.0, %v6611
      %v6613 = vpop.f32.mrb[0].mxu0
      %v6614 = vpop.f32.mrb[0].mxu0
      %v6615 = vadd.f32 0.0, %v6614
      %v6616 = vpop.f32.mrb[0].mxu0
      %6617 = vmatprep.mubr.bf16.mxu0 0
      %6618 = vmatmul.mubr.bf16.gmra.mrb[0].mxu0 %v6544
      %v6619 = vpop.f32.mrb[0].mxu0
      %v6620 = vadd.f32 0.0, %v6619
      %v6621 = vpop.f32.mrb[0].mxu0
      %v6622 = vpop.f32.mrb[0].mxu0
      %v6623 = vadd.f32 0.0, %v6622
      %v6624 = vpop.f32.mrb[0].mxu0
      %6625 = vmatprep.mubr.bf16.mxu0 0
      %6626 = vmatmul.mubr.bf16.gmra.mrb[0].mxu0 %v6547
      %v6627 = vpop.f32.mrb[0].mxu0
      %v6628 = vadd.f32 0.0, %v6627
      %v6629 = vpop.f32.mrb[0].mxu0
      %v6630 = vpop.f32.mrb[0].mxu0
      %v6631 = vadd.f32 0.0, %v6630
      %v6632 = vpop.f32.mrb[0].mxu0
      %6633 = vmatprep.mubr.bf16.mxu0 0
      %6634 = vmatmul.mubr.bf16.gmra.mrb[0].mxu0 %v6550
      %v6635 = vpop.f32.mrb[0].mxu0
      %v6636 = vadd.f32 0.0, %v6635
      %v6637 = vpop.f32.mrb[0].mxu0
      %v6638 = vpop.f32.mrb[0].mxu0
      %v6639 = vadd.f32 0.0, %v6638
      %v6640 = vpop.f32.mrb[0].mxu0
      %6641 = vmatprep.mubr.bf16.mxu0 0
      %6642 = vmatmul.mubr.bf16.gmra.mrb[0].mxu0 %v6553
      %v6643 = vpop.f32.mrb[0].mxu0
      %v6644 = vadd.f32 0.0, %v6643
      %v6645 = vpop.f32.mrb[0].mxu0
      %v6646 = vpop.f32.mrb[0].mxu0
      %v6647 = vadd.f32 0.0, %v6646
      %v6648 = vpop.f32.mrb[0].mxu0
      %6649 = vmatprep.mubr.bf16.mxu0 0
      %6650 = vmatmul.mubr.bf16.gmra.mrb[0].mxu0 %v6556
      %v6651 = vpop.f32.mrb[0].mxu0
      %v6652 = vadd.f32 0.0, %v6651
      %v6653 = vpop.f32.mrb[0].mxu0
      %v6654 = vpop.f32.mrb[0].mxu0
      %v6655 = vadd.f32 0.0, %v6654
      %v6656 = vpop.f32.mrb[0].mxu0
      %6657 = vdwg.mxu0
      %v6658 = vadd.f32 %v6404, %v6596
      %v6659 = vadd.f32 %v6405, %v6599
      %v6660 = vadd.f32 %v6406, %v6604
      %v6661 = vadd.f32 %v6407, %v6607
      %v6662 = vadd.f32 %v6408, %v6612
      %v6663 = vadd.f32 %v6409, %v6615
      %v6664 = vadd.f32 %v6410, %v6620
      %v6665 = vadd.f32 %v6411, %v6623
      %v6666 = vadd.f32 %v6412, %v6628
      %v6667 = vadd.f32 %v6413, %v6631
      %v6668 = vadd.f32 %v6414, %v6636
      %v6669 = vadd.f32 %v6415, %v6639
      %v6670 = vadd.f32 %v6416, %v6644
      %v6671 = vadd.f32 %v6417, %v6647
      %v6672 = vadd.f32 %v6418, %v6652
      %v6673 = vadd.f32 %v6419, %v6655
      %v6674 = vld [vmem:[%s4] sm:$0x1]
      %v6676 = vlaneseq
      %v6677 = vshrl.u32 %v6676, 7
      %v6678 = vsub.s32 0, %v6677
      %v6679 = vrot.slane %v6674, %v6678
      %v6681 = vadd.f32 %v6658, %v6679
      %v6682 = vadd.f32 %v6659, %v6679
      %v6683 = vadd.f32 %v6660, %v6679
      %v6684 = vadd.f32 %v6661, %v6679
      %v6685 = vadd.f32 %v6662, %v6679
      %v6686 = vadd.f32 %v6663, %v6679
      %v6687 = vadd.f32 %v6664, %v6679
      %v6688 = vadd.f32 %v6665, %v6679
      %v6689 = vadd.f32 %v6666, %v6679
      %v6690 = vadd.f32 %v6667, %v6679
      %v6691 = vadd.f32 %v6668, %v6679
      %v6692 = vadd.f32 %v6669, %v6679
      %v6693 = vadd.f32 %v6670, %v6679
      %v6694 = vadd.f32 %v6671, %v6679
      %v6695 = vadd.f32 %v6672, %v6679
      %v6696 = vadd.f32 %v6673, %v6679
      %v6697 = vadd.f32 %v6681, %v254
      %v6698 = vadd.f32 %v6682, %v255
      %v6699 = vadd.f32 %v6683, %v256
      %v6700 = vadd.f32 %v6684, %v257
      %v6701 = vadd.f32 %v6685, %v258
      %v6702 = vadd.f32 %v6686, %v259
      %v6703 = vadd.f32 %v6687, %v260
      %v6704 = vadd.f32 %v6688, %v261
      %v6705 = vadd.f32 %v6689, %v262
      %v6706 = vadd.f32 %v6690, %v263
      %v6707 = vadd.f32 %v6691, %v264
      %v6708 = vadd.f32 %v6692, %v265
      %v6709 = vadd.f32 %v6693, %v266
      %v6710 = vadd.f32 %v6694, %v267
      %v6711 = vadd.f32 %v6695, %v268
      %v6712 = vadd.f32 %v6696, %v269
      %v6713 = vmax.f32 %v6697, 0.0
      %v6714 = vmax.f32 %v6698, 0.0
      %v6715 = vmax.f32 %v6699, 0.0
      %v6716 = vmax.f32 %v6700, 0.0
      %v6717 = vmax.f32 %v6701, 0.0
      %v6718 = vmax.f32 %v6702, 0.0
      %v6719 = vmax.f32 %v6703, 0.0
      %v6720 = vmax.f32 %v6704, 0.0
      %v6721 = vmax.f32 %v6705, 0.0
      %v6722 = vmax.f32 %v6706, 0.0
      %v6723 = vmax.f32 %v6707, 0.0
      %v6724 = vmax.f32 %v6708, 0.0
      %v6725 = vmax.f32 %v6709, 0.0
      %v6726 = vmax.f32 %v6710, 0.0
      %v6727 = vmax.f32 %v6711, 0.0
      %v6728 = vmax.f32 %v6712, 0.0
      %v6729 = vpack.c.bf16 %v6714, %v6713
      %v6730 = vpack.c.bf16 %v6716, %v6715
      %v6731 = vpack.c.bf16 %v6718, %v6717
      %v6732 = vpack.c.bf16 %v6720, %v6719
      %v6733 = vpack.c.bf16 %v6722, %v6721
      %v6734 = vpack.c.bf16 %v6724, %v6723
      %v6735 = vpack.c.bf16 %v6726, %v6725
      %v6736 = vpack.c.bf16 %v6728, %v6727
      %v6745 = vunpack.c.l.b16 %v6729
      %v6746 = vunpack.c.h.b16 %v6729
      %v6747 = vunpack.c.l.b16 %v6730
      %v6748 = vunpack.c.h.b16 %v6730
      %v6749 = vunpack.c.l.b16 %v6731
      %v6750 = vunpack.c.h.b16 %v6731
      %v6751 = vunpack.c.l.b16 %v6732
      %v6752 = vunpack.c.h.b16 %v6732
      %v6753 = vunpack.c.l.b16 %v6733
      %v6754 = vunpack.c.h.b16 %v6733
      %v6755 = vunpack.c.l.b16 %v6734
      %v6756 = vunpack.c.h.b16 %v6734
      %v6757 = vunpack.c.l.b16 %v6735
      %v6758 = vunpack.c.h.b16 %v6735
      %v6759 = vunpack.c.l.b16 %v6736
      %v6760 = vunpack.c.h.b16 %v6736
      %v6761 = vpack.c.b16 %v6745, %v6745
      %v6762 = vpack.c.b16 %v6746, %v6746
      %v6763 = vpack.c.b16 %v6747, %v6747
      %v6764 = vpack.c.b16 %v6748, %v6748
      %v6765 = vpack.c.b16 %v6749, %v6749
      %v6766 = vpack.c.b16 %v6750, %v6750
      %v6767 = vpack.c.b16 %v6751, %v6751
      %v6768 = vpack.c.b16 %v6752, %v6752
      %v6769 = vpack.c.b16 %v6753, %v6753
      %v6770 = vpack.c.b16 %v6754, %v6754
      %v6771 = vpack.c.b16 %v6755, %v6755
      %v6772 = vpack.c.b16 %v6756, %v6756
      %v6773 = vpack.c.b16 %v6757, %v6757
      %v6774 = vpack.c.b16 %v6758, %v6758
      %v6775 = vpack.c.b16 %v6759, %v6759
      %v6776 = vpack.c.b16 %v6760, %v6760
      %6793 = vst.msk [vmem:[%s248] sm:$0xf] %vm563, %v6761
      %6794 = vst.msk [vmem:[%s248 + $0x4] sm:$0xf] %vm563, %v6762
      %6795 = vst.msk [vmem:[%s248 + $0x8] sm:$0xf] %vm563, %v6763
      %6796 = vst.msk [vmem:[%s248 + $0xc] sm:$0xf] %vm563, %v6764
      %6797 = vst.msk [vmem:[%s248 + $0x10] sm:$0xf] %vm563, %v6765
      %6798 = vst.msk [vmem:[%s248 + $0x14] sm:$0xf] %vm563, %v6766
      %6799 = vst.msk [vmem:[%s248 + $0x18] sm:$0xf] %vm563, %v6767
      %6800 = vst.msk [vmem:[%s248 + $0x1c] sm:$0xf] %vm563, %v6768
      %6801 = vst.msk [vmem:[%s248 + $0x20] sm:$0xf] %vm563, %v6769
      %6802 = vst.msk [vmem:[%s248 + $0x24] sm:$0xf] %vm563, %v6770
      %6803 = vst.msk [vmem:[%s248 + $0x28] sm:$0xf] %vm563, %v6771
      %6804 = vst.msk [vmem:[%s248 + $0x2c] sm:$0xf] %vm563, %v6772
      %6805 = vst.msk [vmem:[%s248 + $0x30] sm:$0xf] %vm563, %v6773
      %6806 = vst.msk [vmem:[%s248 + $0x34] sm:$0xf] %vm563, %v6774
      %6807 = vst.msk [vmem:[%s248 + $0x38] sm:$0xf] %vm563, %v6775
      %6808 = vst.msk [vmem:[%s248 + $0x3c] sm:$0xf] %vm563, %v6776
      %s6809 = smul.u32 8, %s21
      %p6810 = scmp.lt.s32.totalorder %s20, 1
      %s6811 = scalar_select %p6810, %s20, 1
      %p6812 = scmp.lt.s32.totalorder %s6809, 15
      %s6813 = scalar_select %p6812, %s6809, 15
      %s6814 = smul.addr %s6813, 2
      %s6815 = smul.addr %s6811, 32
      %s6816 = sadd.s32 %s6814, %s6815
      %s6817 = smul.addr %s6816, 4
      %s6818 = scalar_lea.vmem %s5, %s6817
      // Predicated region
      $region65: #{tpu_custom_call.1} parent=39 // pred_check
        %p6819 = pneg %p158
      $region66: #{tpu_custom_call.1} parent=39 // pred_check_branch
        %6821 = sbr.rel (%p6819) target = $region68
      $region67: #{tpu_custom_call.1} parent=39 // pred_region
        %s6822 = smul.u32 8, %s21
      $region68: #{tpu_custom_call.1} parent=39 // pred_fallthru
        _
    $region40: #{tpu_custom_call.1} parent=5 // pred_fallthru
      _
    %p6823 = scmp.le.s32.totalorder 2, %s11
    // Predicated region
    $region69: #{tpu_custom_call.1} parent=5 // pred_check
      %p6824 = pneg %p6823
    $region70: #{tpu_custom_call.1} parent=5 // pred_check_branch
      %6826 = sbr.rel (%p6824) target = $region72
    $region71: #{tpu_custom_call.1} parent=5 // pred_region
      %s6827 = ssub.s32 %s11, 2
      // Predicated region
      $region73: #{tpu_custom_call.1} parent=71 // pred_check
        %p6828 = pneg %p164
      $region74: #{tpu_custom_call.1} parent=71 // pred_check_branch
        %6830 = sbr.rel (%p6828) target = $region76
      $region75: #{tpu_custom_call.1} parent=71 // pred_region
        %s6831 = smul.u32 8, %s23
        %p6832 = scmp.lt.s32.totalorder %s22, 1
        %s6833 = scalar_select %p6832, %s22, 1
        %p6834 = scmp.lt.s32.totalorder %s6831, 15
        %s6835 = scalar_select %p6834, %s6831, 15
        %s6836 = smul.addr %s6835, 2
        %s6837 = smul.addr %s6833, 32
        %s6838 = sadd.s32 %s6836, %s6837
        %s6839 = smul.addr %s6838, 4
        %s6840 = scalar_lea.vmem %s5, %s6839
      $region76: #{tpu_custom_call.1} parent=71 // pred_fallthru
        _
    $region72: #{tpu_custom_call.1} parent=5 // pred_fallthru
      _
  $region6: #{tpu_custom_call.1} parent=0 // loop_footer
    %s15 = sadd.s32 1, %s11
  $region7: #{tpu_custom_call.1} parent=0 // loop_footer_branch
    %10 = sbr.rel target = $region3
  $region8: #{tpu_custom_call.1} parent=0 // loop_exit
    _

</llo_original>
